<compile_context>
chip_gen: v7x
topology: tpu7x:2x2x1
jax: 0.10.0
libtpu: 0.0.40
codegen_flags: <defaults>
</compile_context>

<pallas_src>
import jax
import jax.numpy as jnp
from jax.experimental import pallas as pl
from jax.experimental.pallas import tpu as pltpu

# ----------------------------- model hyper-params (small) --------------------
B = 1            # batch
DEPTH = 2        # last input dim ("depth" / number of slices)
IMG = 64         # spatial size
PATCH = 16       # patch size (samvit_base_patch16)
GRID = IMG // PATCH           # 4 -> 4x4 tokens per slice
S_TOK = GRID * GRID           # 16 tokens per slice
EMBED = 32       # embedding dim (768 in the real model)
HEADS = 2
HEAD_DIM = EMBED // HEADS
MLP_HID = 4 * EMBED
LORA_R = 8       # (64 in the real model)
N_BLOCKS = 12    # self.len
BEGIN = 8        # self.begin
NUM_CLASSES = 1
DR = 8           # downsample_rate
DEC_HID = 16
PATCH_K = 3 * PATCH * PATCH
N_FEATS = N_BLOCKS - BEGIN


# ================================ Pallas kernel ===============================
def _layernorm(x, g, b, eps=1e-6):
    """LayerNorm over last axis; x:(S,C) f32, g/b:(1,C)."""
    mu = jnp.mean(x, axis=-1, keepdims=True)
    var = jnp.mean((x - mu) ** 2, axis=-1, keepdims=True)
    return (x - mu) * jax.lax.rsqrt(var + eps) * g + b


def _sam_ms_kernel(xp_ref, pw_ref, posb_ref, masks_ref,
                   ln1_g, ln1_b, qkv_w, qkv_b, proj_w, proj_b,
                   ln2_g, ln2_b, fc1_w, fc1_b, fc2_w, fc2_b,
                   dw_w, dw_b,
                   fuse_w, fuse_b, out_w, out_b,
                   o_ref, x_scr, acc_scr):
    i = pl.program_id(1)            # block index (sequential / "arbitrary" axis)

    # ---- block 0: patch embed (+folded bias) + pos embed; zero feature acc ----
    @pl.when(i == 0)
    def _():
        xp = xp_ref[0].astype(jnp.bfloat16)                  # (S, 3*P*P)
        x0 = jnp.dot(xp, pw_ref[...],
                     preferred_element_type=jnp.float32) + posb_ref[...]
        x_scr[...] = x0
        acc_scr[...] = jnp.zeros_like(acc_scr)

    x = x_scr[...]                                           # (S, C) f32

    # ---- attention branch (LoRA already folded into qkv_w) --------------------
    xn = _layernorm(x, ln1_g[0], ln1_b[0])
    qkv = jnp.dot(xn.astype(jnp.bfloat16), qkv_w[0],
                  preferred_element_type=jnp.float32) + qkv_b[0]     # (S, 3C)
    pw = proj_w[0]                                           # (C, C) bf16
    scale = HEAD_DIM ** -0.5
    attn_proj = jnp.zeros((S_TOK, EMBED), jnp.float32)
    for h in range(HEADS):
        c0 = h * HEAD_DIM
        qh = qkv[:, c0:c0 + HEAD_DIM]                        # (S, Dh)
        kh = qkv[:, EMBED + c0:EMBED + c0 + HEAD_DIM]
        vh = qkv[:, 2 * EMBED + c0:2 * EMBED + c0 + HEAD_DIM]
        s = jnp.dot(qh, kh.T, preferred_element_type=jnp.float32) * scale
        s = s - jnp.max(s, axis=-1, keepdims=True)
        p = jnp.exp(s)
        p = p * pl.reciprocal(jnp.sum(p, axis=-1, keepdims=True), approx=True)
        ho = jnp.dot(p, vh, preferred_element_type=jnp.float32)      # (S, Dh)
        # head_out @ its row-slice of proj_w  ==  concat(heads) @ proj_w
        attn_proj = attn_proj + jnp.dot(ho.astype(jnp.bfloat16),
                                        pw[c0:c0 + HEAD_DIM, :],
                                        preferred_element_type=jnp.float32)
    x = x + attn_proj + proj_b[0]

    # ---- MLP branch ------------------------------------------------------------
    xn2 = _layernorm(x, ln2_g[0], ln2_b[0])
    h1 = jax.nn.gelu(jnp.dot(xn2.astype(jnp.bfloat16), fc1_w[0],
                             preferred_element_type=jnp.float32) + fc1_b[0])
    x = x + jnp.dot(h1.astype(jnp.bfloat16), fc2_w[0],
                    preferred_element_type=jnp.float32) + fc2_b[0]

    # ---- MSConv adapter: residual depthwise 3x3 conv as 9 shift-matrix matmuls
    # masks[t] @ x  ==  x spatially shifted by tap t (zero padded at the edges)
    dww = dw_w[0]                                            # (9, 1, C) f32
    conv = jnp.zeros((S_TOK, EMBED), jnp.float32)
    for t in range(9):
        shifted = jnp.dot(masks_ref[t], x, preferred_element_type=jnp.float32)
        conv = conv + shifted * dww[t]
    x = x + conv + dw_b[0]

    x_scr[...] = x                                           # carry to next block

    # ---- decoder feature accumulation (blocks >= BEGIN), all in VMEM ----------
    @pl.when(i >= BEGIN)
    def _():
        acc_scr[...] = acc_scr[...] + x

    # ---- last block: decoder = mean -> 1x1 fuse + ReLU -> 1x1 out -------------
    @pl.when(i == N_BLOCKS - 1)
    def _():
        m = acc_scr[...] * (1.0 / N_FEATS)                   # (S, C)
        y = jnp.dot(m, fuse_w[...],
                    preferred_element_type=jnp.float32) + fuse_b[...]
        y = jnp.maximum(y, 0.0)
        o_ref[0] = jnp.dot(y, out_w[...],
                           preferred_element_type=jnp.float32) + out_b[...]


def sam_ms_fused(xp, pk):
    """xp: (n, S, 3*P*P) patchified pixels -> (n, S, NUM_CLASSES) decoder logits."""
    n, S, K = xp.shape

    def per_block(arr):
        nd = arr.ndim - 1
        return pl.BlockSpec((1,) + arr.shape[1:], lambda nn, ii: (ii,) + (0,) * nd)

    block_keys = ["ln1_g", "ln1_b", "qkv_w", "qkv_b", "proj_w", "proj_b",
                  "ln2_g", "ln2_b", "fc1_w", "fc1_b", "fc2_w", "fc2_b",
                  "dw_w", "dw_b"]
    in_specs = [
        pl.BlockSpec((1, S, K), lambda nn, ii: (nn, 0, 0)),            # xp
        pl.BlockSpec((K, EMBED), lambda nn, ii: (0, 0)),               # patch_w
        pl.BlockSpec((S, EMBED), lambda nn, ii: (0, 0)),               # pos + bias
        pl.BlockSpec(pk["masks"].shape, lambda nn, ii: (0, 0, 0)),     # conv masks
    ] + [per_block(pk[k]) for k in block_keys] + [
        pl.BlockSpec((EMBED, DEC_HID), lambda nn, ii: (0, 0)),         # fuse_w
        pl.BlockSpec((1, DEC_HID), lambda nn, ii: (0, 0)),             # fuse_b
        pl.BlockSpec((DEC_HID, NUM_CLASSES), lambda nn, ii: (0, 0)),   # out_w
        pl.BlockSpec((1, NUM_CLASSES), lambda nn, ii: (0, 0)),         # out_b
    ]

    return pl.pallas_call(
        _sam_ms_kernel,
        out_shape=jax.ShapeDtypeStruct((n, S, NUM_CLASSES), jnp.float32),
        grid=(n, N_BLOCKS),
        in_specs=in_specs,
        out_specs=pl.BlockSpec((1, S, NUM_CLASSES), lambda nn, ii: (nn, 0, 0)),
        scratch_shapes=[pltpu.VMEM((S, EMBED), jnp.float32),   # token carry
                        pltpu.VMEM((S, EMBED), jnp.float32)],  # feature-mean acc
        compiler_params=pltpu.CompilerParams(
            dimension_semantics=("parallel", "arbitrary")),
    )(xp, pk["patch_w"], pk["posb"], pk["masks"],
      *[pk[k] for k in block_keys],
      pk["fuse_w"], pk["fuse_b"], pk["out_w"], pk["out_b"])


# ================================ parameters ==================================
def _dense(key, fan_in, fan_out):
    return jax.random.normal(key, (fan_in, fan_out), jnp.float32) * 0.02


def init_params(key):
    keys = iter(jax.random.split(key, 256))
    p = {}
    p["patch_w"] = _dense(next(keys), PATCH_K, EMBED)
    p["patch_b"] = jnp.zeros((EMBED,), jnp.float32)
    p["pos_embed"] = jax.random.normal(next(keys), (1, GRID, GRID, EMBED), jnp.float32) * 0.02

    blocks, adapters = [], []
    for _ in range(N_BLOCKS):
        blocks.append({
            "ln1_g": jnp.ones((EMBED,), jnp.float32),
            "ln1_b": jnp.zeros((EMBED,), jnp.float32),
            "qkv_w": _dense(next(keys), EMBED, 3 * EMBED),
            "qkv_b": jnp.zeros((3 * EMBED,), jnp.float32),
            "lora_a": _dense(next(keys), EMBED, LORA_R),
            "lora_b": _dense(next(keys), LORA_R, 3 * EMBED),
            "proj_w": _dense(next(keys), EMBED, EMBED),
            "proj_b": jnp.zeros((EMBED,), jnp.float32),
            "ln2_g": jnp.ones((EMBED,), jnp.float32),
            "ln2_b": jnp.zeros((EMBED,), jnp.float32),
            "fc1_w": _dense(next(keys), EMBED, MLP_HID),
            "fc1_b": jnp.zeros((MLP_HID,), jnp.float32),
            "fc2_w": _dense(next(keys), MLP_HID, EMBED),
            "fc2_b": jnp.zeros((EMBED,), jnp.float32),
        })
        adapters.append({
            "dw_w": jax.random.normal(next(keys), (3, 3, EMBED), jnp.float32) * 0.02,
            "dw_b": jnp.zeros((EMBED,), jnp.float32),
        })
    p["blocks"] = blocks
    p["adapters"] = adapters
    p["decoder"] = {
        "fuse_w": _dense(next(keys), EMBED, DEC_HID),
        "fuse_b": jnp.zeros((DEC_HID,), jnp.float32),
        "out_w": _dense(next(keys), DEC_HID, NUM_CLASSES),
        "out_b": jnp.zeros((NUM_CLASSES,), jnp.float32),
    }
    return p


def _shift_masks(h, w):
    """(9, S, S) 0/1 matrices: masks[t] @ x_flat == 3x3-tap-t shift with zero pad."""
    S = h * w
    y = jnp.arange(S) // w
    x = jnp.arange(S) % w
    masks = []
    for dy in (-1, 0, 1):
        for dx in (-1, 0, 1):
            sy, sx = y + dy, x + dx
            valid = (sy >= 0) & (sy < h) & (sx >= 0) & (sx < w)
            src = sy * w + sx
            m = (jnp.arange(S)[None, :] == src[:, None]) & valid[:, None]
            masks.append(m.astype(jnp.float32))
    return jnp.stack(masks, 0)


def pack_params(p):
    """Stack per-block weights, fold LoRA into qkv + patch bias into pos,
    cast matmul weights to bf16."""
    st = lambda k: jnp.stack([b[k] for b in p["blocks"]], 0)
    ad = lambda k: jnp.stack([a[k] for a in p["adapters"]], 0)
    row = lambda a: a[:, None, :]                 # (NB, d) -> (NB, 1, d)
    # LoRA fold: qkv'(x) = x@W + (x@A)@B == x @ (W + A@B)   (exact at inference)
    qkv_w = st("qkv_w") + jnp.einsum("bkr,brn->bkn", st("lora_a"), st("lora_b"))
    return {
        "patch_w": p["patch_w"].astype(jnp.bfloat16),
        # patch-embed bias folded into the pos-embed table (exact)
        "posb": p["pos_embed"].reshape(S_TOK, EMBED) + p["patch_b"][None, :],
        "masks": _shift_masks(GRID, GRID),
        "ln1_g": row(st("ln1_g")), "ln1_b": row(st("ln1_b")),
        "qkv_w": qkv_w.astype(jnp.bfloat16), "qkv_b": row(st("qkv_b")),
        "proj_w": st("proj_w").astype(jnp.bfloat16), "proj_b": row(st("proj_b")),
        "ln2_g": row(st("ln2_g")), "ln2_b": row(st("ln2_b")),
        "fc1_w": st("fc1_w").astype(jnp.bfloat16), "fc1_b": row(st("fc1_b")),
        "fc2_w": st("fc2_w").astype(jnp.bfloat16), "fc2_b": row(st("fc2_b")),
        "dw_w": ad("dw_w").reshape(N_BLOCKS, 9, 1, EMBED),
        "dw_b": row(ad("dw_b")),
        "fuse_w": p["decoder"]["fuse_w"],
        "fuse_b": p["decoder"]["fuse_b"].reshape(1, DEC_HID),
        "out_w": p["decoder"]["out_w"],
        "out_b": p["decoder"]["out_b"].reshape(1, NUM_CLASSES),
    }


# ================================ model glue ==================================
def forward(pk, x):
    """x: (B, 1, H, W, depth) — mirrors the PyTorch 5-D input."""
    b, _, H, W, depth = x.shape
    n = b * depth
    # ---- forward_ppn pre-processing (expand to RGB, desequence, im2col) -------
    x = jnp.broadcast_to(x, (b, 3, H, W, depth))          # x.expand(-1, 3, -1, -1, -1)
    x = jnp.transpose(x, (0, 4, 1, 2, 3)).reshape(n, 3, H, W)        # desequence
    xp = x.reshape(n, 3, GRID, PATCH, GRID, PATCH)
    xp = xp.transpose(0, 2, 4, 1, 3, 5).reshape(n, S_TOK, PATCH_K)   # im2col (16x16/16)

    # ---- one fused pallas_call: patch embed + 12 blocks + adapters + decoder --
    y = sam_ms_fused(xp, pk)                              # (n, S, NUM_CLASSES)

    # ---- decoder spatial upsample to IMG / downsample_rate --------------------
    tgt = IMG // DR
    rep = tgt // GRID
    y = y.reshape(n, GRID, GRID, NUM_CLASSES)
    y = jnp.repeat(jnp.repeat(y, rep, axis=1), rep, axis=2)   # nearest upsample
    y = y.reshape(b, depth, tgt, tgt, NUM_CLASSES)
    return jnp.transpose(y, (0, 4, 1, 2, 3))              # (B, num_classes, depth, tgt, tgt)


# ==================================== main ====================================
if __name__ == "__main__":
    key = jax.random.PRNGKey(0)
    pkey, xkey = jax.random.split(key)
    params = init_params(pkey)
    packed = pack_params(params)
    x = jax.random.normal(xkey, (B, 1, IMG, IMG, DEPTH), jnp.float32)

    out = jax.jit(forward)(packed, x)
    out = jax.block_until_ready(out)

    expected = (B, NUM_CLASSES, DEPTH, IMG // DR, IMG // DR)
    assert out.shape == expected, (out.shape, expected)
    assert bool(jnp.all(jnp.isfinite(out)))
    print("KERNEL_OK")
</pallas_src>

<mosaic_0001>
module attributes {stable_mosaic.version = 11 : i64} {
  func.func @_sam_ms_kernel(%arg0: i32, %arg1: i32, %arg2: memref<1x16x768xf32, #tpu.memory_space<vmem>>, %arg3: memref<768x32xbf16, #tpu.memory_space<vmem>>, %arg4: memref<16x32xf32, #tpu.memory_space<vmem>>, %arg5: memref<9x16x16xf32, #tpu.memory_space<vmem>>, %arg6: memref<1x1x32xf32, #tpu.memory_space<vmem>>, %arg7: memref<1x1x32xf32, #tpu.memory_space<vmem>>, %arg8: memref<1x32x96xbf16, #tpu.memory_space<vmem>>, %arg9: memref<1x1x96xf32, #tpu.memory_space<vmem>>, %arg10: memref<1x32x32xbf16, #tpu.memory_space<vmem>>, %arg11: memref<1x1x32xf32, #tpu.memory_space<vmem>>, %arg12: memref<1x1x32xf32, #tpu.memory_space<vmem>>, %arg13: memref<1x1x32xf32, #tpu.memory_space<vmem>>, %arg14: memref<1x32x128xbf16, #tpu.memory_space<vmem>>, %arg15: memref<1x1x128xf32, #tpu.memory_space<vmem>>, %arg16: memref<1x128x32xbf16, #tpu.memory_space<vmem>>, %arg17: memref<1x1x32xf32, #tpu.memory_space<vmem>>, %arg18: memref<1x9x1x32xf32, #tpu.memory_space<vmem>>, %arg19: memref<1x1x32xf32, #tpu.memory_space<vmem>>, %arg20: memref<32x16xf32, #tpu.memory_space<vmem>>, %arg21: memref<1x16xf32, #tpu.memory_space<vmem>>, %arg22: memref<16x1xf32, #tpu.memory_space<vmem>>, %arg23: memref<1x1xf32, #tpu.memory_space<vmem>>, %arg24: memref<1x16x1xf32, #tpu.memory_space<vmem>>, %arg25: memref<16x32xf32, #tpu.memory_space<vmem>>, %arg26: memref<16x32xf32, #tpu.memory_space<vmem>>) attributes {dimension_semantics = [#tpu.dimension_semantics<parallel>, #tpu.dimension_semantics<arbitrary>], iteration_bounds = array<i64: 2, 12>, scalar_prefetch = 0 : i64, scratch_operands = 2 : i64, tpu.core_type = #tpu.core_type<tc>, window_params = [{transform_indices = @transform_0, window_bounds = array<i64: 1, 16, 768>}, {pipeline_mode = #tpu.pipeline_mode<synchronous>, transform_indices = @transform_1, window_bounds = array<i64: 768, 32>}, {pipeline_mode = #tpu.pipeline_mode<synchronous>, transform_indices = @transform_2, window_bounds = array<i64: 16, 32>}, {pipeline_mode = #tpu.pipeline_mode<synchronous>, transform_indices = @transform_3, window_bounds = array<i64: 9, 16, 16>}, {transform_indices = @transform_4, window_bounds = array<i64: 1, 1, 32>}, {transform_indices = @transform_5, window_bounds = array<i64: 1, 1, 32>}, {transform_indices = @transform_6, window_bounds = array<i64: 1, 32, 96>}, {transform_indices = @transform_7, window_bounds = array<i64: 1, 1, 96>}, {transform_indices = @transform_8, window_bounds = array<i64: 1, 32, 32>}, {transform_indices = @transform_9, window_bounds = array<i64: 1, 1, 32>}, {transform_indices = @transform_10, window_bounds = array<i64: 1, 1, 32>}, {transform_indices = @transform_11, window_bounds = array<i64: 1, 1, 32>}, {transform_indices = @transform_12, window_bounds = array<i64: 1, 32, 128>}, {transform_indices = @transform_13, window_bounds = array<i64: 1, 1, 128>}, {transform_indices = @transform_14, window_bounds = array<i64: 1, 128, 32>}, {transform_indices = @transform_15, window_bounds = array<i64: 1, 1, 32>}, {transform_indices = @transform_16, window_bounds = array<i64: 1, 9, 1, 32>}, {transform_indices = @transform_17, window_bounds = array<i64: 1, 1, 32>}, {pipeline_mode = #tpu.pipeline_mode<synchronous>, transform_indices = @transform_18, window_bounds = array<i64: 32, 16>}, {pipeline_mode = #tpu.pipeline_mode<synchronous>, transform_indices = @transform_19, window_bounds = array<i64: 1, 16>}, {pipeline_mode = #tpu.pipeline_mode<synchronous>, transform_indices = @transform_20, window_bounds = array<i64: 16, 1>}, {pipeline_mode = #tpu.pipeline_mode<synchronous>, transform_indices = @transform_21, window_bounds = array<i64: 1, 1>}, {transform_indices = @transform_22, window_bounds = array<i64: 1, 16, 1>}]} {
    %c0_i32 = arith.constant 0 : i32
    %0 = arith.cmpi eq, %arg1, %c0_i32 : i32
    %1 = arith.extui %0 : i1 to i32
    %c0_i32_0 = arith.constant 0 : i32
    %2 = arith.cmpi ne, %1, %c0_i32_0 : i32
    scf.if %2 {
      %c0_107 = arith.constant 0 : index
      %c0_108 = arith.constant 0 : index
      %c0_109 = arith.constant 0 : index
      %233 = vector.load %arg2[%c0_107, %c0_108, %c0_109] : memref<1x16x768xf32, #tpu.memory_space<vmem>>, vector<1x16x768xf32>
      %234 = vector.shape_cast %233 : vector<1x16x768xf32> to vector<16x768xf32>
      %235 = arith.truncf %234 : vector<16x768xf32> to vector<16x768xbf16>
      %c0_110 = arith.constant 0 : index
      %c0_111 = arith.constant 0 : index
      %236 = vector.load %arg3[%c0_110, %c0_111] : memref<768x32xbf16, #tpu.memory_space<vmem>>, vector<768x32xbf16>
      %cst_112 = arith.constant dense<0.000000e+00> : vector<16x32xf32>
      %237 = tpu.matmul %235, %236, %cst_112 {dimension_numbers = #tpu.dot_dimension_numbers<[1], [0], [0], [1], [0, 0, 1, 1], [], []>} : vector<16x768xbf16>, vector<768x32xbf16>, vector<16x32xf32> -> vector<16x32xf32>
      %c0_113 = arith.constant 0 : index
      %c0_114 = arith.constant 0 : index
      %238 = vector.load %arg4[%c0_113, %c0_114] : memref<16x32xf32, #tpu.memory_space<vmem>>, vector<16x32xf32>
      %239 = arith.addf %237, %238 : vector<16x32xf32>
      %c0_115 = arith.constant 0 : index
      %c0_116 = arith.constant 0 : index
      %240 = vector.load %arg25[%c0_115, %c0_116] : memref<16x32xf32, #tpu.memory_space<vmem>>, vector<16x32xf32>
      tpu.vector_store %arg25[%c0_115, %c0_116], %239 {strides = array<i32>} : memref<16x32xf32, #tpu.memory_space<vmem>>, vector<16x32xf32>,
      %cst_117 = arith.constant 0.000000e+00 : f32
      %241 = vector.broadcast %cst_117 : f32 to vector<16x32xf32>
      %c0_118 = arith.constant 0 : index
      %c0_119 = arith.constant 0 : index
      %242 = vector.load %arg26[%c0_118, %c0_119] : memref<16x32xf32, #tpu.memory_space<vmem>>, vector<16x32xf32>
      tpu.vector_store %arg26[%c0_118, %c0_119], %241 {strides = array<i32>} : memref<16x32xf32, #tpu.memory_space<vmem>>, vector<16x32xf32>,
    } else {
    }
    %c0 = arith.constant 0 : index
    %c0_1 = arith.constant 0 : index
    %3 = vector.load %arg25[%c0, %c0_1] : memref<16x32xf32, #tpu.memory_space<vmem>>, vector<16x32xf32>
    %c0_2 = arith.constant 0 : index
    %c0_3 = arith.constant 0 : index
    %c0_4 = arith.constant 0 : index
    %4 = vector.load %arg6[%c0_2, %c0_3, %c0_4] : memref<1x1x32xf32, #tpu.memory_space<vmem>>, vector<1x1x32xf32>
    %5 = vector.shape_cast %4 : vector<1x1x32xf32> to vector<1x32xf32>
    %c0_5 = arith.constant 0 : index
    %c0_6 = arith.constant 0 : index
    %c0_7 = arith.constant 0 : index
    %6 = vector.load %arg7[%c0_5, %c0_6, %c0_7] : memref<1x1x32xf32, #tpu.memory_space<vmem>>, vector<1x1x32xf32>
    %7 = vector.shape_cast %6 : vector<1x1x32xf32> to vector<1x32xf32>
    %cst = arith.constant dense<0.000000e+00> : vector<16xf32>
    %8 = vector.multi_reduction <add>, %3, %cst [1] : vector<16x32xf32> to vector<16xf32>
    %9 = vector.shape_cast %8 : vector<16xf32> to vector<16x1xf32>
    %cst_8 = arith.constant 3.200000e+01 : f32
    %10 = vector.broadcast %cst_8 : f32 to vector<16x1xf32>
    %11 = arith.divf %9, %10 : vector<16x1xf32>
    %12 = vector.broadcast %11 : vector<16x1xf32> to vector<16x32xf32>
    %13 = arith.subf %3, %12 : vector<16x32xf32>
    %14 = arith.mulf %13, %13 : vector<16x32xf32>
    %cst_9 = arith.constant dense<0.000000e+00> : vector<16xf32>
    %15 = vector.multi_reduction <add>, %14, %cst_9 [1] : vector<16x32xf32> to vector<16xf32>
    %16 = vector.shape_cast %15 : vector<16xf32> to vector<16x1xf32>
    %cst_10 = arith.constant 3.200000e+01 : f32
    %17 = vector.broadcast %cst_10 : f32 to vector<16x1xf32>
    %18 = arith.divf %16, %17 : vector<16x1xf32>
    %19 = vector.broadcast %11 : vector<16x1xf32> to vector<16x32xf32>
    %20 = arith.subf %3, %19 : vector<16x32xf32>
    %cst_11 = arith.constant 9.99999997E-7 : f32
    %21 = vector.broadcast %cst_11 : f32 to vector<16x1xf32>
    %22 = arith.addf %18, %21 : vector<16x1xf32>
    %23 = math.rsqrt %22 : vector<16x1xf32>
    %24 = vector.broadcast %23 : vector<16x1xf32> to vector<16x32xf32>
    %25 = arith.mulf %20, %24 : vector<16x32xf32>
    %26 = vector.broadcast %5 : vector<1x32xf32> to vector<16x32xf32>
    %27 = arith.mulf %25, %26 : vector<16x32xf32>
    %28 = vector.broadcast %7 : vector<1x32xf32> to vector<16x32xf32>
    %29 = arith.addf %27, %28 : vector<16x32xf32>
    %30 = arith.truncf %29 : vector<16x32xf32> to vector<16x32xbf16>
    %c0_12 = arith.constant 0 : index
    %c0_13 = arith.constant 0 : index
    %c0_14 = arith.constant 0 : index
    %31 = vector.load %arg8[%c0_12, %c0_13, %c0_14] : memref<1x32x96xbf16, #tpu.memory_space<vmem>>, vector<1x32x96xbf16>
    %32 = vector.shape_cast %31 : vector<1x32x96xbf16> to vector<32x96xbf16>
    %cst_15 = arith.constant dense<0.000000e+00> : vector<16x96xf32>
    %33 = tpu.matmul %30, %32, %cst_15 {dimension_numbers = #tpu.dot_dimension_numbers<[1], [0], [0], [1], [0, 0, 1, 1], [], []>} : vector<16x32xbf16>, vector<32x96xbf16>, vector<16x96xf32> -> vector<16x96xf32>
    %c0_16 = arith.constant 0 : index
    %c0_17 = arith.constant 0 : index
    %c0_18 = arith.constant 0 : index
    %34 = vector.load %arg9[%c0_16, %c0_17, %c0_18] : memref<1x1x96xf32, #tpu.memory_space<vmem>>, vector<1x1x96xf32>
    %35 = vector.shape_cast %34 : vector<1x1x96xf32> to vector<1x96xf32>
    %36 = vector.broadcast %35 : vector<1x96xf32> to vector<16x96xf32>
    %37 = arith.addf %33, %36 : vector<16x96xf32>
    %c0_19 = arith.constant 0 : index
    %c0_20 = arith.constant 0 : index
    %c0_21 = arith.constant 0 : index
    %38 = vector.load %arg10[%c0_19, %c0_20, %c0_21] : memref<1x32x32xbf16, #tpu.memory_space<vmem>>, vector<1x32x32xbf16>
    %39 = vector.shape_cast %38 : vector<1x32x32xbf16> to vector<32x32xbf16>
    %cst_22 = arith.constant 0.000000e+00 : f32
    %40 = vector.broadcast %cst_22 : f32 to vector<16x32xf32>
    %41 = vector.extract_strided_slice %37 {offsets = [0, 0], sizes = [16, 16], strides = [1, 1]} : vector<16x96xf32> to vector<16x16xf32>
    %42 = vector.extract_strided_slice %37 {offsets = [0, 32], sizes = [16, 16], strides = [1, 1]} : vector<16x96xf32> to vector<16x16xf32>
    %43 = vector.extract_strided_slice %37 {offsets = [0, 64], sizes = [16, 16], strides = [1, 1]} : vector<16x96xf32> to vector<16x16xf32>
    %44 = tpu.transpose %42, [1, 0] : vector<16x16xf32> -> vector<16x16xf32>
    %cst_23 = arith.constant dense<0.000000e+00> : vector<16x16xf32>
    %45 = tpu.matmul %41, %44, %cst_23 {dimension_numbers = #tpu.dot_dimension_numbers<[1], [0], [0], [1], [0, 0, 1, 1], [], []>} : vector<16x16xf32>, vector<16x16xf32>, vector<16x16xf32> -> vector<16x16xf32>
    %cst_24 = arith.constant 2.500000e-01 : f32
    %46 = vector.broadcast %cst_24 : f32 to vector<16x16xf32>
    %47 = arith.mulf %45, %46 : vector<16x16xf32>
    %cst_25 = arith.constant dense<0xFF800000> : vector<16xf32>
    %48 = vector.multi_reduction <maximumf>, %47, %cst_25 [1] : vector<16x16xf32> to vector<16xf32>
    %49 = vector.shape_cast %48 : vector<16xf32> to vector<16x1xf32>
    %50 = vector.broadcast %49 : vector<16x1xf32> to vector<16x16xf32>
    %51 = arith.subf %47, %50 : vector<16x16xf32>
    %52 = math.exp %51 : vector<16x16xf32>
    %cst_26 = arith.constant dense<0.000000e+00> : vector<16xf32>
    %53 = vector.multi_reduction <add>, %52, %cst_26 [1] : vector<16x16xf32> to vector<16xf32>
    %54 = vector.shape_cast %53 : vector<16xf32> to vector<16x1xf32>
    %55 = tpu.reciprocal %54 {approx = true} : vector<16x1xf32> -> vector<16x1xf32>
    %56 = vector.broadcast %55 : vector<16x1xf32> to vector<16x16xf32>
    %57 = arith.mulf %52, %56 : vector<16x16xf32>
    %cst_27 = arith.constant dense<0.000000e+00> : vector<16x16xf32>
    %58 = tpu.matmul %57, %43, %cst_27 {dimension_numbers = #tpu.dot_dimension_numbers<[1], [0], [0], [1], [0, 0, 1, 1], [], []>} : vector<16x16xf32>, vector<16x16xf32>, vector<16x16xf32> -> vector<16x16xf32>
    %59 = arith.truncf %58 : vector<16x16xf32> to vector<16x16xbf16>
    %60 = vector.extract_strided_slice %39 {offsets = [0, 0], sizes = [16, 32], strides = [1, 1]} : vector<32x32xbf16> to vector<16x32xbf16>
    %cst_28 = arith.constant dense<0.000000e+00> : vector<16x32xf32>
    %61 = tpu.matmul %59, %60, %cst_28 {dimension_numbers = #tpu.dot_dimension_numbers<[1], [0], [0], [1], [0, 0, 1, 1], [], []>} : vector<16x16xbf16>, vector<16x32xbf16>, vector<16x32xf32> -> vector<16x32xf32>
    %62 = arith.addf %40, %61 : vector<16x32xf32>
    %63 = vector.extract_strided_slice %37 {offsets = [0, 16], sizes = [16, 16], strides = [1, 1]} : vector<16x96xf32> to vector<16x16xf32>
    %64 = vector.extract_strided_slice %37 {offsets = [0, 48], sizes = [16, 16], strides = [1, 1]} : vector<16x96xf32> to vector<16x16xf32>
    %65 = vector.extract_strided_slice %37 {offsets = [0, 80], sizes = [16, 16], strides = [1, 1]} : vector<16x96xf32> to vector<16x16xf32>
    %66 = tpu.transpose %64, [1, 0] : vector<16x16xf32> -> vector<16x16xf32>
    %cst_29 = arith.constant dense<0.000000e+00> : vector<16x16xf32>
    %67 = tpu.matmul %63, %66, %cst_29 {dimension_numbers = #tpu.dot_dimension_numbers<[1], [0], [0], [1], [0, 0, 1, 1], [], []>} : vector<16x16xf32>, vector<16x16xf32>, vector<16x16xf32> -> vector<16x16xf32>
    %cst_30 = arith.constant 2.500000e-01 : f32
    %68 = vector.broadcast %cst_30 : f32 to vector<16x16xf32>
    %69 = arith.mulf %67, %68 : vector<16x16xf32>
    %cst_31 = arith.constant dense<0xFF800000> : vector<16xf32>
    %70 = vector.multi_reduction <maximumf>, %69, %cst_31 [1] : vector<16x16xf32> to vector<16xf32>
    %71 = vector.shape_cast %70 : vector<16xf32> to vector<16x1xf32>
    %72 = vector.broadcast %71 : vector<16x1xf32> to vector<16x16xf32>
    %73 = arith.subf %69, %72 : vector<16x16xf32>
    %74 = math.exp %73 : vector<16x16xf32>
    %cst_32 = arith.constant dense<0.000000e+00> : vector<16xf32>
    %75 = vector.multi_reduction <add>, %74, %cst_32 [1] : vector<16x16xf32> to vector<16xf32>
    %76 = vector.shape_cast %75 : vector<16xf32> to vector<16x1xf32>
    %77 = tpu.reciprocal %76 {approx = true} : vector<16x1xf32> -> vector<16x1xf32>
    %78 = vector.broadcast %77 : vector<16x1xf32> to vector<16x16xf32>
    %79 = arith.mulf %74, %78 : vector<16x16xf32>
    %cst_33 = arith.constant dense<0.000000e+00> : vector<16x16xf32>
    %80 = tpu.matmul %79, %65, %cst_33 {dimension_numbers = #tpu.dot_dimension_numbers<[1], [0], [0], [1], [0, 0, 1, 1], [], []>} : vector<16x16xf32>, vector<16x16xf32>, vector<16x16xf32> -> vector<16x16xf32>
    %81 = arith.truncf %80 : vector<16x16xf32> to vector<16x16xbf16>
    %82 = vector.extract_strided_slice %39 {offsets = [16, 0], sizes = [16, 32], strides = [1, 1]} : vector<32x32xbf16> to vector<16x32xbf16>
    %cst_34 = arith.constant dense<0.000000e+00> : vector<16x32xf32>
    %83 = tpu.matmul %81, %82, %cst_34 {dimension_numbers = #tpu.dot_dimension_numbers<[1], [0], [0], [1], [0, 0, 1, 1], [], []>} : vector<16x16xbf16>, vector<16x32xbf16>, vector<16x32xf32> -> vector<16x32xf32>
    %84 = arith.addf %62, %83 : vector<16x32xf32>
    %85 = arith.addf %3, %84 : vector<16x32xf32>
    %c0_35 = arith.constant 0 : index
    %c0_36 = arith.constant 0 : index
    %c0_37 = arith.constant 0 : index
    %86 = vector.load %arg11[%c0_35, %c0_36, %c0_37] : memref<1x1x32xf32, #tpu.memory_space<vmem>>, vector<1x1x32xf32>
    %87 = vector.shape_cast %86 : vector<1x1x32xf32> to vector<1x32xf32>
    %88 = vector.broadcast %87 : vector<1x32xf32> to vector<16x32xf32>
    %89 = arith.addf %85, %88 : vector<16x32xf32>
    %c0_38 = arith.constant 0 : index
    %c0_39 = arith.constant 0 : index
    %c0_40 = arith.constant 0 : index
    %90 = vector.load %arg12[%c0_38, %c0_39, %c0_40] : memref<1x1x32xf32, #tpu.memory_space<vmem>>, vector<1x1x32xf32>
    %91 = vector.shape_cast %90 : vector<1x1x32xf32> to vector<1x32xf32>
    %c0_41 = arith.constant 0 : index
    %c0_42 = arith.constant 0 : index
    %c0_43 = arith.constant 0 : index
    %92 = vector.load %arg13[%c0_41, %c0_42, %c0_43] : memref<1x1x32xf32, #tpu.memory_space<vmem>>, vector<1x1x32xf32>
    %93 = vector.shape_cast %92 : vector<1x1x32xf32> to vector<1x32xf32>
    %cst_44 = arith.constant dense<0.000000e+00> : vector<16xf32>
    %94 = vector.multi_reduction <add>, %89, %cst_44 [1] : vector<16x32xf32> to vector<16xf32>
    %95 = vector.shape_cast %94 : vector<16xf32> to vector<16x1xf32>
    %cst_45 = arith.constant 3.200000e+01 : f32
    %96 = vector.broadcast %cst_45 : f32 to vector<16x1xf32>
    %97 = arith.divf %95, %96 : vector<16x1xf32>
    %98 = vector.broadcast %97 : vector<16x1xf32> to vector<16x32xf32>
    %99 = arith.subf %89, %98 : vector<16x32xf32>
    %100 = arith.mulf %99, %99 : vector<16x32xf32>
    %cst_46 = arith.constant dense<0.000000e+00> : vector<16xf32>
    %101 = vector.multi_reduction <add>, %100, %cst_46 [1] : vector<16x32xf32> to vector<16xf32>
    %102 = vector.shape_cast %101 : vector<16xf32> to vector<16x1xf32>
    %cst_47 = arith.constant 3.200000e+01 : f32
    %103 = vector.broadcast %cst_47 : f32 to vector<16x1xf32>
    %104 = arith.divf %102, %103 : vector<16x1xf32>
    %105 = vector.broadcast %97 : vector<16x1xf32> to vector<16x32xf32>
    %106 = arith.subf %89, %105 : vector<16x32xf32>
    %cst_48 = arith.constant 9.99999997E-7 : f32
    %107 = vector.broadcast %cst_48 : f32 to vector<16x1xf32>
    %108 = arith.addf %104, %107 : vector<16x1xf32>
    %109 = math.rsqrt %108 : vector<16x1xf32>
    %110 = vector.broadcast %109 : vector<16x1xf32> to vector<16x32xf32>
    %111 = arith.mulf %106, %110 : vector<16x32xf32>
    %112 = vector.broadcast %91 : vector<1x32xf32> to vector<16x32xf32>
    %113 = arith.mulf %111, %112 : vector<16x32xf32>
    %114 = vector.broadcast %93 : vector<1x32xf32> to vector<16x32xf32>
    %115 = arith.addf %113, %114 : vector<16x32xf32>
    %116 = arith.truncf %115 : vector<16x32xf32> to vector<16x32xbf16>
    %c0_49 = arith.constant 0 : index
    %c0_50 = arith.constant 0 : index
    %c0_51 = arith.constant 0 : index
    %117 = vector.load %arg14[%c0_49, %c0_50, %c0_51] : memref<1x32x128xbf16, #tpu.memory_space<vmem>>, vector<1x32x128xbf16>
    %118 = vector.shape_cast %117 : vector<1x32x128xbf16> to vector<32x128xbf16>
    %cst_52 = arith.constant dense<0.000000e+00> : vector<16x128xf32>
    %119 = tpu.matmul %116, %118, %cst_52 {dimension_numbers = #tpu.dot_dimension_numbers<[1], [0], [0], [1], [0, 0, 1, 1], [], []>} : vector<16x32xbf16>, vector<32x128xbf16>, vector<16x128xf32> -> vector<16x128xf32>
    %c0_53 = arith.constant 0 : index
    %c0_54 = arith.constant 0 : index
    %c0_55 = arith.constant 0 : index
    %120 = vector.load %arg15[%c0_53, %c0_54, %c0_55] : memref<1x1x128xf32, #tpu.memory_space<vmem>>, vector<1x1x128xf32>
    %121 = vector.shape_cast %120 : vector<1x1x128xf32> to vector<1x128xf32>
    %122 = vector.broadcast %121 : vector<1x128xf32> to vector<16x128xf32>
    %123 = arith.addf %119, %122 : vector<16x128xf32>
    %124 = arith.mulf %123, %123 : vector<16x128xf32>
    %125 = arith.mulf %123, %124 : vector<16x128xf32>
    %cst_56 = arith.constant 4.471500e-02 : f32
    %126 = vector.broadcast %cst_56 : f32 to vector<16x128xf32>
    %127 = arith.mulf %126, %125 : vector<16x128xf32>
    %128 = arith.addf %123, %127 : vector<16x128xf32>
    %cst_57 = arith.constant 0.797884583 : f32
    %129 = vector.broadcast %cst_57 : f32 to vector<16x128xf32>
    %130 = arith.mulf %129, %128 : vector<16x128xf32>
    %131 = math.tanh %130 : vector<16x128xf32>
    %cst_58 = arith.constant 1.000000e+00 : f32
    %132 = vector.broadcast %cst_58 : f32 to vector<16x128xf32>
    %133 = arith.addf %132, %131 : vector<16x128xf32>
    %cst_59 = arith.constant 5.000000e-01 : f32
    %134 = vector.broadcast %cst_59 : f32 to vector<16x128xf32>
    %135 = arith.mulf %134, %133 : vector<16x128xf32>
    %136 = arith.mulf %123, %135 : vector<16x128xf32>
    %137 = arith.truncf %136 : vector<16x128xf32> to vector<16x128xbf16>
    %c0_60 = arith.constant 0 : index
    %c0_61 = arith.constant 0 : index
    %c0_62 = arith.constant 0 : index
    %138 = vector.load %arg16[%c0_60, %c0_61, %c0_62] : memref<1x128x32xbf16, #tpu.memory_space<vmem>>, vector<1x128x32xbf16>
    %139 = vector.shape_cast %138 : vector<1x128x32xbf16> to vector<128x32xbf16>
    %cst_63 = arith.constant dense<0.000000e+00> : vector<16x32xf32>
    %140 = tpu.matmul %137, %139, %cst_63 {dimension_numbers = #tpu.dot_dimension_numbers<[1], [0], [0], [1], [0, 0, 1, 1], [], []>} : vector<16x128xbf16>, vector<128x32xbf16>, vector<16x32xf32> -> vector<16x32xf32>
    %141 = arith.addf %89, %140 : vector<16x32xf32>
    %c0_64 = arith.constant 0 : index
    %c0_65 = arith.constant 0 : index
    %c0_66 = arith.constant 0 : index
    %142 = vector.load %arg17[%c0_64, %c0_65, %c0_66] : memref<1x1x32xf32, #tpu.memory_space<vmem>>, vector<1x1x32xf32>
    %143 = vector.shape_cast %142 : vector<1x1x32xf32> to vector<1x32xf32>
    %144 = vector.broadcast %143 : vector<1x32xf32> to vector<16x32xf32>
    %145 = arith.addf %141, %144 : vector<16x32xf32>
    %c0_67 = arith.constant 0 : index
    %c0_68 = arith.constant 0 : index
    %c0_69 = arith.constant 0 : index
    %c0_70 = arith.constant 0 : index
    %146 = vector.load %arg18[%c0_67, %c0_68, %c0_69, %c0_70] : memref<1x9x1x32xf32, #tpu.memory_space<vmem>>, vector<1x9x1x32xf32>
    %147 = vector.shape_cast %146 : vector<1x9x1x32xf32> to vector<9x1x32xf32>
    %cst_71 = arith.constant 0.000000e+00 : f32
    %148 = vector.broadcast %cst_71 : f32 to vector<16x32xf32>
    %c0_72 = arith.constant 0 : index
    %c0_73 = arith.constant 0 : index
    %c0_74 = arith.constant 0 : index
    %149 = vector.load %arg5[%c0_72, %c0_73, %c0_74] : memref<9x16x16xf32, #tpu.memory_space<vmem>>, vector<1x16x16xf32>
    %150 = vector.shape_cast %149 : vector<1x16x16xf32> to vector<16x16xf32>
    %cst_75 = arith.constant dense<0.000000e+00> : vector<16x32xf32>
    %151 = tpu.matmul %150, %145, %cst_75 {dimension_numbers = #tpu.dot_dimension_numbers<[1], [0], [0], [1], [0, 0, 1, 1], [], []>} : vector<16x16xf32>, vector<16x32xf32>, vector<16x32xf32> -> vector<16x32xf32>
    %152 = vector.extract_strided_slice %147 {offsets = [0, 0, 0], sizes = [1, 1, 32], strides = [1, 1, 1]} : vector<9x1x32xf32> to vector<1x1x32xf32>
    %153 = vector.shape_cast %152 : vector<1x1x32xf32> to vector<1x32xf32>
    %154 = vector.broadcast %153 : vector<1x32xf32> to vector<16x32xf32>
    %155 = arith.mulf %151, %154 : vector<16x32xf32>
    %156 = arith.addf %148, %155 : vector<16x32xf32>
    %c1 = arith.constant 1 : index
    %c0_76 = arith.constant 0 : index
    %c0_77 = arith.constant 0 : index
    %157 = vector.load %arg5[%c1, %c0_76, %c0_77] : memref<9x16x16xf32, #tpu.memory_space<vmem>>, vector<1x16x16xf32>
    %158 = vector.shape_cast %157 : vector<1x16x16xf32> to vector<16x16xf32>
    %cst_78 = arith.constant dense<0.000000e+00> : vector<16x32xf32>
    %159 = tpu.matmul %158, %145, %cst_78 {dimension_numbers = #tpu.dot_dimension_numbers<[1], [0], [0], [1], [0, 0, 1, 1], [], []>} : vector<16x16xf32>, vector<16x32xf32>, vector<16x32xf32> -> vector<16x32xf32>
    %160 = vector.extract_strided_slice %147 {offsets = [1, 0, 0], sizes = [1, 1, 32], strides = [1, 1, 1]} : vector<9x1x32xf32> to vector<1x1x32xf32>
    %161 = vector.shape_cast %160 : vector<1x1x32xf32> to vector<1x32xf32>
    %162 = vector.broadcast %161 : vector<1x32xf32> to vector<16x32xf32>
    %163 = arith.mulf %159, %162 : vector<16x32xf32>
    %164 = arith.addf %156, %163 : vector<16x32xf32>
    %c2 = arith.constant 2 : index
    %c0_79 = arith.constant 0 : index
    %c0_80 = arith.constant 0 : index
    %165 = vector.load %arg5[%c2, %c0_79, %c0_80] : memref<9x16x16xf32, #tpu.memory_space<vmem>>, vector<1x16x16xf32>
    %166 = vector.shape_cast %165 : vector<1x16x16xf32> to vector<16x16xf32>
    %cst_81 = arith.constant dense<0.000000e+00> : vector<16x32xf32>
    %167 = tpu.matmul %166, %145, %cst_81 {dimension_numbers = #tpu.dot_dimension_numbers<[1], [0], [0], [1], [0, 0, 1, 1], [], []>} : vector<16x16xf32>, vector<16x32xf32>, vector<16x32xf32> -> vector<16x32xf32>
    %168 = vector.extract_strided_slice %147 {offsets = [2, 0, 0], sizes = [1, 1, 32], strides = [1, 1, 1]} : vector<9x1x32xf32> to vector<1x1x32xf32>
    %169 = vector.shape_cast %168 : vector<1x1x32xf32> to vector<1x32xf32>
    %170 = vector.broadcast %169 : vector<1x32xf32> to vector<16x32xf32>
    %171 = arith.mulf %167, %170 : vector<16x32xf32>
    %172 = arith.addf %164, %171 : vector<16x32xf32>
    %c3 = arith.constant 3 : index
    %c0_82 = arith.constant 0 : index
    %c0_83 = arith.constant 0 : index
    %173 = vector.load %arg5[%c3, %c0_82, %c0_83] : memref<9x16x16xf32, #tpu.memory_space<vmem>>, vector<1x16x16xf32>
    %174 = vector.shape_cast %173 : vector<1x16x16xf32> to vector<16x16xf32>
    %cst_84 = arith.constant dense<0.000000e+00> : vector<16x32xf32>
    %175 = tpu.matmul %174, %145, %cst_84 {dimension_numbers = #tpu.dot_dimension_numbers<[1], [0], [0], [1], [0, 0, 1, 1], [], []>} : vector<16x16xf32>, vector<16x32xf32>, vector<16x32xf32> -> vector<16x32xf32>
    %176 = vector.extract_strided_slice %147 {offsets = [3, 0, 0], sizes = [1, 1, 32], strides = [1, 1, 1]} : vector<9x1x32xf32> to vector<1x1x32xf32>
    %177 = vector.shape_cast %176 : vector<1x1x32xf32> to vector<1x32xf32>
    %178 = vector.broadcast %177 : vector<1x32xf32> to vector<16x32xf32>
    %179 = arith.mulf %175, %178 : vector<16x32xf32>
    %180 = arith.addf %172, %179 : vector<16x32xf32>
    %c4 = arith.constant 4 : index
    %c0_85 = arith.constant 0 : index
    %c0_86 = arith.constant 0 : index
    %181 = vector.load %arg5[%c4, %c0_85, %c0_86] : memref<9x16x16xf32, #tpu.memory_space<vmem>>, vector<1x16x16xf32>
    %182 = vector.shape_cast %181 : vector<1x16x16xf32> to vector<16x16xf32>
    %cst_87 = arith.constant dense<0.000000e+00> : vector<16x32xf32>
    %183 = tpu.matmul %182, %145, %cst_87 {dimension_numbers = #tpu.dot_dimension_numbers<[1], [0], [0], [1], [0, 0, 1, 1], [], []>} : vector<16x16xf32>, vector<16x32xf32>, vector<16x32xf32> -> vector<16x32xf32>
    %184 = vector.extract_strided_slice %147 {offsets = [4, 0, 0], sizes = [1, 1, 32], strides = [1, 1, 1]} : vector<9x1x32xf32> to vector<1x1x32xf32>
    %185 = vector.shape_cast %184 : vector<1x1x32xf32> to vector<1x32xf32>
    %186 = vector.broadcast %185 : vector<1x32xf32> to vector<16x32xf32>
    %187 = arith.mulf %183, %186 : vector<16x32xf32>
    %188 = arith.addf %180, %187 : vector<16x32xf32>
    %c5 = arith.constant 5 : index
    %c0_88 = arith.constant 0 : index
    %c0_89 = arith.constant 0 : index
    %189 = vector.load %arg5[%c5, %c0_88, %c0_89] : memref<9x16x16xf32, #tpu.memory_space<vmem>>, vector<1x16x16xf32>
    %190 = vector.shape_cast %189 : vector<1x16x16xf32> to vector<16x16xf32>
    %cst_90 = arith.constant dense<0.000000e+00> : vector<16x32xf32>
    %191 = tpu.matmul %190, %145, %cst_90 {dimension_numbers = #tpu.dot_dimension_numbers<[1], [0], [0], [1], [0, 0, 1, 1], [], []>} : vector<16x16xf32>, vector<16x32xf32>, vector<16x32xf32> -> vector<16x32xf32>
    %192 = vector.extract_strided_slice %147 {offsets = [5, 0, 0], sizes = [1, 1, 32], strides = [1, 1, 1]} : vector<9x1x32xf32> to vector<1x1x32xf32>
    %193 = vector.shape_cast %192 : vector<1x1x32xf32> to vector<1x32xf32>
    %194 = vector.broadcast %193 : vector<1x32xf32> to vector<16x32xf32>
    %195 = arith.mulf %191, %194 : vector<16x32xf32>
    %196 = arith.addf %188, %195 : vector<16x32xf32>
    %c6 = arith.constant 6 : index
    %c0_91 = arith.constant 0 : index
    %c0_92 = arith.constant 0 : index
    %197 = vector.load %arg5[%c6, %c0_91, %c0_92] : memref<9x16x16xf32, #tpu.memory_space<vmem>>, vector<1x16x16xf32>
    %198 = vector.shape_cast %197 : vector<1x16x16xf32> to vector<16x16xf32>
    %cst_93 = arith.constant dense<0.000000e+00> : vector<16x32xf32>
    %199 = tpu.matmul %198, %145, %cst_93 {dimension_numbers = #tpu.dot_dimension_numbers<[1], [0], [0], [1], [0, 0, 1, 1], [], []>} : vector<16x16xf32>, vector<16x32xf32>, vector<16x32xf32> -> vector<16x32xf32>
    %200 = vector.extract_strided_slice %147 {offsets = [6, 0, 0], sizes = [1, 1, 32], strides = [1, 1, 1]} : vector<9x1x32xf32> to vector<1x1x32xf32>
    %201 = vector.shape_cast %200 : vector<1x1x32xf32> to vector<1x32xf32>
    %202 = vector.broadcast %201 : vector<1x32xf32> to vector<16x32xf32>
    %203 = arith.mulf %199, %202 : vector<16x32xf32>
    %204 = arith.addf %196, %203 : vector<16x32xf32>
    %c7 = arith.constant 7 : index
    %c0_94 = arith.constant 0 : index
    %c0_95 = arith.constant 0 : index
    %205 = vector.load %arg5[%c7, %c0_94, %c0_95] : memref<9x16x16xf32, #tpu.memory_space<vmem>>, vector<1x16x16xf32>
    %206 = vector.shape_cast %205 : vector<1x16x16xf32> to vector<16x16xf32>
    %cst_96 = arith.constant dense<0.000000e+00> : vector<16x32xf32>
    %207 = tpu.matmul %206, %145, %cst_96 {dimension_numbers = #tpu.dot_dimension_numbers<[1], [0], [0], [1], [0, 0, 1, 1], [], []>} : vector<16x16xf32>, vector<16x32xf32>, vector<16x32xf32> -> vector<16x32xf32>
    %208 = vector.extract_strided_slice %147 {offsets = [7, 0, 0], sizes = [1, 1, 32], strides = [1, 1, 1]} : vector<9x1x32xf32> to vector<1x1x32xf32>
    %209 = vector.shape_cast %208 : vector<1x1x32xf32> to vector<1x32xf32>
    %210 = vector.broadcast %209 : vector<1x32xf32> to vector<16x32xf32>
    %211 = arith.mulf %207, %210 : vector<16x32xf32>
    %212 = arith.addf %204, %211 : vector<16x32xf32>
    %c8 = arith.constant 8 : index
    %c0_97 = arith.constant 0 : index
    %c0_98 = arith.constant 0 : index
    %213 = vector.load %arg5[%c8, %c0_97, %c0_98] : memref<9x16x16xf32, #tpu.memory_space<vmem>>, vector<1x16x16xf32>
    %214 = vector.shape_cast %213 : vector<1x16x16xf32> to vector<16x16xf32>
    %cst_99 = arith.constant dense<0.000000e+00> : vector<16x32xf32>
    %215 = tpu.matmul %214, %145, %cst_99 {dimension_numbers = #tpu.dot_dimension_numbers<[1], [0], [0], [1], [0, 0, 1, 1], [], []>} : vector<16x16xf32>, vector<16x32xf32>, vector<16x32xf32> -> vector<16x32xf32>
    %216 = vector.extract_strided_slice %147 {offsets = [8, 0, 0], sizes = [1, 1, 32], strides = [1, 1, 1]} : vector<9x1x32xf32> to vector<1x1x32xf32>
    %217 = vector.shape_cast %216 : vector<1x1x32xf32> to vector<1x32xf32>
    %218 = vector.broadcast %217 : vector<1x32xf32> to vector<16x32xf32>
    %219 = arith.mulf %215, %218 : vector<16x32xf32>
    %220 = arith.addf %212, %219 : vector<16x32xf32>
    %221 = arith.addf %145, %220 : vector<16x32xf32>
    %c0_100 = arith.constant 0 : index
    %c0_101 = arith.constant 0 : index
    %c0_102 = arith.constant 0 : index
    %222 = vector.load %arg19[%c0_100, %c0_101, %c0_102] : memref<1x1x32xf32, #tpu.memory_space<vmem>>, vector<1x1x32xf32>
    %223 = vector.shape_cast %222 : vector<1x1x32xf32> to vector<1x32xf32>
    %224 = vector.broadcast %223 : vector<1x32xf32> to vector<16x32xf32>
    %225 = arith.addf %221, %224 : vector<16x32xf32>
    %c0_103 = arith.constant 0 : index
    %c0_104 = arith.constant 0 : index
    %226 = vector.load %arg25[%c0_103, %c0_104] : memref<16x32xf32, #tpu.memory_space<vmem>>, vector<16x32xf32>
    tpu.vector_store %arg25[%c0_103, %c0_104], %225 {strides = array<i32>} : memref<16x32xf32, #tpu.memory_space<vmem>>, vector<16x32xf32>,
    %c8_i32 = arith.constant 8 : i32
    %227 = arith.cmpi sge, %arg1, %c8_i32 : i32
    %228 = arith.extui %227 : i1 to i32
    %c0_i32_105 = arith.constant 0 : i32
    %229 = arith.cmpi ne, %228, %c0_i32_105 : i32
    scf.if %229 {
      %c0_107 = arith.constant 0 : index
      %c0_108 = arith.constant 0 : index
      %233 = vector.load %arg26[%c0_107, %c0_108] : memref<16x32xf32, #tpu.memory_space<vmem>>, vector<16x32xf32>
      %234 = arith.addf %233, %225 : vector<16x32xf32>
      %c0_109 = arith.constant 0 : index
      %c0_110 = arith.constant 0 : index
      %235 = vector.load %arg26[%c0_109, %c0_110] : memref<16x32xf32, #tpu.memory_space<vmem>>, vector<16x32xf32>
      tpu.vector_store %arg26[%c0_109, %c0_110], %234 {strides = array<i32>} : memref<16x32xf32, #tpu.memory_space<vmem>>, vector<16x32xf32>,
    } else {
    }
    %c11_i32 = arith.constant 11 : i32
    %230 = arith.cmpi eq, %arg1, %c11_i32 : i32
    %231 = arith.extui %230 : i1 to i32
    %c0_i32_106 = arith.constant 0 : i32
    %232 = arith.cmpi ne, %231, %c0_i32_106 : i32
    scf.if %232 {
      %c0_107 = arith.constant 0 : index
      %c0_108 = arith.constant 0 : index
      %233 = vector.load %arg26[%c0_107, %c0_108] : memref<16x32xf32, #tpu.memory_space<vmem>>, vector<16x32xf32>
      %cst_109 = arith.constant 2.500000e-01 : f32
      %234 = vector.broadcast %cst_109 : f32 to vector<16x32xf32>
      %235 = arith.mulf %233, %234 : vector<16x32xf32>
      %c0_110 = arith.constant 0 : index
      %c0_111 = arith.constant 0 : index
      %236 = vector.load %arg20[%c0_110, %c0_111] : memref<32x16xf32, #tpu.memory_space<vmem>>, vector<32x16xf32>
      %cst_112 = arith.constant dense<0.000000e+00> : vector<16x16xf32>
      %237 = tpu.matmul %235, %236, %cst_112 {dimension_numbers = #tpu.dot_dimension_numbers<[1], [0], [0], [1], [0, 0, 1, 1], [], []>} : vector<16x32xf32>, vector<32x16xf32>, vector<16x16xf32> -> vector<16x16xf32>
      %c0_113 = arith.constant 0 : index
      %c0_114 = arith.constant 0 : index
      %238 = vector.load %arg21[%c0_113, %c0_114] : memref<1x16xf32, #tpu.memory_space<vmem>>, vector<1x16xf32>
      %239 = vector.broadcast %238 : vector<1x16xf32> to vector<16x16xf32>
      %240 = arith.addf %237, %239 : vector<16x16xf32>
      %cst_115 = arith.constant 0.000000e+00 : f32
      %241 = vector.broadcast %cst_115 : f32 to vector<16x16xf32>
      %242 = arith.maximumf %240, %241 : vector<16x16xf32>
      %c0_116 = arith.constant 0 : index
      %c0_117 = arith.constant 0 : index
      %243 = vector.load %arg22[%c0_116, %c0_117] : memref<16x1xf32, #tpu.memory_space<vmem>>, vector<16x1xf32>
      %cst_118 = arith.constant dense<0.000000e+00> : vector<16x1xf32>
      %244 = tpu.matmul %242, %243, %cst_118 {dimension_numbers = #tpu.dot_dimension_numbers<[1], [0], [0], [1], [0, 0, 1, 1], [], []>} : vector<16x16xf32>, vector<16x1xf32>, vector<16x1xf32> -> vector<16x1xf32>
      %c0_119 = arith.constant 0 : index
      %c0_120 = arith.constant 0 : index
      %245 = vector.load %arg23[%c0_119, %c0_120] : memref<1x1xf32, #tpu.memory_space<vmem>>, vector<1x1xf32>
      %246 = vector.broadcast %245 : vector<1x1xf32> to vector<16x1xf32>
      %247 = arith.addf %244, %246 : vector<16x1xf32>
      %c0_121 = arith.constant 0 : index
      %c0_122 = arith.constant 0 : index
      %c0_123 = arith.constant 0 : index
      %248 = vector.load %arg24[%c0_121, %c0_122, %c0_123] : memref<1x16x1xf32, #tpu.memory_space<vmem>>, vector<1x16x1xf32>
      %249 = vector.shape_cast %248 : vector<1x16x1xf32> to vector<16x1xf32>
      %250 = vector.shape_cast %247 : vector<16x1xf32> to vector<1x16x1xf32>
      tpu.vector_store %arg24[%c0_121, %c0_122, %c0_123], %250 {strides = array<i32>} : memref<1x16x1xf32, #tpu.memory_space<vmem>>, vector<1x16x1xf32>,
    } else {
    }
    return
  }
  func.func @transform_0(%arg0: i32, %arg1: i32) -> (i32, i32, i32) {
    %c0_i32 = arith.constant 0 : i32
    %c0_i32_0 = arith.constant 0 : i32
    %c0_i32_1 = arith.constant 0 : i32
    return %arg0, %c0_i32, %c0_i32_0 : i32, i32, i32
  }
  func.func @transform_1(%arg0: i32, %arg1: i32) -> (i32, i32) {
    %c0_i32 = arith.constant 0 : i32
    %c0_i32_0 = arith.constant 0 : i32
    %c0_i32_1 = arith.constant 0 : i32
    return %c0_i32, %c0_i32_0 : i32, i32
  }
  func.func @transform_2(%arg0: i32, %arg1: i32) -> (i32, i32) {
    %c0_i32 = arith.constant 0 : i32
    %c0_i32_0 = arith.constant 0 : i32
    %c0_i32_1 = arith.constant 0 : i32
    return %c0_i32, %c0_i32_0 : i32, i32
  }
  func.func @transform_3(%arg0: i32, %arg1: i32) -> (i32, i32, i32) {
    %c0_i32 = arith.constant 0 : i32
    %c0_i32_0 = arith.constant 0 : i32
    %c0_i32_1 = arith.constant 0 : i32
    %c0_i32_2 = arith.constant 0 : i32
    return %c0_i32, %c0_i32_0, %c0_i32_1 : i32, i32, i32
  }
  func.func @transform_4(%arg0: i32, %arg1: i32) -> (i32, i32, i32) {
    %c0_i32 = arith.constant 0 : i32
    %c0_i32_0 = arith.constant 0 : i32
    %c0_i32_1 = arith.constant 0 : i32
    return %arg1, %c0_i32, %c0_i32_0 : i32, i32, i32
  }
  func.func @transform_5(%arg0: i32, %arg1: i32) -> (i32, i32, i32) {
    %c0_i32 = arith.constant 0 : i32
    %c0_i32_0 = arith.constant 0 : i32
    %c0_i32_1 = arith.constant 0 : i32
    return %arg1, %c0_i32, %c0_i32_0 : i32, i32, i32
  }
  func.func @transform_6(%arg0: i32, %arg1: i32) -> (i32, i32, i32) {
    %c0_i32 = arith.constant 0 : i32
    %c0_i32_0 = arith.constant 0 : i32
    %c0_i32_1 = arith.constant 0 : i32
    return %arg1, %c0_i32, %c0_i32_0 : i32, i32, i32
  }
  func.func @transform_7(%arg0: i32, %arg1: i32) -> (i32, i32, i32) {
    %c0_i32 = arith.constant 0 : i32
    %c0_i32_0 = arith.constant 0 : i32
    %c0_i32_1 = arith.constant 0 : i32
    return %arg1, %c0_i32, %c0_i32_0 : i32, i32, i32
  }
  func.func @transform_8(%arg0: i32, %arg1: i32) -> (i32, i32, i32) {
    %c0_i32 = arith.constant 0 : i32
    %c0_i32_0 = arith.constant 0 : i32
    %c0_i32_1 = arith.constant 0 : i32
    return %arg1, %c0_i32, %c0_i32_0 : i32, i32, i32
  }
  func.func @transform_9(%arg0: i32, %arg1: i32) -> (i32, i32, i32) {
    %c0_i32 = arith.constant 0 : i32
    %c0_i32_0 = arith.constant 0 : i32
    %c0_i32_1 = arith.constant 0 : i32
    return %arg1, %c0_i32, %c0_i32_0 : i32, i32, i32
  }
  func.func @transform_10(%arg0: i32, %arg1: i32) -> (i32, i32, i32) {
    %c0_i32 = arith.constant 0 : i32
    %c0_i32_0 = arith.constant 0 : i32
    %c0_i32_1 = arith.constant 0 : i32
    return %arg1, %c0_i32, %c0_i32_0 : i32, i32, i32
  }
  func.func @transform_11(%arg0: i32, %arg1: i32) -> (i32, i32, i32) {
    %c0_i32 = arith.constant 0 : i32
    %c0_i32_0 = arith.constant 0 : i32
    %c0_i32_1 = arith.constant 0 : i32
    return %arg1, %c0_i32, %c0_i32_0 : i32, i32, i32
  }
  func.func @transform_12(%arg0: i32, %arg1: i32) -> (i32, i32, i32) {
    %c0_i32 = arith.constant 0 : i32
    %c0_i32_0 = arith.constant 0 : i32
    %c0_i32_1 = arith.constant 0 : i32
    return %arg1, %c0_i32, %c0_i32_0 : i32, i32, i32
  }
  func.func @transform_13(%arg0: i32, %arg1: i32) -> (i32, i32, i32) {
    %c0_i32 = arith.constant 0 : i32
    %c0_i32_0 = arith.constant 0 : i32
    %c0_i32_1 = arith.constant 0 : i32
    return %arg1, %c0_i32, %c0_i32_0 : i32, i32, i32
  }
  func.func @transform_14(%arg0: i32, %arg1: i32) -> (i32, i32, i32) {
    %c0_i32 = arith.constant 0 : i32
    %c0_i32_0 = arith.constant 0 : i32
    %c0_i32_1 = arith.constant 0 : i32
    return %arg1, %c0_i32, %c0_i32_0 : i32, i32, i32
  }
  func.func @transform_15(%arg0: i32, %arg1: i32) -> (i32, i32, i32) {
    %c0_i32 = arith.constant 0 : i32
    %c0_i32_0 = arith.constant 0 : i32
    %c0_i32_1 = arith.constant 0 : i32
    return %arg1, %c0_i32, %c0_i32_0 : i32, i32, i32
  }
  func.func @transform_16(%arg0: i32, %arg1: i32) -> (i32, i32, i32, i32) {
    %c0_i32 = arith.constant 0 : i32
    %c0_i32_0 = arith.constant 0 : i32
    %c0_i32_1 = arith.constant 0 : i32
    %c0_i32_2 = arith.constant 0 : i32
    return %arg1, %c0_i32, %c0_i32_0, %c0_i32_1 : i32, i32, i32, i32
  }
  func.func @transform_17(%arg0: i32, %arg1: i32) -> (i32, i32, i32) {
    %c0_i32 = arith.constant 0 : i32
    %c0_i32_0 = arith.constant 0 : i32
    %c0_i32_1 = arith.constant 0 : i32
    return %arg1, %c0_i32, %c0_i32_0 : i32, i32, i32
  }
  func.func @transform_18(%arg0: i32, %arg1: i32) -> (i32, i32) {
    %c0_i32 = arith.constant 0 : i32
    %c0_i32_0 = arith.constant 0 : i32
    %c0_i32_1 = arith.constant 0 : i32
    return %c0_i32, %c0_i32_0 : i32, i32
  }
  func.func @transform_19(%arg0: i32, %arg1: i32) -> (i32, i32) {
    %c0_i32 = arith.constant 0 : i32
    %c0_i32_0 = arith.constant 0 : i32
    %c0_i32_1 = arith.constant 0 : i32
    return %c0_i32, %c0_i32_0 : i32, i32
  }
  func.func @transform_20(%arg0: i32, %arg1: i32) -> (i32, i32) {
    %c0_i32 = arith.constant 0 : i32
    %c0_i32_0 = arith.constant 0 : i32
    %c0_i32_1 = arith.constant 0 : i32
    return %c0_i32, %c0_i32_0 : i32, i32
  }
  func.func @transform_21(%arg0: i32, %arg1: i32) -> (i32, i32) {
    %c0_i32 = arith.constant 0 : i32
    %c0_i32_0 = arith.constant 0 : i32
    %c0_i32_1 = arith.constant 0 : i32
    return %c0_i32, %c0_i32_0 : i32, i32
  }
  func.func @transform_22(%arg0: i32, %arg1: i32) -> (i32, i32, i32) {
    %c0_i32 = arith.constant 0 : i32
    %c0_i32_0 = arith.constant 0 : i32
    %c0_i32_1 = arith.constant 0 : i32
    return %arg0, %c0_i32, %c0_i32_0 : i32, i32, i32
  }
}

</mosaic_0001>

<llo_original>
// kernel: forward.1
$region0: #{forward.1}
  #allocation0 [shape = 'u32[]', space=smem, size = 0x4, offset = 0x4, fixed_abs, tag = 'smem constant byte address 0x4 - core index']
  #allocation1 [shape = 'u32[144,128]{1,0:T(1,128)}', space=vmem, size = 0x12000, scoped, tag = 'internal scratch']
  #allocation2 [shape = 'f32[16,32]{1,0:T(8,128)}', space=vmem, size = 0x2000, scoped, tag = 'scratch operand']
  #allocation3 [shape = 'f32[16,32]{1,0:T(8,128)}', space=vmem, size = 0x2000, scoped, tag = 'scratch operand']
  #allocation4 [shape = 'f32[1,1]{1,0:T(1,128)S(1)}', space=vmem, size = 0x200, scoped, tag = 'scoped memory for forward.1']
  %s0 = inlined_call_operand.vmem [shape: f32[2,16,768], index: 0, kind: input, shape index: {}]
  %s1 = inlined_call_operand.vmem [shape: bf16[768,32], index: 1, kind: input, shape index: {}]
  %s2 = inlined_call_operand.vmem [shape: f32[16,32], index: 2, kind: input, shape index: {}]
  %s3 = inlined_call_operand.vmem [shape: f32[9,16,16], index: 3, kind: input, shape index: {}]
  %s4 = inlined_call_operand.vmem [shape: f32[12,1,32], index: 4, kind: input, shape index: {}]
  %s5 = inlined_call_operand.vmem [shape: f32[12,1,32], index: 5, kind: input, shape index: {}]
  %s6 = inlined_call_operand.vmem [shape: bf16[12,32,96], index: 6, kind: input, shape index: {}]
  %s7 = inlined_call_operand.vmem [shape: f32[12,1,96], index: 7, kind: input, shape index: {}]
  %s8 = inlined_call_operand.vmem [shape: bf16[12,32,32], index: 8, kind: input, shape index: {}]
  %s9 = inlined_call_operand.vmem [shape: f32[12,1,32], index: 9, kind: input, shape index: {}]
  %s10 = inlined_call_operand.vmem [shape: f32[12,1,32], index: 10, kind: input, shape index: {}]
  %s11 = inlined_call_operand.vmem [shape: f32[12,1,32], index: 11, kind: input, shape index: {}]
  %s12 = inlined_call_operand.vmem [shape: bf16[12,32,128], index: 12, kind: input, shape index: {}]
  %s13 = inlined_call_operand.vmem [shape: f32[12,1,128], index: 13, kind: input, shape index: {}]
  %s14 = inlined_call_operand.vmem [shape: bf16[12,128,32], index: 14, kind: input, shape index: {}]
  %s15 = inlined_call_operand.vmem [shape: f32[12,1,32], index: 15, kind: input, shape index: {}]
  %s16 = inlined_call_operand.vmem [shape: f32[12,9,1,32], index: 16, kind: input, shape index: {}]
  %s17 = inlined_call_operand.vmem [shape: f32[12,1,32], index: 17, kind: input, shape index: {}]
  %s18 = inlined_call_operand.vmem [shape: f32[32,16], index: 18, kind: input, shape index: {}]
  %s19 = inlined_call_operand.vmem [shape: f32[1,16], index: 19, kind: input, shape index: {}]
  %s20 = inlined_call_operand.vmem [shape: f32[16,1], index: 20, kind: input, shape index: {}]
  %s21 = inlined_call_operand.<no memory space> [shape: f32[1,1], index: 21, kind: input, shape index: {}]
  %s22 = inlined_call_operand.vmem [shape: f32[2,16,1], index: 22, kind: output, shape index: {}]
  %s23 = sld [smem:[#allocation0]]
  $region133: #{forward.1} parent=0
    _
  %s25 = ssub.s32 1, %s23
  %s26 = scalar_select 0, %s25, %s23
  %v27 = vstv %s21
  %28 = vst [vmem:[#allocation4] sm:$0x1] %v27
  loop: start=0, step=1, limit=26
  $region2: #{forward.1} parent=0 // loop_pre_header
    _
  $region3: #{forward.1} parent=0 // loop_header
    %s30 = sphi 0, %s34
    %p31 = scmp.ge.s32.totalorder %s30, 26
    %s37 = sphi 0, %s49
    %s38 = sphi 0, %s45
    %s39 = sphi 0, %s37
    %s40 = sphi 0, %s38
    %s41 = sphi 0, %s39
    %s42 = sphi 0, %s40
    %s52 = sphi 0, %s54
    %s55 = sphi 0, %s52
    %s56 = sphi 0, %s55
    %s72 = sphi 0, %s56
    %s76 = sphi 0, %s76
    %s78 = sphi 0, %s76
    %s79 = sphi 0, %s78
    %s93 = sphi 0, %s79
    %s97 = sphi 0, %s97
    %s99 = sphi 0, %s97
    %s100 = sphi 0, %s99
    %s114 = sphi 0, %s100
    %s118 = sphi 0, %s118
    %s120 = sphi 0, %s118
    %s121 = sphi 0, %s120
    %s135 = sphi 0, %s121
    %s141 = sphi 0, %s143
    %s144 = sphi 0, %s141
    %s145 = sphi 0, %s144
    %s161 = sphi 0, %s145
    %s167 = sphi 0, %s169
    %s170 = sphi 0, %s167
    %s171 = sphi 0, %s170
    %s187 = sphi 0, %s171
    %s193 = sphi 0, %s195
    %s196 = sphi 0, %s193
    %s197 = sphi 0, %s196
    %s213 = sphi 0, %s197
    %s219 = sphi 0, %s221
    %s222 = sphi 0, %s219
    %s223 = sphi 0, %s222
    %s239 = sphi 0, %s223
    %s245 = sphi 0, %s247
    %s248 = sphi 0, %s245
    %s249 = sphi 0, %s248
    %s265 = sphi 0, %s249
    %s271 = sphi 0, %s273
    %s274 = sphi 0, %s271
    %s275 = sphi 0, %s274
    %s291 = sphi 0, %s275
    %s297 = sphi 0, %s299
    %s300 = sphi 0, %s297
    %s301 = sphi 0, %s300
    %s317 = sphi 0, %s301
    %s323 = sphi 0, %s325
    %s326 = sphi 0, %s323
    %s327 = sphi 0, %s326
    %s343 = sphi 0, %s327
    %s349 = sphi 0, %s351
    %s352 = sphi 0, %s349
    %s353 = sphi 0, %s352
    %s369 = sphi 0, %s353
    %s375 = sphi 0, %s377
    %s378 = sphi 0, %s375
    %s379 = sphi 0, %s378
    %s395 = sphi 0, %s379
    %s401 = sphi 0, %s403
    %s404 = sphi 0, %s401
    %s405 = sphi 0, %s404
    %s421 = sphi 0, %s405
    %s427 = sphi 0, %s429
    %s430 = sphi 0, %s427
    %s431 = sphi 0, %s430
    %s447 = sphi 0, %s431
    %s453 = sphi 0, %s455
    %s456 = sphi 0, %s453
    %s457 = sphi 0, %s456
    %s473 = sphi 0, %s457
    %s479 = sphi 0, %s481
    %s482 = sphi 0, %s479
    %s483 = sphi 0, %s482
    %s499 = sphi 0, %s483
    %s503 = sphi 0, %s503
    %s505 = sphi 0, %s503
    %s506 = sphi 0, %s505
    %s520 = sphi 0, %s506
    %s524 = sphi 0, %s524
    %s526 = sphi 0, %s524
    %s527 = sphi 0, %s526
    %s541 = sphi 0, %s527
    %s545 = sphi 0, %s545
    %s547 = sphi 0, %s545
    %s548 = sphi 0, %s547
    %s562 = sphi 0, %s548
    %s566 = sphi 0, %s566
    %s568 = sphi 0, %s566
    %s569 = sphi 0, %s568
    %s583 = sphi 0, %s569
    %s589 = sphi 0, %s591
    %s592 = sphi 0, %s589
    %s593 = sphi 0, %s592
    %s609 = sphi 0, %s593
  $region4: #{forward.1} parent=0 // loop_header_branch
    %33 = sbr.rel (%p31) target = $region8
  $region5: #{forward.1} parent=0 // loop_body
    %s35 = ssub.s32 %s30, 1
    %s36 = ssub.s32 %s30, 2
    %s43 = sadd.s32 1, %s38
    %p44 = scmp.ge.s32.totalorder %s43, 12
    %s45 = scalar_select %p44, 0, %s43
    %s46 = sadd.s32 1, %s37
    %s47 = scalar_select %p44, %s46, %s37
    %p48 = scmp.ge.s32.totalorder %s47, 2
    %s49 = scalar_select %p48, 0, %s47
    %s50 = ssub.s32 %s37, %s49
    %p51 = scmp.eq.s32.totalorder %s50, 0
    %s53 = sadd.s32 %s52, 1
    %s54 = scalar_select %p51, %s52, %s53
    %p57 = pneg %p51
    %p58 = scmp.eq.s32.totalorder %s30, 23
    %p59 = por %p57, %p58
    %p60 = scmp.ne.s32.totalorder %s52, %s55
    %p61 = scmp.eq.s32.totalorder %s30, 0
    %p62 = por %p60, %p61
    %p63 = scmp.ne.s32.totalorder %s52, %s55
    %p64 = scmp.eq.s32.totalorder %s35, 23
    %p65 = por %p63, %p64
    %p66 = scmp.ne.s32.totalorder %s55, %s56
    %p67 = scmp.eq.s32.totalorder %s35, 0
    %p68 = por %p66, %p67
    %p69 = scmp.ne.s32.totalorder %s55, %s56
    %p70 = scmp.eq.s32.totalorder %s36, 23
    %p71 = por %p69, %p70
    %p73 = scmp.ne.s32.totalorder %s56, %s72
    %p74 = scmp.eq.s32.totalorder %s36, 0
    %p75 = por %p73, %p74
    %s77 = sadd.s32 %s76, 1
    %p80 = scmp.eq.s32.totalorder %s30, 23
    %p81 = scmp.ne.s32.totalorder %s76, %s78
    %p82 = scmp.eq.s32.totalorder %s30, 0
    %p83 = por %p81, %p82
    %p84 = scmp.ne.s32.totalorder %s76, %s78
    %p85 = scmp.eq.s32.totalorder %s35, 23
    %p86 = por %p84, %p85
    %p87 = scmp.ne.s32.totalorder %s78, %s79
    %p88 = scmp.eq.s32.totalorder %s35, 0
    %p89 = por %p87, %p88
    %p90 = scmp.ne.s32.totalorder %s78, %s79
    %p91 = scmp.eq.s32.totalorder %s36, 23
    %p92 = por %p90, %p91
    %p94 = scmp.ne.s32.totalorder %s79, %s93
    %p95 = scmp.eq.s32.totalorder %s36, 0
    %p96 = por %p94, %p95
    %s98 = sadd.s32 %s97, 1
    %p101 = scmp.eq.s32.totalorder %s30, 23
    %p102 = scmp.ne.s32.totalorder %s97, %s99
    %p103 = scmp.eq.s32.totalorder %s30, 0
    %p104 = por %p102, %p103
    %p105 = scmp.ne.s32.totalorder %s97, %s99
    %p106 = scmp.eq.s32.totalorder %s35, 23
    %p107 = por %p105, %p106
    %p108 = scmp.ne.s32.totalorder %s99, %s100
    %p109 = scmp.eq.s32.totalorder %s35, 0
    %p110 = por %p108, %p109
    %p111 = scmp.ne.s32.totalorder %s99, %s100
    %p112 = scmp.eq.s32.totalorder %s36, 23
    %p113 = por %p111, %p112
    %p115 = scmp.ne.s32.totalorder %s100, %s114
    %p116 = scmp.eq.s32.totalorder %s36, 0
    %p117 = por %p115, %p116
    %s119 = sadd.s32 %s118, 1
    %p122 = scmp.eq.s32.totalorder %s30, 23
    %p123 = scmp.ne.s32.totalorder %s118, %s120
    %p124 = scmp.eq.s32.totalorder %s30, 0
    %p125 = por %p123, %p124
    %p126 = scmp.ne.s32.totalorder %s118, %s120
    %p127 = scmp.eq.s32.totalorder %s35, 23
    %p128 = por %p126, %p127
    %p129 = scmp.ne.s32.totalorder %s120, %s121
    %p130 = scmp.eq.s32.totalorder %s35, 0
    %p131 = por %p129, %p130
    %p132 = scmp.ne.s32.totalorder %s120, %s121
    %p133 = scmp.eq.s32.totalorder %s36, 23
    %p134 = por %p132, %p133
    %p136 = scmp.ne.s32.totalorder %s121, %s135
    %p137 = scmp.eq.s32.totalorder %s36, 0
    %p138 = por %p136, %p137
    %s139 = ssub.s32 %s38, %s45
    %p140 = scmp.eq.s32.totalorder %s139, 0
    %s142 = sadd.s32 %s141, 1
    %s143 = scalar_select %p140, %s141, %s142
    %p146 = pneg %p140
    %p147 = scmp.eq.s32.totalorder %s30, 23
    %p148 = por %p146, %p147
    %p149 = scmp.ne.s32.totalorder %s141, %s144
    %p150 = scmp.eq.s32.totalorder %s30, 0
    %p151 = por %p149, %p150
    %p152 = scmp.ne.s32.totalorder %s141, %s144
    %p153 = scmp.eq.s32.totalorder %s35, 23
    %p154 = por %p152, %p153
    %p155 = scmp.ne.s32.totalorder %s144, %s145
    %p156 = scmp.eq.s32.totalorder %s35, 0
    %p157 = por %p155, %p156
    %p158 = scmp.ne.s32.totalorder %s144, %s145
    %p159 = scmp.eq.s32.totalorder %s36, 23
    %p160 = por %p158, %p159
    %p162 = scmp.ne.s32.totalorder %s145, %s161
    %p163 = scmp.eq.s32.totalorder %s36, 0
    %p164 = por %p162, %p163
    %s165 = ssub.s32 %s38, %s45
    %p166 = scmp.eq.s32.totalorder %s165, 0
    %s168 = sadd.s32 %s167, 1
    %s169 = scalar_select %p166, %s167, %s168
    %p172 = pneg %p166
    %p173 = scmp.eq.s32.totalorder %s30, 23
    %p174 = por %p172, %p173
    %p175 = scmp.ne.s32.totalorder %s167, %s170
    %p176 = scmp.eq.s32.totalorder %s30, 0
    %p177 = por %p175, %p176
    %p178 = scmp.ne.s32.totalorder %s167, %s170
    %p179 = scmp.eq.s32.totalorder %s35, 23
    %p180 = por %p178, %p179
    %p181 = scmp.ne.s32.totalorder %s170, %s171
    %p182 = scmp.eq.s32.totalorder %s35, 0
    %p183 = por %p181, %p182
    %p184 = scmp.ne.s32.totalorder %s170, %s171
    %p185 = scmp.eq.s32.totalorder %s36, 23
    %p186 = por %p184, %p185
    %p188 = scmp.ne.s32.totalorder %s171, %s187
    %p189 = scmp.eq.s32.totalorder %s36, 0
    %p190 = por %p188, %p189
    %s191 = ssub.s32 %s38, %s45
    %p192 = scmp.eq.s32.totalorder %s191, 0
    %s194 = sadd.s32 %s193, 1
    %s195 = scalar_select %p192, %s193, %s194
    %p198 = pneg %p192
    %p199 = scmp.eq.s32.totalorder %s30, 23
    %p200 = por %p198, %p199
    %p201 = scmp.ne.s32.totalorder %s193, %s196
    %p202 = scmp.eq.s32.totalorder %s30, 0
    %p203 = por %p201, %p202
    %p204 = scmp.ne.s32.totalorder %s193, %s196
    %p205 = scmp.eq.s32.totalorder %s35, 23
    %p206 = por %p204, %p205
    %p207 = scmp.ne.s32.totalorder %s196, %s197
    %p208 = scmp.eq.s32.totalorder %s35, 0
    %p209 = por %p207, %p208
    %p210 = scmp.ne.s32.totalorder %s196, %s197
    %p211 = scmp.eq.s32.totalorder %s36, 23
    %p212 = por %p210, %p211
    %p214 = scmp.ne.s32.totalorder %s197, %s213
    %p215 = scmp.eq.s32.totalorder %s36, 0
    %p216 = por %p214, %p215
    %s217 = ssub.s32 %s38, %s45
    %p218 = scmp.eq.s32.totalorder %s217, 0
    %s220 = sadd.s32 %s219, 1
    %s221 = scalar_select %p218, %s219, %s220
    %p224 = pneg %p218
    %p225 = scmp.eq.s32.totalorder %s30, 23
    %p226 = por %p224, %p225
    %p227 = scmp.ne.s32.totalorder %s219, %s222
    %p228 = scmp.eq.s32.totalorder %s30, 0
    %p229 = por %p227, %p228
    %p230 = scmp.ne.s32.totalorder %s219, %s222
    %p231 = scmp.eq.s32.totalorder %s35, 23
    %p232 = por %p230, %p231
    %p233 = scmp.ne.s32.totalorder %s222, %s223
    %p234 = scmp.eq.s32.totalorder %s35, 0
    %p235 = por %p233, %p234
    %p236 = scmp.ne.s32.totalorder %s222, %s223
    %p237 = scmp.eq.s32.totalorder %s36, 23
    %p238 = por %p236, %p237
    %p240 = scmp.ne.s32.totalorder %s223, %s239
    %p241 = scmp.eq.s32.totalorder %s36, 0
    %p242 = por %p240, %p241
    %s243 = ssub.s32 %s38, %s45
    %p244 = scmp.eq.s32.totalorder %s243, 0
    %s246 = sadd.s32 %s245, 1
    %s247 = scalar_select %p244, %s245, %s246
    %p250 = pneg %p244
    %p251 = scmp.eq.s32.totalorder %s30, 23
    %p252 = por %p250, %p251
    %p253 = scmp.ne.s32.totalorder %s245, %s248
    %p254 = scmp.eq.s32.totalorder %s30, 0
    %p255 = por %p253, %p254
    %p256 = scmp.ne.s32.totalorder %s245, %s248
    %p257 = scmp.eq.s32.totalorder %s35, 23
    %p258 = por %p256, %p257
    %p259 = scmp.ne.s32.totalorder %s248, %s249
    %p260 = scmp.eq.s32.totalorder %s35, 0
    %p261 = por %p259, %p260
    %p262 = scmp.ne.s32.totalorder %s248, %s249
    %p263 = scmp.eq.s32.totalorder %s36, 23
    %p264 = por %p262, %p263
    %p266 = scmp.ne.s32.totalorder %s249, %s265
    %p267 = scmp.eq.s32.totalorder %s36, 0
    %p268 = por %p266, %p267
    %s269 = ssub.s32 %s38, %s45
    %p270 = scmp.eq.s32.totalorder %s269, 0
    %s272 = sadd.s32 %s271, 1
    %s273 = scalar_select %p270, %s271, %s272
    %p276 = pneg %p270
    %p277 = scmp.eq.s32.totalorder %s30, 23
    %p278 = por %p276, %p277
    %p279 = scmp.ne.s32.totalorder %s271, %s274
    %p280 = scmp.eq.s32.totalorder %s30, 0
    %p281 = por %p279, %p280
    %p282 = scmp.ne.s32.totalorder %s271, %s274
    %p283 = scmp.eq.s32.totalorder %s35, 23
    %p284 = por %p282, %p283
    %p285 = scmp.ne.s32.totalorder %s274, %s275
    %p286 = scmp.eq.s32.totalorder %s35, 0
    %p287 = por %p285, %p286
    %p288 = scmp.ne.s32.totalorder %s274, %s275
    %p289 = scmp.eq.s32.totalorder %s36, 23
    %p290 = por %p288, %p289
    %p292 = scmp.ne.s32.totalorder %s275, %s291
    %p293 = scmp.eq.s32.totalorder %s36, 0
    %p294 = por %p292, %p293
    %s295 = ssub.s32 %s38, %s45
    %p296 = scmp.eq.s32.totalorder %s295, 0
    %s298 = sadd.s32 %s297, 1
    %s299 = scalar_select %p296, %s297, %s298
    %p302 = pneg %p296
    %p303 = scmp.eq.s32.totalorder %s30, 23
    %p304 = por %p302, %p303
    %p305 = scmp.ne.s32.totalorder %s297, %s300
    %p306 = scmp.eq.s32.totalorder %s30, 0
    %p307 = por %p305, %p306
    %p308 = scmp.ne.s32.totalorder %s297, %s300
    %p309 = scmp.eq.s32.totalorder %s35, 23
    %p310 = por %p308, %p309
    %p311 = scmp.ne.s32.totalorder %s300, %s301
    %p312 = scmp.eq.s32.totalorder %s35, 0
    %p313 = por %p311, %p312
    %p314 = scmp.ne.s32.totalorder %s300, %s301
    %p315 = scmp.eq.s32.totalorder %s36, 23
    %p316 = por %p314, %p315
    %p318 = scmp.ne.s32.totalorder %s301, %s317
    %p319 = scmp.eq.s32.totalorder %s36, 0
    %p320 = por %p318, %p319
    %s321 = ssub.s32 %s38, %s45
    %p322 = scmp.eq.s32.totalorder %s321, 0
    %s324 = sadd.s32 %s323, 1
    %s325 = scalar_select %p322, %s323, %s324
    %p328 = pneg %p322
    %p329 = scmp.eq.s32.totalorder %s30, 23
    %p330 = por %p328, %p329
    %p331 = scmp.ne.s32.totalorder %s323, %s326
    %p332 = scmp.eq.s32.totalorder %s30, 0
    %p333 = por %p331, %p332
    %p334 = scmp.ne.s32.totalorder %s323, %s326
    %p335 = scmp.eq.s32.totalorder %s35, 23
    %p336 = por %p334, %p335
    %p337 = scmp.ne.s32.totalorder %s326, %s327
    %p338 = scmp.eq.s32.totalorder %s35, 0
    %p339 = por %p337, %p338
    %p340 = scmp.ne.s32.totalorder %s326, %s327
    %p341 = scmp.eq.s32.totalorder %s36, 23
    %p342 = por %p340, %p341
    %p344 = scmp.ne.s32.totalorder %s327, %s343
    %p345 = scmp.eq.s32.totalorder %s36, 0
    %p346 = por %p344, %p345
    %s347 = ssub.s32 %s38, %s45
    %p348 = scmp.eq.s32.totalorder %s347, 0
    %s350 = sadd.s32 %s349, 1
    %s351 = scalar_select %p348, %s349, %s350
    %p354 = pneg %p348
    %p355 = scmp.eq.s32.totalorder %s30, 23
    %p356 = por %p354, %p355
    %p357 = scmp.ne.s32.totalorder %s349, %s352
    %p358 = scmp.eq.s32.totalorder %s30, 0
    %p359 = por %p357, %p358
    %p360 = scmp.ne.s32.totalorder %s349, %s352
    %p361 = scmp.eq.s32.totalorder %s35, 23
    %p362 = por %p360, %p361
    %p363 = scmp.ne.s32.totalorder %s352, %s353
    %p364 = scmp.eq.s32.totalorder %s35, 0
    %p365 = por %p363, %p364
    %p366 = scmp.ne.s32.totalorder %s352, %s353
    %p367 = scmp.eq.s32.totalorder %s36, 23
    %p368 = por %p366, %p367
    %p370 = scmp.ne.s32.totalorder %s353, %s369
    %p371 = scmp.eq.s32.totalorder %s36, 0
    %p372 = por %p370, %p371
    %s373 = ssub.s32 %s38, %s45
    %p374 = scmp.eq.s32.totalorder %s373, 0
    %s376 = sadd.s32 %s375, 1
    %s377 = scalar_select %p374, %s375, %s376
    %p380 = pneg %p374
    %p381 = scmp.eq.s32.totalorder %s30, 23
    %p382 = por %p380, %p381
    %p383 = scmp.ne.s32.totalorder %s375, %s378
    %p384 = scmp.eq.s32.totalorder %s30, 0
    %p385 = por %p383, %p384
    %p386 = scmp.ne.s32.totalorder %s375, %s378
    %p387 = scmp.eq.s32.totalorder %s35, 23
    %p388 = por %p386, %p387
    %p389 = scmp.ne.s32.totalorder %s378, %s379
    %p390 = scmp.eq.s32.totalorder %s35, 0
    %p391 = por %p389, %p390
    %p392 = scmp.ne.s32.totalorder %s378, %s379
    %p393 = scmp.eq.s32.totalorder %s36, 23
    %p394 = por %p392, %p393
    %p396 = scmp.ne.s32.totalorder %s379, %s395
    %p397 = scmp.eq.s32.totalorder %s36, 0
    %p398 = por %p396, %p397
    %s399 = ssub.s32 %s38, %s45
    %p400 = scmp.eq.s32.totalorder %s399, 0
    %s402 = sadd.s32 %s401, 1
    %s403 = scalar_select %p400, %s401, %s402
    %p406 = pneg %p400
    %p407 = scmp.eq.s32.totalorder %s30, 23
    %p408 = por %p406, %p407
    %p409 = scmp.ne.s32.totalorder %s401, %s404
    %p410 = scmp.eq.s32.totalorder %s30, 0
    %p411 = por %p409, %p410
    %p412 = scmp.ne.s32.totalorder %s401, %s404
    %p413 = scmp.eq.s32.totalorder %s35, 23
    %p414 = por %p412, %p413
    %p415 = scmp.ne.s32.totalorder %s404, %s405
    %p416 = scmp.eq.s32.totalorder %s35, 0
    %p417 = por %p415, %p416
    %p418 = scmp.ne.s32.totalorder %s404, %s405
    %p419 = scmp.eq.s32.totalorder %s36, 23
    %p420 = por %p418, %p419
    %p422 = scmp.ne.s32.totalorder %s405, %s421
    %p423 = scmp.eq.s32.totalorder %s36, 0
    %p424 = por %p422, %p423
    %s425 = ssub.s32 %s38, %s45
    %p426 = scmp.eq.s32.totalorder %s425, 0
    %s428 = sadd.s32 %s427, 1
    %s429 = scalar_select %p426, %s427, %s428
    %p432 = pneg %p426
    %p433 = scmp.eq.s32.totalorder %s30, 23
    %p434 = por %p432, %p433
    %p435 = scmp.ne.s32.totalorder %s427, %s430
    %p436 = scmp.eq.s32.totalorder %s30, 0
    %p437 = por %p435, %p436
    %p438 = scmp.ne.s32.totalorder %s427, %s430
    %p439 = scmp.eq.s32.totalorder %s35, 23
    %p440 = por %p438, %p439
    %p441 = scmp.ne.s32.totalorder %s430, %s431
    %p442 = scmp.eq.s32.totalorder %s35, 0
    %p443 = por %p441, %p442
    %p444 = scmp.ne.s32.totalorder %s430, %s431
    %p445 = scmp.eq.s32.totalorder %s36, 23
    %p446 = por %p444, %p445
    %p448 = scmp.ne.s32.totalorder %s431, %s447
    %p449 = scmp.eq.s32.totalorder %s36, 0
    %p450 = por %p448, %p449
    %s451 = ssub.s32 %s38, %s45
    %p452 = scmp.eq.s32.totalorder %s451, 0
    %s454 = sadd.s32 %s453, 1
    %s455 = scalar_select %p452, %s453, %s454
    %p458 = pneg %p452
    %p459 = scmp.eq.s32.totalorder %s30, 23
    %p460 = por %p458, %p459
    %p461 = scmp.ne.s32.totalorder %s453, %s456
    %p462 = scmp.eq.s32.totalorder %s30, 0
    %p463 = por %p461, %p462
    %p464 = scmp.ne.s32.totalorder %s453, %s456
    %p465 = scmp.eq.s32.totalorder %s35, 23
    %p466 = por %p464, %p465
    %p467 = scmp.ne.s32.totalorder %s456, %s457
    %p468 = scmp.eq.s32.totalorder %s35, 0
    %p469 = por %p467, %p468
    %p470 = scmp.ne.s32.totalorder %s456, %s457
    %p471 = scmp.eq.s32.totalorder %s36, 23
    %p472 = por %p470, %p471
    %p474 = scmp.ne.s32.totalorder %s457, %s473
    %p475 = scmp.eq.s32.totalorder %s36, 0
    %p476 = por %p474, %p475
    %s477 = ssub.s32 %s38, %s45
    %p478 = scmp.eq.s32.totalorder %s477, 0
    %s480 = sadd.s32 %s479, 1
    %s481 = scalar_select %p478, %s479, %s480
    %p484 = pneg %p478
    %p485 = scmp.eq.s32.totalorder %s30, 23
    %p486 = por %p484, %p485
    %p487 = scmp.ne.s32.totalorder %s479, %s482
    %p488 = scmp.eq.s32.totalorder %s30, 0
    %p489 = por %p487, %p488
    %p490 = scmp.ne.s32.totalorder %s479, %s482
    %p491 = scmp.eq.s32.totalorder %s35, 23
    %p492 = por %p490, %p491
    %p493 = scmp.ne.s32.totalorder %s482, %s483
    %p494 = scmp.eq.s32.totalorder %s35, 0
    %p495 = por %p493, %p494
    %p496 = scmp.ne.s32.totalorder %s482, %s483
    %p497 = scmp.eq.s32.totalorder %s36, 23
    %p498 = por %p496, %p497
    %p500 = scmp.ne.s32.totalorder %s483, %s499
    %p501 = scmp.eq.s32.totalorder %s36, 0
    %p502 = por %p500, %p501
    %s504 = sadd.s32 %s503, 1
    %p507 = scmp.eq.s32.totalorder %s30, 23
    %p508 = scmp.ne.s32.totalorder %s503, %s505
    %p509 = scmp.eq.s32.totalorder %s30, 0
    %p510 = por %p508, %p509
    %p511 = scmp.ne.s32.totalorder %s503, %s505
    %p512 = scmp.eq.s32.totalorder %s35, 23
    %p513 = por %p511, %p512
    %p514 = scmp.ne.s32.totalorder %s505, %s506
    %p515 = scmp.eq.s32.totalorder %s35, 0
    %p516 = por %p514, %p515
    %p517 = scmp.ne.s32.totalorder %s505, %s506
    %p518 = scmp.eq.s32.totalorder %s36, 23
    %p519 = por %p517, %p518
    %p521 = scmp.ne.s32.totalorder %s506, %s520
    %p522 = scmp.eq.s32.totalorder %s36, 0
    %p523 = por %p521, %p522
    %s525 = sadd.s32 %s524, 1
    %p528 = scmp.eq.s32.totalorder %s30, 23
    %p529 = scmp.ne.s32.totalorder %s524, %s526
    %p530 = scmp.eq.s32.totalorder %s30, 0
    %p531 = por %p529, %p530
    %p532 = scmp.ne.s32.totalorder %s524, %s526
    %p533 = scmp.eq.s32.totalorder %s35, 23
    %p534 = por %p532, %p533
    %p535 = scmp.ne.s32.totalorder %s526, %s527
    %p536 = scmp.eq.s32.totalorder %s35, 0
    %p537 = por %p535, %p536
    %p538 = scmp.ne.s32.totalorder %s526, %s527
    %p539 = scmp.eq.s32.totalorder %s36, 23
    %p540 = por %p538, %p539
    %p542 = scmp.ne.s32.totalorder %s527, %s541
    %p543 = scmp.eq.s32.totalorder %s36, 0
    %p544 = por %p542, %p543
    %s546 = sadd.s32 %s545, 1
    %p549 = scmp.eq.s32.totalorder %s30, 23
    %p550 = scmp.ne.s32.totalorder %s545, %s547
    %p551 = scmp.eq.s32.totalorder %s30, 0
    %p552 = por %p550, %p551
    %p553 = scmp.ne.s32.totalorder %s545, %s547
    %p554 = scmp.eq.s32.totalorder %s35, 23
    %p555 = por %p553, %p554
    %p556 = scmp.ne.s32.totalorder %s547, %s548
    %p557 = scmp.eq.s32.totalorder %s35, 0
    %p558 = por %p556, %p557
    %p559 = scmp.ne.s32.totalorder %s547, %s548
    %p560 = scmp.eq.s32.totalorder %s36, 23
    %p561 = por %p559, %p560
    %p563 = scmp.ne.s32.totalorder %s548, %s562
    %p564 = scmp.eq.s32.totalorder %s36, 0
    %p565 = por %p563, %p564
    %s567 = sadd.s32 %s566, 1
    %p570 = scmp.eq.s32.totalorder %s30, 23
    %p571 = scmp.ne.s32.totalorder %s566, %s568
    %p572 = scmp.eq.s32.totalorder %s30, 0
    %p573 = por %p571, %p572
    %p574 = scmp.ne.s32.totalorder %s566, %s568
    %p575 = scmp.eq.s32.totalorder %s35, 23
    %p576 = por %p574, %p575
    %p577 = scmp.ne.s32.totalorder %s568, %s569
    %p578 = scmp.eq.s32.totalorder %s35, 0
    %p579 = por %p577, %p578
    %p580 = scmp.ne.s32.totalorder %s568, %s569
    %p581 = scmp.eq.s32.totalorder %s36, 23
    %p582 = por %p580, %p581
    %p584 = scmp.ne.s32.totalorder %s569, %s583
    %p585 = scmp.eq.s32.totalorder %s36, 0
    %p586 = por %p584, %p585
    %s587 = ssub.s32 %s37, %s49
    %p588 = scmp.eq.s32.totalorder %s587, 0
    %s590 = sadd.s32 %s589, 1
    %s591 = scalar_select %p588, %s589, %s590
    %p594 = pneg %p588
    %p595 = scmp.eq.s32.totalorder %s30, 23
    %p596 = por %p594, %p595
    %p597 = scmp.ne.s32.totalorder %s589, %s592
    %p598 = scmp.eq.s32.totalorder %s30, 0
    %p599 = por %p597, %p598
    %p600 = scmp.ne.s32.totalorder %s589, %s592
    %p601 = scmp.eq.s32.totalorder %s35, 23
    %p602 = por %p600, %p601
    %p603 = scmp.ne.s32.totalorder %s592, %s593
    %p604 = scmp.eq.s32.totalorder %s35, 0
    %p605 = por %p603, %p604
    %p606 = scmp.ne.s32.totalorder %s592, %s593
    %p607 = scmp.eq.s32.totalorder %s36, 23
    %p608 = por %p606, %p607
    %p610 = scmp.ne.s32.totalorder %s593, %s609
    %p611 = scmp.eq.s32.totalorder %s36, 0
    %p612 = por %p610, %p611
    %p613 = scmp.le.s32.totalorder 1, %s30
    %p614 = scmp.lt.s32.totalorder %s30, 25
    %p615 = pnand %p613, %p614
    %p616 = pneg %p615
    // Predicated region
    $region9: #{forward.1} parent=5 // pred_check
      _
    $region10: #{forward.1} parent=5 // pred_check_branch
      %618 = sbr.rel (%p615) target = $region12
    $region11: #{forward.1} parent=5 // pred_region
      %s619 = ssub.s32 %s30, 1
      // Predicated region
      $region13: #{forward.1} parent=11 // pred_check
        %p620 = pneg %p89
      $region14: #{forward.1} parent=11 // pred_check_branch
        %622 = sbr.rel (%p620) target = $region16
      $region15: #{forward.1} parent=11 // pred_region
        _
      $region16: #{forward.1} parent=11 // pred_fallthru
        _
      // Predicated region
      $region17: #{forward.1} parent=11 // pred_check
        %p623 = pneg %p110
      $region18: #{forward.1} parent=11 // pred_check_branch
        %625 = sbr.rel (%p623) target = $region20
      $region19: #{forward.1} parent=11 // pred_region
        _
      $region20: #{forward.1} parent=11 // pred_fallthru
        _
      // Predicated region
      $region21: #{forward.1} parent=11 // pred_check
        %p626 = pneg %p131
      $region22: #{forward.1} parent=11 // pred_check_branch
        %628 = sbr.rel (%p626) target = $region24
      $region23: #{forward.1} parent=11 // pred_region
        _
      $region24: #{forward.1} parent=11 // pred_fallthru
        _
      // Predicated region
      $region25: #{forward.1} parent=11 // pred_check
        %p629 = pneg %p516
      $region26: #{forward.1} parent=11 // pred_check_branch
        %631 = sbr.rel (%p629) target = $region28
      $region27: #{forward.1} parent=11 // pred_region
        _
      $region28: #{forward.1} parent=11 // pred_fallthru
        _
      // Predicated region
      $region29: #{forward.1} parent=11 // pred_check
        %p632 = pneg %p537
      $region30: #{forward.1} parent=11 // pred_check_branch
        %634 = sbr.rel (%p632) target = $region32
      $region31: #{forward.1} parent=11 // pred_region
        _
      $region32: #{forward.1} parent=11 // pred_fallthru
        _
      // Predicated region
      $region33: #{forward.1} parent=11 // pred_check
        %p635 = pneg %p558
      $region34: #{forward.1} parent=11 // pred_check_branch
        %637 = sbr.rel (%p635) target = $region36
      $region35: #{forward.1} parent=11 // pred_region
        _
      $region36: #{forward.1} parent=11 // pred_fallthru
        _
      // Predicated region
      $region37: #{forward.1} parent=11 // pred_check
        %p638 = pneg %p579
      $region38: #{forward.1} parent=11 // pred_check_branch
        %640 = sbr.rel (%p638) target = $region40
      $region39: #{forward.1} parent=11 // pred_region
        _
      $region40: #{forward.1} parent=11 // pred_fallthru
        _
    $region12: #{forward.1} parent=5 // pred_fallthru
      _
    %p641 = scmp.lt.s32.totalorder %s30, 24
    // Predicated region
    $region41: #{forward.1} parent=5 // pred_check
      %p642 = pneg %p641
    $region42: #{forward.1} parent=5 // pred_check_branch
      %644 = sbr.rel (%p642) target = $region44
    $region43: #{forward.1} parent=5 // pred_region
      // Predicated region
      $region45: #{forward.1} parent=43 // pred_check
        %p645 = pneg %p62
      $region46: #{forward.1} parent=43 // pred_check_branch
        %647 = sbr.rel (%p645) target = $region48
      $region47: #{forward.1} parent=43 // pred_region
        %p648 = scmp.lt.s32.totalorder %s37, 1
        %s649 = scalar_select %p648, %s37, 1
        %s650 = smul.addr %s649, 12
        %s651 = smul.addr %s650, 8
        %s652 = scalar_lea.vmem %s0, %s651
      $region48: #{forward.1} parent=43 // pred_fallthru
        _
      // Predicated region
      $region49: #{forward.1} parent=43 // pred_check
        %p653 = pneg %p151
      $region50: #{forward.1} parent=43 // pred_check_branch
        %655 = sbr.rel (%p653) target = $region52
      $region51: #{forward.1} parent=43 // pred_region
        %p656 = scmp.lt.s32.totalorder %s38, 11
        %s657 = scalar_select %p656, %s38, 11
        %s658 = scalar_lea.vmem %s4, %s657
      $region52: #{forward.1} parent=43 // pred_fallthru
        _
      // Predicated region
      $region53: #{forward.1} parent=43 // pred_check
        %p659 = pneg %p177
      $region54: #{forward.1} parent=43 // pred_check_branch
        %661 = sbr.rel (%p659) target = $region56
      $region55: #{forward.1} parent=43 // pred_region
        %p662 = scmp.lt.s32.totalorder %s38, 11
        %s663 = scalar_select %p662, %s38, 11
        %s664 = scalar_lea.vmem %s5, %s663
      $region56: #{forward.1} parent=43 // pred_fallthru
        _
      // Predicated region
      $region57: #{forward.1} parent=43 // pred_check
        %p665 = pneg %p203
      $region58: #{forward.1} parent=43 // pred_check_branch
        %667 = sbr.rel (%p665) target = $region60
      $region59: #{forward.1} parent=43 // pred_region
        %p668 = scmp.lt.s32.totalorder %s38, 11
        %s669 = scalar_select %p668, %s38, 11
        %s670 = smul.addr %s669, 4
        %s671 = smul.addr %s670, 4
        %s672 = scalar_lea.vmem %s6, %s671
      $region60: #{forward.1} parent=43 // pred_fallthru
        _
      // Predicated region
      $region61: #{forward.1} parent=43 // pred_check
        %p673 = pneg %p229
      $region62: #{forward.1} parent=43 // pred_check_branch
        %675 = sbr.rel (%p673) target = $region64
      $region63: #{forward.1} parent=43 // pred_region
        %p676 = scmp.lt.s32.totalorder %s38, 11
        %s677 = scalar_select %p676, %s38, 11
        %s678 = scalar_lea.vmem %s7, %s677
      $region64: #{forward.1} parent=43 // pred_fallthru
        _
      // Predicated region
      $region65: #{forward.1} parent=43 // pred_check
        %p679 = pneg %p255
      $region66: #{forward.1} parent=43 // pred_check_branch
        %681 = sbr.rel (%p679) target = $region68
      $region67: #{forward.1} parent=43 // pred_region
        %p682 = scmp.lt.s32.totalorder %s38, 11
        %s683 = scalar_select %p682, %s38, 11
        %s684 = smul.addr %s683, 4
        %s685 = smul.addr %s684, 4
        %s686 = scalar_lea.vmem %s8, %s685
      $region68: #{forward.1} parent=43 // pred_fallthru
        _
      // Predicated region
      $region69: #{forward.1} parent=43 // pred_check
        %p687 = pneg %p281
      $region70: #{forward.1} parent=43 // pred_check_branch
        %689 = sbr.rel (%p687) target = $region72
      $region71: #{forward.1} parent=43 // pred_region
        %p690 = scmp.lt.s32.totalorder %s38, 11
        %s691 = scalar_select %p690, %s38, 11
        %s692 = scalar_lea.vmem %s9, %s691
      $region72: #{forward.1} parent=43 // pred_fallthru
        _
      // Predicated region
      $region73: #{forward.1} parent=43 // pred_check
        %p693 = pneg %p307
      $region74: #{forward.1} parent=43 // pred_check_branch
        %695 = sbr.rel (%p693) target = $region76
      $region75: #{forward.1} parent=43 // pred_region
        %p696 = scmp.lt.s32.totalorder %s38, 11
        %s697 = scalar_select %p696, %s38, 11
        %s698 = scalar_lea.vmem %s10, %s697
      $region76: #{forward.1} parent=43 // pred_fallthru
        _
      // Predicated region
      $region77: #{forward.1} parent=43 // pred_check
        %p699 = pneg %p333
      $region78: #{forward.1} parent=43 // pred_check_branch
        %701 = sbr.rel (%p699) target = $region80
      $region79: #{forward.1} parent=43 // pred_region
        %p702 = scmp.lt.s32.totalorder %s38, 11
        %s703 = scalar_select %p702, %s38, 11
        %s704 = scalar_lea.vmem %s11, %s703
      $region80: #{forward.1} parent=43 // pred_fallthru
        _
      // Predicated region
      $region81: #{forward.1} parent=43 // pred_check
        %p705 = pneg %p359
      $region82: #{forward.1} parent=43 // pred_check_branch
        %707 = sbr.rel (%p705) target = $region84
      $region83: #{forward.1} parent=43 // pred_region
        %p708 = scmp.lt.s32.totalorder %s38, 11
        %s709 = scalar_select %p708, %s38, 11
        %s710 = smul.addr %s709, 4
        %s711 = smul.addr %s710, 4
        %s712 = scalar_lea.vmem %s12, %s711
      $region84: #{forward.1} parent=43 // pred_fallthru
        _
      // Predicated region
      $region85: #{forward.1} parent=43 // pred_check
        %p713 = pneg %p385
      $region86: #{forward.1} parent=43 // pred_check_branch
        %715 = sbr.rel (%p713) target = $region88
      $region87: #{forward.1} parent=43 // pred_region
        %p716 = scmp.lt.s32.totalorder %s38, 11
        %s717 = scalar_select %p716, %s38, 11
        %s718 = scalar_lea.vmem %s13, %s717
      $region88: #{forward.1} parent=43 // pred_fallthru
        _
      // Predicated region
      $region89: #{forward.1} parent=43 // pred_check
        %p719 = pneg %p411
      $region90: #{forward.1} parent=43 // pred_check_branch
        %721 = sbr.rel (%p719) target = $region92
      $region91: #{forward.1} parent=43 // pred_region
        %p722 = scmp.lt.s32.totalorder %s38, 11
        %s723 = scalar_select %p722, %s38, 11
        %s724 = smul.addr %s723, 16
        %s725 = smul.addr %s724, 4
        %s726 = scalar_lea.vmem %s14, %s725
      $region92: #{forward.1} parent=43 // pred_fallthru
        _
      // Predicated region
      $region93: #{forward.1} parent=43 // pred_check
        %p727 = pneg %p437
      $region94: #{forward.1} parent=43 // pred_check_branch
        %729 = sbr.rel (%p727) target = $region96
      $region95: #{forward.1} parent=43 // pred_region
        %p730 = scmp.lt.s32.totalorder %s38, 11
        %s731 = scalar_select %p730, %s38, 11
        %s732 = scalar_lea.vmem %s15, %s731
      $region96: #{forward.1} parent=43 // pred_fallthru
        _
      // Predicated region
      $region97: #{forward.1} parent=43 // pred_check
        %p733 = pneg %p463
      $region98: #{forward.1} parent=43 // pred_check_branch
        %735 = sbr.rel (%p733) target = $region100
      $region99: #{forward.1} parent=43 // pred_region
        %p736 = scmp.lt.s32.totalorder %s38, 11
        %s737 = scalar_select %p736, %s38, 11
        %s738 = smul.addr %s737, 9
        %s739 = scalar_lea.vmem %s16, %s738
      $region100: #{forward.1} parent=43 // pred_fallthru
        _
      // Predicated region
      $region101: #{forward.1} parent=43 // pred_check
        %p740 = pneg %p489
      $region102: #{forward.1} parent=43 // pred_check_branch
        %742 = sbr.rel (%p740) target = $region104
      $region103: #{forward.1} parent=43 // pred_region
        %p743 = scmp.lt.s32.totalorder %s38, 11
        %s744 = scalar_select %p743, %s38, 11
        %s745 = scalar_lea.vmem %s17, %s744
      $region104: #{forward.1} parent=43 // pred_fallthru
        _
    $region44: #{forward.1} parent=5 // pred_fallthru
      _
    %p746 = scmp.le.s32.totalorder 1, %s30
    %p747 = scmp.lt.s32.totalorder %s30, 25
    %p748 = pnand %p746, %p747
    %p749 = pneg %p748
    // Predicated region
    $region105: #{forward.1} parent=5 // pred_check
      _
    $region106: #{forward.1} parent=5 // pred_check_branch
      %751 = sbr.rel (%p748) target = $region108
    $region107: #{forward.1} parent=5 // pred_region
      %s752 = ssub.s32 %s30, 1
      %p753 = scmp.lt.s32.totalorder %s39, 1
      %s754 = scalar_select %p753, %s39, 1
      %s755 = smul.addr %s754, 12
      %s756 = smul.addr %s755, 8
      %s757 = scalar_lea.vmem %s0, %s756
      %p758 = pneg %p68
      %p759 = pneg %p65
      %p760 = pneg %p89
      %p761 = pneg %p86
      %p762 = pneg %p110
      %p763 = pneg %p107
      %p764 = pneg %p131
      %p765 = pneg %p128
      %p766 = scmp.lt.s32.totalorder %s40, 11
      %s767 = scalar_select %p766, %s40, 11
      %s768 = scalar_lea.vmem %s4, %s767
      %p769 = pneg %p157
      %p770 = pneg %p154
      %p771 = scmp.lt.s32.totalorder %s40, 11
      %s772 = scalar_select %p771, %s40, 11
      %s773 = scalar_lea.vmem %s5, %s772
      %p774 = pneg %p183
      %p775 = pneg %p180
      %p776 = scmp.lt.s32.totalorder %s40, 11
      %s777 = scalar_select %p776, %s40, 11
      %s778 = smul.addr %s777, 4
      %s779 = smul.addr %s778, 4
      %s780 = scalar_lea.vmem %s6, %s779
      %p781 = pneg %p209
      %p782 = pneg %p206
      %p783 = scmp.lt.s32.totalorder %s40, 11
      %s784 = scalar_select %p783, %s40, 11
      %s785 = scalar_lea.vmem %s7, %s784
      %p786 = pneg %p235
      %p787 = pneg %p232
      %p788 = scmp.lt.s32.totalorder %s40, 11
      %s789 = scalar_select %p788, %s40, 11
      %s790 = smul.addr %s789, 4
      %s791 = smul.addr %s790, 4
      %s792 = scalar_lea.vmem %s8, %s791
      %p793 = pneg %p261
      %p794 = pneg %p258
      %p795 = scmp.lt.s32.totalorder %s40, 11
      %s796 = scalar_select %p795, %s40, 11
      %s797 = scalar_lea.vmem %s9, %s796
      %p798 = pneg %p287
      %p799 = pneg %p284
      %p800 = scmp.lt.s32.totalorder %s40, 11
      %s801 = scalar_select %p800, %s40, 11
      %s802 = scalar_lea.vmem %s10, %s801
      %p803 = pneg %p313
      %p804 = pneg %p310
      %p805 = scmp.lt.s32.totalorder %s40, 11
      %s806 = scalar_select %p805, %s40, 11
      %s807 = scalar_lea.vmem %s11, %s806
      %p808 = pneg %p339
      %p809 = pneg %p336
      %p810 = scmp.lt.s32.totalorder %s40, 11
      %s811 = scalar_select %p810, %s40, 11
      %s812 = smul.addr %s811, 4
      %s813 = smul.addr %s812, 4
      %s814 = scalar_lea.vmem %s12, %s813
      %p815 = pneg %p365
      %p816 = pneg %p362
      %p817 = scmp.lt.s32.totalorder %s40, 11
      %s818 = scalar_select %p817, %s40, 11
      %s819 = scalar_lea.vmem %s13, %s818
      %p820 = pneg %p391
      %p821 = pneg %p388
      %p822 = scmp.lt.s32.totalorder %s40, 11
      %s823 = scalar_select %p822, %s40, 11
      %s824 = smul.addr %s823, 16
      %s825 = smul.addr %s824, 4
      %s826 = scalar_lea.vmem %s14, %s825
      %p827 = pneg %p417
      %p828 = pneg %p414
      %p829 = scmp.lt.s32.totalorder %s40, 11
      %s830 = scalar_select %p829, %s40, 11
      %s831 = scalar_lea.vmem %s15, %s830
      %p832 = pneg %p443
      %p833 = pneg %p440
      %p834 = scmp.lt.s32.totalorder %s40, 11
      %s835 = scalar_select %p834, %s40, 11
      %s836 = smul.addr %s835, 9
      %s837 = scalar_lea.vmem %s16, %s836
      %p838 = pneg %p469
      %p839 = pneg %p466
      %p840 = scmp.lt.s32.totalorder %s40, 11
      %s841 = scalar_select %p840, %s40, 11
      %s842 = scalar_lea.vmem %s17, %s841
      %p843 = pneg %p495
      %p844 = pneg %p492
      %p845 = pneg %p516
      %p846 = pneg %p513
      %p847 = pneg %p537
      %p848 = pneg %p534
      %p849 = pneg %p558
      %p850 = pneg %p555
      %p851 = pneg %p579
      %p852 = pneg %p576
      %p853 = pneg %p605
      %p854 = pneg %p602
      %p855 = scmp.lt.s32.totalorder %s39, 1
      %s856 = scalar_select %p855, %s39, 1
      %s857 = smul.addr %s856, 2
      %s858 = smul.addr %s857, 8
      %s859 = scalar_lea.vmem %s22, %s858
      %p860 = scmp.lt.s32.totalorder %s39, 1
      %s861 = scalar_select %p860, %s39, 1
      %s862 = smul.addr %s861, 12
      %s863 = smul.addr %s862, 8
      %s864 = scalar_lea.vmem %s0, %s863
      %p865 = scmp.lt.s32.totalorder %s40, 11
      %s866 = scalar_select %p865, %s40, 11
      %s867 = scalar_lea.vmem %s4, %s866
      %p868 = scmp.lt.s32.totalorder %s40, 11
      %s869 = scalar_select %p868, %s40, 11
      %s870 = scalar_lea.vmem %s5, %s869
      %p871 = scmp.lt.s32.totalorder %s40, 11
      %s872 = scalar_select %p871, %s40, 11
      %s873 = smul.addr %s872, 4
      %s874 = smul.addr %s873, 4
      %s875 = scalar_lea.vmem %s6, %s874
      %p876 = scmp.lt.s32.totalorder %s40, 11
      %s877 = scalar_select %p876, %s40, 11
      %s878 = scalar_lea.vmem %s7, %s877
      %p879 = scmp.lt.s32.totalorder %s40, 11
      %s880 = scalar_select %p879, %s40, 11
      %s881 = smul.addr %s880, 4
      %s882 = smul.addr %s881, 4
      %s883 = scalar_lea.vmem %s8, %s882
      %p884 = scmp.lt.s32.totalorder %s40, 11
      %s885 = scalar_select %p884, %s40, 11
      %s886 = scalar_lea.vmem %s9, %s885
      %p887 = scmp.lt.s32.totalorder %s40, 11
      %s888 = scalar_select %p887, %s40, 11
      %s889 = scalar_lea.vmem %s10, %s888
      %p890 = scmp.lt.s32.totalorder %s40, 11
      %s891 = scalar_select %p890, %s40, 11
      %s892 = scalar_lea.vmem %s11, %s891
      %p893 = scmp.lt.s32.totalorder %s40, 11
      %s894 = scalar_select %p893, %s40, 11
      %s895 = smul.addr %s894, 4
      %s896 = smul.addr %s895, 4
      %s897 = scalar_lea.vmem %s12, %s896
      %p898 = scmp.lt.s32.totalorder %s40, 11
      %s899 = scalar_select %p898, %s40, 11
      %s900 = scalar_lea.vmem %s13, %s899
      %p901 = scmp.lt.s32.totalorder %s40, 11
      %s902 = scalar_select %p901, %s40, 11
      %s903 = smul.addr %s902, 16
      %s904 = smul.addr %s903, 4
      %s905 = scalar_lea.vmem %s14, %s904
      %p906 = scmp.lt.s32.totalorder %s40, 11
      %s907 = scalar_select %p906, %s40, 11
      %s908 = scalar_lea.vmem %s15, %s907
      %p909 = scmp.lt.s32.totalorder %s40, 11
      %s910 = scalar_select %p909, %s40, 11
      %s911 = smul.addr %s910, 9
      %s912 = scalar_lea.vmem %s16, %s911
      %p913 = scmp.lt.s32.totalorder %s40, 11
      %s914 = scalar_select %p913, %s40, 11
      %s915 = scalar_lea.vmem %s17, %s914
      %p916 = scmp.lt.s32.totalorder %s39, 1
      %s917 = scalar_select %p916, %s39, 1
      %s918 = smul.addr %s917, 2
      %s919 = smul.addr %s918, 8
      %s920 = scalar_lea.vmem %s22, %s919
      %p922 = scmp.eq.s32.totalorder %s40, 0
      // Predicated region
      $region109: #{forward.1} parent=107 // pred_check
        %p923 = pneg %p922
      $region110: #{forward.1} parent=107 // pred_check_branch
        %925 = sbr.rel (%p923) target = $region112
      $region111: #{forward.1} parent=107 // pred_region
        %v926 = vld [vmem:[%s864] sm:$0xff]
        %v927 = vld [vmem:[%s864 + $0x8] sm:$0xff]
        %v928 = vld [vmem:[%s864 + $0x10] sm:$0xff]
        %v929 = vld [vmem:[%s864 + $0x18] sm:$0xff]
        %v930 = vld [vmem:[%s864 + $0x20] sm:$0xff]
        %v931 = vld [vmem:[%s864 + $0x28] sm:$0xff]
        %v932 = vld [vmem:[%s864 + $0x30] sm:$0xff]
        %v933 = vld [vmem:[%s864 + $0x38] sm:$0xff]
        %v934 = vld [vmem:[%s864 + $0x40] sm:$0xff]
        %v935 = vld [vmem:[%s864 + $0x48] sm:$0xff]
        %v936 = vld [vmem:[%s864 + $0x50] sm:$0xff]
        %v937 = vld [vmem:[%s864 + $0x58] sm:$0xff]
        %v938 = vpack.c.bf16 %v932, %v926
        %v939 = vpack.c.bf16 %v933, %v927
        %v940 = vpack.c.bf16 %v934, %v928
        %v941 = vpack.c.bf16 %v935, %v929
        %v942 = vpack.c.bf16 %v936, %v930
        %v943 = vpack.c.bf16 %v937, %v931
        %v944 = vld [vmem:[%s1] sm:$0xf]
        %v945 = vld [vmem:[%s1 + $0x4] sm:$0xf]
        %v946 = vld [vmem:[%s1 + $0x8] sm:$0xf]
        %v947 = vld [vmem:[%s1 + $0xc] sm:$0xf]
        %v948 = vld [vmem:[%s1 + $0x10] sm:$0xf]
        %v949 = vld [vmem:[%s1 + $0x14] sm:$0xf]
        %v950 = vld [vmem:[%s1 + $0x18] sm:$0xf]
        %v951 = vld [vmem:[%s1 + $0x1c] sm:$0xf]
        %v952 = vld [vmem:[%s1 + $0x20] sm:$0xf]
        %v953 = vld [vmem:[%s1 + $0x24] sm:$0xf]
        %v954 = vld [vmem:[%s1 + $0x28] sm:$0xf]
        %v955 = vld [vmem:[%s1 + $0x2c] sm:$0xf]
        %v956 = vld [vmem:[%s1 + $0x30] sm:$0xf]
        %v957 = vld [vmem:[%s1 + $0x34] sm:$0xf]
        %v958 = vld [vmem:[%s1 + $0x38] sm:$0xf]
        %v959 = vld [vmem:[%s1 + $0x3c] sm:$0xf]
        %v960 = vld [vmem:[%s1 + $0x40] sm:$0xf]
        %v961 = vld [vmem:[%s1 + $0x44] sm:$0xf]
        %v962 = vld [vmem:[%s1 + $0x48] sm:$0xf]
        %v963 = vld [vmem:[%s1 + $0x4c] sm:$0xf]
        %v964 = vld [vmem:[%s1 + $0x50] sm:$0xf]
        %v965 = vld [vmem:[%s1 + $0x54] sm:$0xf]
        %v966 = vld [vmem:[%s1 + $0x58] sm:$0xf]
        %v967 = vld [vmem:[%s1 + $0x5c] sm:$0xf]
        %v968 = vld [vmem:[%s1 + $0x60] sm:$0xf]
        %v969 = vld [vmem:[%s1 + $0x64] sm:$0xf]
        %v970 = vld [vmem:[%s1 + $0x68] sm:$0xf]
        %v971 = vld [vmem:[%s1 + $0x6c] sm:$0xf]
        %v972 = vld [vmem:[%s1 + $0x70] sm:$0xf]
        %v973 = vld [vmem:[%s1 + $0x74] sm:$0xf]
        %v974 = vld [vmem:[%s1 + $0x78] sm:$0xf]
        %v975 = vld [vmem:[%s1 + $0x7c] sm:$0xf]
        %v976 = vld [vmem:[%s1 + $0x80] sm:$0xf]
        %v977 = vld [vmem:[%s1 + $0x84] sm:$0xf]
        %v978 = vld [vmem:[%s1 + $0x88] sm:$0xf]
        %v979 = vld [vmem:[%s1 + $0x8c] sm:$0xf]
        %v980 = vld [vmem:[%s1 + $0x90] sm:$0xf]
        %v981 = vld [vmem:[%s1 + $0x94] sm:$0xf]
        %v982 = vld [vmem:[%s1 + $0x98] sm:$0xf]
        %v983 = vld [vmem:[%s1 + $0x9c] sm:$0xf]
        %v984 = vld [vmem:[%s1 + $0xa0] sm:$0xf]
        %v985 = vld [vmem:[%s1 + $0xa4] sm:$0xf]
        %v986 = vld [vmem:[%s1 + $0xa8] sm:$0xf]
        %v987 = vld [vmem:[%s1 + $0xac] sm:$0xf]
        %v988 = vld [vmem:[%s1 + $0xb0] sm:$0xf]
        %v989 = vld [vmem:[%s1 + $0xb4] sm:$0xf]
        %v990 = vld [vmem:[%s1 + $0xb8] sm:$0xf]
        %v991 = vld [vmem:[%s1 + $0xbc] sm:$0xf]
        %v992 = vld [vmem:[%s1 + $0xc0] sm:$0xf]
        %v993 = vld [vmem:[%s1 + $0xc4] sm:$0xf]
        %v994 = vld [vmem:[%s1 + $0xc8] sm:$0xf]
        %v995 = vld [vmem:[%s1 + $0xcc] sm:$0xf]
        %v996 = vld [vmem:[%s1 + $0xd0] sm:$0xf]
        %v997 = vld [vmem:[%s1 + $0xd4] sm:$0xf]
        %v998 = vld [vmem:[%s1 + $0xd8] sm:$0xf]
        %v999 = vld [vmem:[%s1 + $0xdc] sm:$0xf]
        %v1000 = vld [vmem:[%s1 + $0xe0] sm:$0xf]
        %v1001 = vld [vmem:[%s1 + $0xe4] sm:$0xf]
        %v1002 = vld [vmem:[%s1 + $0xe8] sm:$0xf]
        %v1003 = vld [vmem:[%s1 + $0xec] sm:$0xf]
        %v1004 = vld [vmem:[%s1 + $0xf0] sm:$0xf]
        %v1005 = vld [vmem:[%s1 + $0xf4] sm:$0xf]
        %v1006 = vld [vmem:[%s1 + $0xf8] sm:$0xf]
        %v1007 = vld [vmem:[%s1 + $0xfc] sm:$0xf]
        %v1008 = vld [vmem:[%s1 + $0x100] sm:$0xf]
        %v1009 = vld [vmem:[%s1 + $0x104] sm:$0xf]
        %v1010 = vld [vmem:[%s1 + $0x108] sm:$0xf]
        %v1011 = vld [vmem:[%s1 + $0x10c] sm:$0xf]
        %v1012 = vld [vmem:[%s1 + $0x110] sm:$0xf]
        %v1013 = vld [vmem:[%s1 + $0x114] sm:$0xf]
        %v1014 = vld [vmem:[%s1 + $0x118] sm:$0xf]
        %v1015 = vld [vmem:[%s1 + $0x11c] sm:$0xf]
        %v1016 = vld [vmem:[%s1 + $0x120] sm:$0xf]
        %v1017 = vld [vmem:[%s1 + $0x124] sm:$0xf]
        %v1018 = vld [vmem:[%s1 + $0x128] sm:$0xf]
        %v1019 = vld [vmem:[%s1 + $0x12c] sm:$0xf]
        %v1020 = vld [vmem:[%s1 + $0x130] sm:$0xf]
        %v1021 = vld [vmem:[%s1 + $0x134] sm:$0xf]
        %v1022 = vld [vmem:[%s1 + $0x138] sm:$0xf]
        %v1023 = vld [vmem:[%s1 + $0x13c] sm:$0xf]
        %v1024 = vld [vmem:[%s1 + $0x140] sm:$0xf]
        %v1025 = vld [vmem:[%s1 + $0x144] sm:$0xf]
        %v1026 = vld [vmem:[%s1 + $0x148] sm:$0xf]
        %v1027 = vld [vmem:[%s1 + $0x14c] sm:$0xf]
        %v1028 = vld [vmem:[%s1 + $0x150] sm:$0xf]
        %v1029 = vld [vmem:[%s1 + $0x154] sm:$0xf]
        %v1030 = vld [vmem:[%s1 + $0x158] sm:$0xf]
        %v1031 = vld [vmem:[%s1 + $0x15c] sm:$0xf]
        %v1032 = vld [vmem:[%s1 + $0x160] sm:$0xf]
        %v1033 = vld [vmem:[%s1 + $0x164] sm:$0xf]
        %v1034 = vld [vmem:[%s1 + $0x168] sm:$0xf]
        %v1035 = vld [vmem:[%s1 + $0x16c] sm:$0xf]
        %v1036 = vld [vmem:[%s1 + $0x170] sm:$0xf]
        %v1037 = vld [vmem:[%s1 + $0x174] sm:$0xf]
        %v1038 = vld [vmem:[%s1 + $0x178] sm:$0xf]
        %v1039 = vld [vmem:[%s1 + $0x17c] sm:$0xf]
        %v1040 = vld [vmem:[%s2] sm:$0xff]
        %v1041 = vld [vmem:[%s2 + $0x8] sm:$0xff]
        %v1138 = vunpack.c.l.b16 %v944
        %v1139 = vunpack.c.l.b16 %v945
        %v1140 = vunpack.c.l.b16 %v946
        %v1141 = vunpack.c.l.b16 %v947
        %v1142 = vunpack.c.l.b16 %v948
        %v1143 = vunpack.c.l.b16 %v949
        %v1144 = vunpack.c.l.b16 %v950
        %v1145 = vunpack.c.l.b16 %v951
        %v1146 = vunpack.c.l.b16 %v952
        %v1147 = vunpack.c.l.b16 %v953
        %v1148 = vunpack.c.l.b16 %v954
        %v1149 = vunpack.c.l.b16 %v955
        %v1150 = vunpack.c.l.b16 %v956
        %v1151 = vunpack.c.l.b16 %v957
        %v1152 = vunpack.c.l.b16 %v958
        %v1153 = vunpack.c.l.b16 %v959
        %v1154 = vunpack.c.l.b16 %v960
        %v1155 = vunpack.c.l.b16 %v961
        %v1156 = vunpack.c.l.b16 %v962
        %v1157 = vunpack.c.l.b16 %v963
        %v1158 = vunpack.c.l.b16 %v964
        %v1159 = vunpack.c.l.b16 %v965
        %v1160 = vunpack.c.l.b16 %v966
        %v1161 = vunpack.c.l.b16 %v967
        %v1162 = vunpack.c.l.b16 %v968
        %v1163 = vunpack.c.l.b16 %v969
        %v1164 = vunpack.c.l.b16 %v970
        %v1165 = vunpack.c.l.b16 %v971
        %v1166 = vunpack.c.l.b16 %v972
        %v1167 = vunpack.c.l.b16 %v973
        %v1168 = vunpack.c.l.b16 %v974
        %v1169 = vunpack.c.l.b16 %v975
        %v1170 = vunpack.c.l.b16 %v976
        %v1171 = vunpack.c.l.b16 %v977
        %v1172 = vunpack.c.l.b16 %v978
        %v1173 = vunpack.c.l.b16 %v979
        %v1174 = vunpack.c.l.b16 %v980
        %v1175 = vunpack.c.l.b16 %v981
        %v1176 = vunpack.c.l.b16 %v982
        %v1177 = vunpack.c.l.b16 %v983
        %v1178 = vunpack.c.l.b16 %v984
        %v1179 = vunpack.c.l.b16 %v985
        %v1180 = vunpack.c.l.b16 %v986
        %v1181 = vunpack.c.l.b16 %v987
        %v1182 = vunpack.c.l.b16 %v988
        %v1183 = vunpack.c.l.b16 %v989
        %v1184 = vunpack.c.l.b16 %v990
        %v1185 = vunpack.c.l.b16 %v991
        %v1186 = vunpack.c.l.b16 %v992
        %v1187 = vunpack.c.l.b16 %v993
        %v1188 = vunpack.c.l.b16 %v994
        %v1189 = vunpack.c.l.b16 %v995
        %v1190 = vunpack.c.l.b16 %v996
        %v1191 = vunpack.c.l.b16 %v997
        %v1192 = vunpack.c.l.b16 %v998
        %v1193 = vunpack.c.l.b16 %v999
        %v1194 = vunpack.c.l.b16 %v1000
        %v1195 = vunpack.c.l.b16 %v1001
        %v1196 = vunpack.c.l.b16 %v1002
        %v1197 = vunpack.c.l.b16 %v1003
        %v1198 = vunpack.c.l.b16 %v1004
        %v1199 = vunpack.c.l.b16 %v1005
        %v1200 = vunpack.c.l.b16 %v1006
        %v1201 = vunpack.c.l.b16 %v1007
        %v1202 = vunpack.c.l.b16 %v1008
        %v1203 = vunpack.c.l.b16 %v1009
        %v1204 = vunpack.c.l.b16 %v1010
        %v1205 = vunpack.c.l.b16 %v1011
        %v1206 = vunpack.c.l.b16 %v1012
        %v1207 = vunpack.c.l.b16 %v1013
        %v1208 = vunpack.c.l.b16 %v1014
        %v1209 = vunpack.c.l.b16 %v1015
        %v1210 = vunpack.c.l.b16 %v1016
        %v1211 = vunpack.c.l.b16 %v1017
        %v1212 = vunpack.c.l.b16 %v1018
        %v1213 = vunpack.c.l.b16 %v1019
        %v1214 = vunpack.c.l.b16 %v1020
        %v1215 = vunpack.c.l.b16 %v1021
        %v1216 = vunpack.c.l.b16 %v1022
        %v1217 = vunpack.c.l.b16 %v1023
        %v1218 = vunpack.c.l.b16 %v1024
        %v1219 = vunpack.c.l.b16 %v1025
        %v1220 = vunpack.c.l.b16 %v1026
        %v1221 = vunpack.c.l.b16 %v1027
        %v1222 = vunpack.c.l.b16 %v1028
        %v1223 = vunpack.c.l.b16 %v1029
        %v1224 = vunpack.c.l.b16 %v1030
        %v1225 = vunpack.c.l.b16 %v1031
        %v1226 = vunpack.c.l.b16 %v1032
        %v1227 = vunpack.c.l.b16 %v1033
        %v1228 = vunpack.c.l.b16 %v1034
        %v1229 = vunpack.c.l.b16 %v1035
        %v1230 = vunpack.c.l.b16 %v1036
        %v1231 = vunpack.c.l.b16 %v1037
        %v1232 = vunpack.c.l.b16 %v1038
        %v1233 = vunpack.c.l.b16 %v1039
        %v1234 = vpack.c.b16 %v1139, %v1138
        %v1235 = vpack.c.b16 %v1141, %v1140
        %v1236 = vpack.c.b16 %v1143, %v1142
        %v1237 = vpack.c.b16 %v1145, %v1144
        %v1238 = vpack.c.b16 %v1147, %v1146
        %v1239 = vpack.c.b16 %v1149, %v1148
        %v1240 = vpack.c.b16 %v1151, %v1150
        %v1241 = vpack.c.b16 %v1153, %v1152
        %v1242 = vpack.c.b16 %v1155, %v1154
        %v1243 = vpack.c.b16 %v1157, %v1156
        %v1244 = vpack.c.b16 %v1159, %v1158
        %v1245 = vpack.c.b16 %v1161, %v1160
        %v1246 = vpack.c.b16 %v1163, %v1162
        %v1247 = vpack.c.b16 %v1165, %v1164
        %v1248 = vpack.c.b16 %v1167, %v1166
        %v1249 = vpack.c.b16 %v1169, %v1168
        %v1250 = vpack.c.b16 %v1171, %v1170
        %v1251 = vpack.c.b16 %v1173, %v1172
        %v1252 = vpack.c.b16 %v1175, %v1174
        %v1253 = vpack.c.b16 %v1177, %v1176
        %v1254 = vpack.c.b16 %v1179, %v1178
        %v1255 = vpack.c.b16 %v1181, %v1180
        %v1256 = vpack.c.b16 %v1183, %v1182
        %v1257 = vpack.c.b16 %v1185, %v1184
        %v1258 = vpack.c.b16 %v1187, %v1186
        %v1259 = vpack.c.b16 %v1189, %v1188
        %v1260 = vpack.c.b16 %v1191, %v1190
        %v1261 = vpack.c.b16 %v1193, %v1192
        %v1262 = vpack.c.b16 %v1195, %v1194
        %v1263 = vpack.c.b16 %v1197, %v1196
        %v1264 = vpack.c.b16 %v1199, %v1198
        %v1265 = vpack.c.b16 %v1201, %v1200
        %v1266 = vpack.c.b16 %v1203, %v1202
        %v1267 = vpack.c.b16 %v1205, %v1204
        %v1268 = vpack.c.b16 %v1207, %v1206
        %v1269 = vpack.c.b16 %v1209, %v1208
        %v1270 = vpack.c.b16 %v1211, %v1210
        %v1271 = vpack.c.b16 %v1213, %v1212
        %v1272 = vpack.c.b16 %v1215, %v1214
        %v1273 = vpack.c.b16 %v1217, %v1216
        %v1274 = vpack.c.b16 %v1219, %v1218
        %v1275 = vpack.c.b16 %v1221, %v1220
        %v1276 = vpack.c.b16 %v1223, %v1222
        %v1277 = vpack.c.b16 %v1225, %v1224
        %v1278 = vpack.c.b16 %v1227, %v1226
        %v1279 = vpack.c.b16 %v1229, %v1228
        %v1280 = vpack.c.b16 %v1231, %v1230
        %v1281 = vpack.c.b16 %v1233, %v1232
        %1330 = vmatprep.subr.bf16.mxu0 0
        %1331 = vmatpush1.bf16.msra.mxu0 %v1234
        %1332 = vmatprep.subr.bf16.mxu0 0
        %1333 = vmatpush1.bf16.msra.mxu0 %v1235
        %1334 = vmatprep.subr.bf16.mxu0 0
        %1335 = vmatpush1.bf16.msra.mxu0 %v1236
        %1336 = vmatprep.subr.bf16.mxu0 0
        %1337 = vmatpush1.bf16.msra.mxu0 %v1237
        %1338 = vmatprep.subr.bf16.mxu0 0
        %1339 = vmatpush1.bf16.msra.mxu0 %v1238
        %1340 = vmatprep.subr.bf16.mxu0 0
        %1341 = vmatpush1.bf16.msra.mxu0 %v1239
        %1342 = vmatprep.subr.bf16.mxu0 0
        %1343 = vmatpush1.bf16.msra.mxu0 %v1240
        %1344 = vmatprep.subr.bf16.mxu0 0
        %1345 = vmatpush1.bf16.msra.mxu0 %v1241
        %1346 = vmatprep.subr.bf16.mxu0 0
        %1347 = vmatpush1.bf16.msra.mxu0 %v1242
        %1348 = vmatprep.subr.bf16.mxu0 0
        %1349 = vmatpush1.bf16.msra.mxu0 %v1243
        %1350 = vmatprep.subr.bf16.mxu0 0
        %1351 = vmatpush1.bf16.msra.mxu0 %v1244
        %1352 = vmatprep.subr.bf16.mxu0 0
        %1353 = vmatpush1.bf16.msra.mxu0 %v1245
        %1354 = vmatprep.subr.bf16.mxu0 0
        %1355 = vmatpush1.bf16.msra.mxu0 %v1246
        %1356 = vmatprep.subr.bf16.mxu0 0
        %1357 = vmatpush1.bf16.msra.mxu0 %v1247
        %1358 = vmatprep.subr.bf16.mxu0 0
        %1359 = vmatpush1.bf16.msra.mxu0 %v1248
        %1360 = vmatprep.subr.bf16.mxu0 0
        %1361 = vmatpush1.bf16.msra.mxu0 %v1249
        %1362 = vmatprep.mubr.bf16.mxu0 %v939
        %1363 = vmatmul.mubr.bf16.gmra.mrb[0].mxu0 %v938
        %v1364 = vpop.f32.mrb[0].mxu0
        %v1365 = vadd.f32 %v1040, %v1364
        %v1366 = vpop.f32.mrb[0].mxu0
        %v1367 = vpop.f32.mrb[0].mxu0
        %v1368 = vadd.f32 %v1041, %v1367
        %v1369 = vpop.f32.mrb[0].mxu0
        %1370 = vdwg.mxu0
        %1371 = vmatprep.subr.bf16.mxu0 0
        %1372 = vmatpush1.bf16.msra.mxu0 %v1250
        %1373 = vmatprep.subr.bf16.mxu0 0
        %1374 = vmatpush1.bf16.msra.mxu0 %v1251
        %1375 = vmatprep.subr.bf16.mxu0 0
        %1376 = vmatpush1.bf16.msra.mxu0 %v1252
        %1377 = vmatprep.subr.bf16.mxu0 0
        %1378 = vmatpush1.bf16.msra.mxu0 %v1253
        %1379 = vmatprep.subr.bf16.mxu0 0
        %1380 = vmatpush1.bf16.msra.mxu0 %v1254
        %1381 = vmatprep.subr.bf16.mxu0 0
        %1382 = vmatpush1.bf16.msra.mxu0 %v1255
        %1383 = vmatprep.subr.bf16.mxu0 0
        %1384 = vmatpush1.bf16.msra.mxu0 %v1256
        %1385 = vmatprep.subr.bf16.mxu0 0
        %1386 = vmatpush1.bf16.msra.mxu0 %v1257
        %1387 = vmatprep.subr.bf16.mxu0 0
        %1388 = vmatpush1.bf16.msra.mxu0 %v1258
        %1389 = vmatprep.subr.bf16.mxu0 0
        %1390 = vmatpush1.bf16.msra.mxu0 %v1259
        %1391 = vmatprep.subr.bf16.mxu0 0
        %1392 = vmatpush1.bf16.msra.mxu0 %v1260
        %1393 = vmatprep.subr.bf16.mxu0 0
        %1394 = vmatpush1.bf16.msra.mxu0 %v1261
        %1395 = vmatprep.subr.bf16.mxu0 0
        %1396 = vmatpush1.bf16.msra.mxu0 %v1262
        %1397 = vmatprep.subr.bf16.mxu0 0
        %1398 = vmatpush1.bf16.msra.mxu0 %v1263
        %1399 = vmatprep.subr.bf16.mxu0 0
        %1400 = vmatpush1.bf16.msra.mxu0 %v1264
        %1401 = vmatprep.subr.bf16.mxu0 0
        %1402 = vmatpush1.bf16.msra.mxu0 %v1265
        %1403 = vmatprep.mubr.bf16.mxu0 %v941
        %1404 = vmatmul.mubr.bf16.gmra.mrb[0].mxu0 %v940
        %v1405 = vpop.f32.mrb[0].mxu0
        %v1406 = vadd.f32 %v1365, %v1405
        %v1407 = vpop.f32.mrb[0].mxu0
        %v1408 = vpop.f32.mrb[0].mxu0
        %v1409 = vadd.f32 %v1368, %v1408
        %v1410 = vpop.f32.mrb[0].mxu0
        %1411 = vdwg.mxu0
        %1412 = vmatprep.subr.bf16.mxu0 0
        %1413 = vmatpush1.bf16.msra.mxu0 %v1266
        %1414 = vmatprep.subr.bf16.mxu0 0
        %1415 = vmatpush1.bf16.msra.mxu0 %v1267
        %1416 = vmatprep.subr.bf16.mxu0 0
        %1417 = vmatpush1.bf16.msra.mxu0 %v1268
        %1418 = vmatprep.subr.bf16.mxu0 0
        %1419 = vmatpush1.bf16.msra.mxu0 %v1269
        %1420 = vmatprep.subr.bf16.mxu0 0
        %1421 = vmatpush1.bf16.msra.mxu0 %v1270
        %1422 = vmatprep.subr.bf16.mxu0 0
        %1423 = vmatpush1.bf16.msra.mxu0 %v1271
        %1424 = vmatprep.subr.bf16.mxu0 0
        %1425 = vmatpush1.bf16.msra.mxu0 %v1272
        %1426 = vmatprep.subr.bf16.mxu0 0
        %1427 = vmatpush1.bf16.msra.mxu0 %v1273
        %1428 = vmatprep.subr.bf16.mxu0 0
        %1429 = vmatpush1.bf16.msra.mxu0 %v1274
        %1430 = vmatprep.subr.bf16.mxu0 0
        %1431 = vmatpush1.bf16.msra.mxu0 %v1275
        %1432 = vmatprep.subr.bf16.mxu0 0
        %1433 = vmatpush1.bf16.msra.mxu0 %v1276
        %1434 = vmatprep.subr.bf16.mxu0 0
        %1435 = vmatpush1.bf16.msra.mxu0 %v1277
        %1436 = vmatprep.subr.bf16.mxu0 0
        %1437 = vmatpush1.bf16.msra.mxu0 %v1278
        %1438 = vmatprep.subr.bf16.mxu0 0
        %1439 = vmatpush1.bf16.msra.mxu0 %v1279
        %1440 = vmatprep.subr.bf16.mxu0 0
        %1441 = vmatpush1.bf16.msra.mxu0 %v1280
        %1442 = vmatprep.subr.bf16.mxu0 0
        %1443 = vmatpush1.bf16.msra.mxu0 %v1281
        %1444 = vmatprep.mubr.bf16.mxu0 %v943
        %1445 = vmatmul.mubr.bf16.gmra.mrb[0].mxu0 %v942
        %v1446 = vpop.f32.mrb[0].mxu0
        %v1447 = vadd.f32 %v1406, %v1446
        %v1448 = vpop.f32.mrb[0].mxu0
        %v1449 = vpop.f32.mrb[0].mxu0
        %v1450 = vadd.f32 %v1409, %v1449
        %v1451 = vpop.f32.mrb[0].mxu0
        %1452 = vdwg.mxu0
        %vm1453 = vcmask 261120
        %1454 = vst.msk [vmem:[#allocation2] sm:$0xff] %vm1453, %v1447
        %1455 = vst.msk [vmem:[#allocation2 + $0x8] sm:$0xff] %vm1453, %v1450
        %1456 = vst.msk [vmem:[#allocation3] sm:$0xff] %vm1453, 0.0
        %1457 = vst.msk [vmem:[#allocation3 + $0x8] sm:$0xff] %vm1453, 0.0
      $region112: #{forward.1} parent=107 // pred_fallthru
        _
      %v1458 = vld [vmem:[#allocation2] sm:$0xff]
      %v1459 = vld [vmem:[#allocation2 + $0x8] sm:$0xff]
      %v1460 = vld [vmem:[%s867] sm:$0x1]
      %v1461 = vld [vmem:[%s870] sm:$0x1]
      %vm1462 = vcmask 261120
      %v1463 = vsel %vm1462, %v1458, 0.0
      %1464 = vadd.xlane.f32.xlu0 %v1463
      %v1465 = vpop.xlane.xlu0 %1464
      %v1466 = vsel %vm1462, %v1459, 0.0
      %1467 = vadd.xlane.f32.xlu0 %v1466
      %v1468 = vpop.xlane.xlu0 %1467
      %v1469 = vrcp.pop 32.0
      %v1470 = vmul.f32 %v1465, %v1469
      %v1471 = vmul.f32 %v1468, %v1469
      %v1472 = vsub.f32 %v1458, %v1470
      %v1473 = vsub.f32 %v1459, %v1471
      %v1474 = vmul.f32 %v1472, %v1472
      %v1475 = vmul.f32 %v1473, %v1473
      %v1476 = vsel %vm1462, %v1474, 0.0
      %1477 = vadd.xlane.f32.xlu0 %v1476
      %v1478 = vpop.xlane.xlu0 %1477
      %v1479 = vsel %vm1462, %v1475, 0.0
      %1480 = vadd.xlane.f32.xlu0 %v1479
      %v1481 = vpop.xlane.xlu0 %1480
      %v1482 = vmul.f32 %v1478, %v1469
      %v1483 = vmul.f32 %v1481, %v1469
      %v1484 = vadd.f32 %v1482, 1e-06
      %v1485 = vadd.f32 %v1483, 1e-06
      %v1486 = vrsqrt.pop %v1484
      %v1487 = vrsqrt.pop %v1485
      %v1488 = vmul.f32 %v1472, %v1486
      %v1489 = vmul.f32 %v1473, %v1487
      %v1491 = vlaneseq
      %v1492 = vshrl.u32 %v1491, 7
      %v1493 = vsub.s32 0, %v1492
      %v1494 = vrot.slane %v1460, %v1493
      %v1496 = vmul.f32 %v1488, %v1494
      %v1497 = vmul.f32 %v1489, %v1494
      %v1499 = vlaneseq
      %v1500 = vshrl.u32 %v1499, 7
      %v1501 = vsub.s32 0, %v1500
      %v1502 = vrot.slane %v1461, %v1501
      %v1504 = vadd.f32 %v1496, %v1502
      %v1505 = vadd.f32 %v1497, %v1502
      %v1506 = vpack.c.bf16 %v1505, %v1504
      %v1507 = vld [vmem:[%s875] sm:$0xf]
      %v1508 = vld [vmem:[%s875 + $0x4] sm:$0xf]
      %v1509 = vld [vmem:[%s875 + $0x8] sm:$0xf]
      %v1510 = vld [vmem:[%s875 + $0xc] sm:$0xf]
      %v1511 = vld [vmem:[%s878] sm:$0x1]
      %v1513 = vlaneseq
      %v1514 = vshrl.u32 %v1513, 7
      %v1515 = vsub.s32 0, %v1514
      %v1516 = vrot.slane %v1511, %v1515
      %v1522 = vunpack.c.l.b16 %v1507
      %v1523 = vunpack.c.l.b16 %v1508
      %v1524 = vunpack.c.l.b16 %v1509
      %v1525 = vunpack.c.l.b16 %v1510
      %v1526 = vpack.c.b16 %v1523, %v1522
      %v1527 = vpack.c.b16 %v1525, %v1524
      %v1531 = vsel %vm1462, %v1506, 0
      %1533 = vmatprep.subr.bf16.mxu0 0
      %1534 = vmatpush1.bf16.msra.mxu0 %v1526
      %1535 = vmatprep.subr.bf16.mxu0 0
      %1536 = vmatpush1.bf16.msra.mxu0 %v1527
      %1537 = vmatprep.subr.bf16.mxu0 0
      %1538 = vmatpush1.bf16.msra.mxu0 0
      %1539 = vmatprep.subr.bf16.mxu0 0
      %1540 = vmatpush1.bf16.msra.mxu0 0
      %1541 = vmatprep.subr.bf16.mxu0 0
      %1542 = vmatpush1.bf16.msra.mxu0 0
      %1543 = vmatprep.subr.bf16.mxu0 0
      %1544 = vmatpush1.bf16.msra.mxu0 0
      %1545 = vmatprep.subr.bf16.mxu0 0
      %1546 = vmatpush1.bf16.msra.mxu0 0
      %1547 = vmatprep.subr.bf16.mxu0 0
      %1548 = vmatpush1.bf16.msra.mxu0 0
      %1549 = vmatprep.subr.bf16.mxu0 0
      %1550 = vmatpush1.bf16.msra.mxu0 0
      %1551 = vmatprep.subr.bf16.mxu0 0
      %1552 = vmatpush1.bf16.msra.mxu0 0
      %1553 = vmatprep.subr.bf16.mxu0 0
      %1554 = vmatpush1.bf16.msra.mxu0 0
      %1555 = vmatprep.subr.bf16.mxu0 0
      %1556 = vmatpush1.bf16.msra.mxu0 0
      %1557 = vmatprep.subr.bf16.mxu0 0
      %1558 = vmatpush1.bf16.msra.mxu0 0
      %1559 = vmatprep.subr.bf16.mxu0 0
      %1560 = vmatpush1.bf16.msra.mxu0 0
      %1561 = vmatprep.subr.bf16.mxu0 0
      %1562 = vmatpush1.bf16.msra.mxu0 0
      %1563 = vmatprep.subr.bf16.mxu0 0
      %1564 = vmatpush1.bf16.msra.mxu0 0
      %1565 = vmatprep.mubr.bf16.mxu0 0
      %1566 = vmatmul.mubr.bf16.gmra.mrb[0].mxu0 %v1531
      %v1567 = vpop.f32.mrb[0].mxu0
      %v1568 = vadd.f32 %v1516, %v1567
      %v1569 = vpop.f32.mrb[0].mxu0
      %v1570 = vpop.f32.mrb[0].mxu0
      %v1571 = vadd.f32 %v1516, %v1570
      %v1572 = vpop.f32.mrb[0].mxu0
      %1573 = vdwg.mxu0
      %v1574 = vld [vmem:[%s883] sm:$0xf]
      %v1575 = vld [vmem:[%s883 + $0x4] sm:$0xf]
      %v1576 = vld [vmem:[%s883 + $0x8] sm:$0xf]
      %v1577 = vld [vmem:[%s883 + $0xc] sm:$0xf]
      %1580 = vrot.lane.b32.xlu0 %v1568, 96
      %v1581 = vpop.permute.xlu0 %1580
      %1582 = vrot.lane.b32.xlu0 %v1571, 96
      %v1583 = vpop.permute.xlu0 %1582
      %vm1584 = vcmask 130048
      %v1585 = vsel %vm1584, %v1568, 0
      %v1587 = vsel %vm1584, %v1571, 0
      %v1589 = vsel %vm1584, %v1581, 0
      %v1591 = vsel %vm1584, %v1583, 0
      %1593 = vmatprep.subr.mxu0 0.0
      %1594 = vmatpush1.xpose.msra.mxu0 %v1589
      %1595 = vmatprep.subr.mxu0 0.0
      %1596 = vmatpush1.xpose.msra.mxu0 %v1591
      %1597 = vmatprep.subr.mxu0 0.0
      %1598 = vmatpush1.xpose.msra.mxu0 0.0
      %1599 = vmatprep.subr.mxu0 0.0
      %1600 = vmatpush1.xpose.msra.mxu0 0.0
      %1601 = vmatprep.subr.mxu0 0.0
      %1602 = vmatpush1.xpose.msra.mxu0 0.0
      %1603 = vmatprep.subr.mxu0 0.0
      %1604 = vmatpush1.xpose.msra.mxu0 0.0
      %1605 = vmatprep.subr.mxu0 0.0
      %1606 = vmatpush1.xpose.msra.mxu0 0.0
      %1607 = vmatprep.subr.mxu0 0.0
      %1608 = vmatpush1.xpose.msra.mxu0 0.0
      %1609 = vmatprep.subr.mxu0 0.0
      %1610 = vmatpush1.xpose.msra.mxu0 0.0
      %1611 = vmatprep.subr.mxu0 0.0
      %1612 = vmatpush1.xpose.msra.mxu0 0.0
      %1613 = vmatprep.subr.mxu0 0.0
      %1614 = vmatpush1.xpose.msra.mxu0 0.0
      %1615 = vmatprep.subr.mxu0 0.0
      %1616 = vmatpush1.xpose.msra.mxu0 0.0
      %1617 = vmatprep.subr.mxu0 0.0
      %1618 = vmatpush1.xpose.msra.mxu0 0.0
      %1619 = vmatprep.subr.mxu0 0.0
      %1620 = vmatpush1.xpose.msra.mxu0 0.0
      %1621 = vmatprep.subr.mxu0 0.0
      %1622 = vmatpush1.xpose.msra.mxu0 0.0
      %1623 = vmatprep.subr.mxu0 0.0
      %1624 = vmatpush1.xpose.msra.mxu0 0.0
      %1625 = vmatprep.subr.mxu0 0.0
      %1626 = vmatpush1.xpose.msra.mxu0 0.0
      %1627 = vmatprep.subr.mxu0 0.0
      %1628 = vmatpush1.xpose.msra.mxu0 0.0
      %1629 = vmatprep.subr.mxu0 0.0
      %1630 = vmatpush1.xpose.msra.mxu0 0.0
      %1631 = vmatprep.subr.mxu0 0.0
      %1632 = vmatpush1.xpose.msra.mxu0 0.0
      %1633 = vmatprep.subr.mxu0 0.0
      %1634 = vmatpush1.xpose.msra.mxu0 0.0
      %1635 = vmatprep.subr.mxu0 0.0
      %1636 = vmatpush1.xpose.msra.mxu0 0.0
      %1637 = vmatprep.subr.mxu0 0.0
      %1638 = vmatpush1.xpose.msra.mxu0 0.0
      %1639 = vmatprep.subr.mxu0 0.0
      %1640 = vmatpush1.xpose.msra.mxu0 0.0
      %1641 = vmatprep.subr.mxu0 0.0
      %1642 = vmatpush1.xpose.msra.mxu0 0.0
      %1643 = vmatprep.subr.mxu0 0.0
      %1644 = vmatpush1.xpose.msra.mxu0 0.0
      %1645 = vmatprep.subr.mxu0 0.0
      %1646 = vmatpush1.xpose.msra.mxu0 0.0
      %1647 = vmatprep.subr.mxu0 0.0
      %1648 = vmatpush1.xpose.msra.mxu0 0.0
      %1649 = vmatprep.subr.mxu0 0.0
      %1650 = vmatpush1.xpose.msra.mxu0 0.0
      %1651 = vmatprep.subr.mxu0 0.0
      %1652 = vmatpush1.xpose.msra.mxu0 0.0
      %1653 = vmatprep.subr.mxu0 0.0
      %1654 = vmatpush1.xpose.msra.mxu0 0.0
      %1655 = vmatprep.subr.mxu0 0.0
      %1656 = vmatpush1.xpose.msra.mxu0 0.0
      %1657 = vmatprep.mubr.f32.mxu0 0.0
      %1658 = vmatmul.mubr.f32.gmra.mrb[0].mxu0 %v1585
      %v1659 = vpop.f32.mrb[0].mxu0
      %v1660 = vadd.f32 0.0, %v1659
      %v1661 = vpop.f32.mrb[0].mxu0
      %1662 = vmatprep.mubr.f32.mxu0 0.0
      %1663 = vmatmul.mubr.f32.gmra.mrb[0].mxu0 %v1587
      %v1664 = vpop.f32.mrb[0].mxu0
      %v1665 = vadd.f32 0.0, %v1664
      %v1666 = vpop.f32.mrb[0].mxu0
      %1667 = vdwg.mxu0
      %v1668 = vmul.f32 %v1660, 0.25
      %v1669 = vmul.f32 %v1665, 0.25
      %v1670 = vsel %vm1584, %v1668, -inf
      %1671 = vmax.xlane.f32.xlu0 %v1670
      %v1672 = vpop.xlane.xlu0 %1671
      %v1673 = vsel %vm1584, %v1669, -inf
      %1674 = vmax.xlane.f32.xlu0 %v1673
      %v1675 = vpop.xlane.xlu0 %1674
      %v1676 = vsub.f32 %v1668, %v1672
      %v1677 = vsub.f32 %v1669, %v1675
      %v1678 = vmul.f32 %v1676, 1.442695
      %v1679 = vpow.pop %v1678
      %v1680 = vmul.f32 %v1677, 1.442695
      %v1681 = vpow.pop %v1680
      %v1682 = vsel %vm1584, %v1679, 0.0
      %1683 = vadd.xlane.f32.xlu0 %v1682
      %v1684 = vpop.xlane.xlu0 %1683
      %v1685 = vsel %vm1584, %v1681, 0.0
      %1686 = vadd.xlane.f32.xlu0 %v1685
      %v1687 = vpop.xlane.xlu0 %1686
      %v1688 = vrcp.pop %v1684
      %v1689 = vrcp.pop %v1687
      %v1690 = vmul.f32 %v1679, %v1688
      %v1691 = vmul.f32 %v1681, %v1689
      %1692 = vrot.lane.b32.xlu0 %v1568, 64
      %v1693 = vpop.permute.xlu0 %1692
      %1694 = vrot.lane.b32.xlu0 %v1571, 64
      %v1695 = vpop.permute.xlu0 %1694
      %v1699 = vsel %vm1584, %v1690, 0
      %v1702 = vsel %vm1584, %v1691, 0
      %1704 = vmatprep.subr.mxu0 0.0
      %1705 = vmatpush1.msra.mxu0 %v1693
      %1706 = vmatprep.subr.mxu0 0.0
      %1707 = vmatpush1.msra.mxu0 %v1695
      %1708 = vmatprep.subr.mxu0 0.0
      %1709 = vmatpush1.msra.mxu0 0.0
      %1710 = vmatprep.subr.mxu0 0.0
      %1711 = vmatpush1.msra.mxu0 0.0
      %1712 = vmatprep.subr.mxu0 0.0
      %1713 = vmatpush1.msra.mxu0 0.0
      %1714 = vmatprep.subr.mxu0 0.0
      %1715 = vmatpush1.msra.mxu0 0.0
      %1716 = vmatprep.subr.mxu0 0.0
      %1717 = vmatpush1.msra.mxu0 0.0
      %1718 = vmatprep.subr.mxu0 0.0
      %1719 = vmatpush1.msra.mxu0 0.0
      %1720 = vmatprep.subr.mxu0 0.0
      %1721 = vmatpush1.msra.mxu0 0.0
      %1722 = vmatprep.subr.mxu0 0.0
      %1723 = vmatpush1.msra.mxu0 0.0
      %1724 = vmatprep.subr.mxu0 0.0
      %1725 = vmatpush1.msra.mxu0 0.0
      %1726 = vmatprep.subr.mxu0 0.0
      %1727 = vmatpush1.msra.mxu0 0.0
      %1728 = vmatprep.subr.mxu0 0.0
      %1729 = vmatpush1.msra.mxu0 0.0
      %1730 = vmatprep.subr.mxu0 0.0
      %1731 = vmatpush1.msra.mxu0 0.0
      %1732 = vmatprep.subr.mxu0 0.0
      %1733 = vmatpush1.msra.mxu0 0.0
      %1734 = vmatprep.subr.mxu0 0.0
      %1735 = vmatpush1.msra.mxu0 0.0
      %1736 = vmatprep.subr.mxu0 0.0
      %1737 = vmatpush1.msra.mxu0 0.0
      %1738 = vmatprep.subr.mxu0 0.0
      %1739 = vmatpush1.msra.mxu0 0.0
      %1740 = vmatprep.subr.mxu0 0.0
      %1741 = vmatpush1.msra.mxu0 0.0
      %1742 = vmatprep.subr.mxu0 0.0
      %1743 = vmatpush1.msra.mxu0 0.0
      %1744 = vmatprep.subr.mxu0 0.0
      %1745 = vmatpush1.msra.mxu0 0.0
      %1746 = vmatprep.subr.mxu0 0.0
      %1747 = vmatpush1.msra.mxu0 0.0
      %1748 = vmatprep.subr.mxu0 0.0
      %1749 = vmatpush1.msra.mxu0 0.0
      %1750 = vmatprep.subr.mxu0 0.0
      %1751 = vmatpush1.msra.mxu0 0.0
      %1752 = vmatprep.subr.mxu0 0.0
      %1753 = vmatpush1.msra.mxu0 0.0
      %1754 = vmatprep.subr.mxu0 0.0
      %1755 = vmatpush1.msra.mxu0 0.0
      %1756 = vmatprep.subr.mxu0 0.0
      %1757 = vmatpush1.msra.mxu0 0.0
      %1758 = vmatprep.subr.mxu0 0.0
      %1759 = vmatpush1.msra.mxu0 0.0
      %1760 = vmatprep.subr.mxu0 0.0
      %1761 = vmatpush1.msra.mxu0 0.0
      %1762 = vmatprep.subr.mxu0 0.0
      %1763 = vmatpush1.msra.mxu0 0.0
      %1764 = vmatprep.subr.mxu0 0.0
      %1765 = vmatpush1.msra.mxu0 0.0
      %1766 = vmatprep.subr.mxu0 0.0
      %1767 = vmatpush1.msra.mxu0 0.0
      %1768 = vmatprep.mubr.f32.mxu0 0.0
      %1769 = vmatmul.mubr.f32.gmra.mrb[0].mxu0 %v1699
      %v1770 = vpop.f32.mrb[0].mxu0
      %v1771 = vadd.f32 0.0, %v1770
      %v1772 = vpop.f32.mrb[0].mxu0
      %1773 = vmatprep.mubr.f32.mxu0 0.0
      %1774 = vmatmul.mubr.f32.gmra.mrb[0].mxu0 %v1702
      %v1775 = vpop.f32.mrb[0].mxu0
      %v1776 = vadd.f32 0.0, %v1775
      %v1777 = vpop.f32.mrb[0].mxu0
      %1778 = vdwg.mxu0
      %v1779 = vpack.c.bf16 %v1776, %v1771
      %1780 = vrot.lane.b32.xlu0 %v1568, 112
      %v1781 = vpop.permute.xlu0 %1780
      %1782 = vrot.lane.b32.xlu0 %v1571, 112
      %v1783 = vpop.permute.xlu0 %1782
      %1784 = vrot.lane.b32.xlu0 %v1568, 80
      %v1785 = vpop.permute.xlu0 %1784
      %1786 = vrot.lane.b32.xlu0 %v1571, 80
      %v1787 = vpop.permute.xlu0 %1786
      %v1788 = vsel %vm1584, %v1781, 0
      %v1790 = vsel %vm1584, %v1783, 0
      %v1792 = vsel %vm1584, %v1785, 0
      %v1794 = vsel %vm1584, %v1787, 0
      %1796 = vmatprep.subr.mxu0 0.0
      %1797 = vmatpush1.xpose.msra.mxu0 %v1792
      %1798 = vmatprep.subr.mxu0 0.0
      %1799 = vmatpush1.xpose.msra.mxu0 %v1794
      %1800 = vmatprep.subr.mxu0 0.0
      %1801 = vmatpush1.xpose.msra.mxu0 0.0
      %1802 = vmatprep.subr.mxu0 0.0
      %1803 = vmatpush1.xpose.msra.mxu0 0.0
      %1804 = vmatprep.subr.mxu0 0.0
      %1805 = vmatpush1.xpose.msra.mxu0 0.0
      %1806 = vmatprep.subr.mxu0 0.0
      %1807 = vmatpush1.xpose.msra.mxu0 0.0
      %1808 = vmatprep.subr.mxu0 0.0
      %1809 = vmatpush1.xpose.msra.mxu0 0.0
      %1810 = vmatprep.subr.mxu0 0.0
      %1811 = vmatpush1.xpose.msra.mxu0 0.0
      %1812 = vmatprep.subr.mxu0 0.0
      %1813 = vmatpush1.xpose.msra.mxu0 0.0
      %1814 = vmatprep.subr.mxu0 0.0
      %1815 = vmatpush1.xpose.msra.mxu0 0.0
      %1816 = vmatprep.subr.mxu0 0.0
      %1817 = vmatpush1.xpose.msra.mxu0 0.0
      %1818 = vmatprep.subr.mxu0 0.0
      %1819 = vmatpush1.xpose.msra.mxu0 0.0
      %1820 = vmatprep.subr.mxu0 0.0
      %1821 = vmatpush1.xpose.msra.mxu0 0.0
      %1822 = vmatprep.subr.mxu0 0.0
      %1823 = vmatpush1.xpose.msra.mxu0 0.0
      %1824 = vmatprep.subr.mxu0 0.0
      %1825 = vmatpush1.xpose.msra.mxu0 0.0
      %1826 = vmatprep.subr.mxu0 0.0
      %1827 = vmatpush1.xpose.msra.mxu0 0.0
      %1828 = vmatprep.subr.mxu0 0.0
      %1829 = vmatpush1.xpose.msra.mxu0 0.0
      %1830 = vmatprep.subr.mxu0 0.0
      %1831 = vmatpush1.xpose.msra.mxu0 0.0
      %1832 = vmatprep.subr.mxu0 0.0
      %1833 = vmatpush1.xpose.msra.mxu0 0.0
      %1834 = vmatprep.subr.mxu0 0.0
      %1835 = vmatpush1.xpose.msra.mxu0 0.0
      %1836 = vmatprep.subr.mxu0 0.0
      %1837 = vmatpush1.xpose.msra.mxu0 0.0
      %1838 = vmatprep.subr.mxu0 0.0
      %1839 = vmatpush1.xpose.msra.mxu0 0.0
      %1840 = vmatprep.subr.mxu0 0.0
      %1841 = vmatpush1.xpose.msra.mxu0 0.0
      %1842 = vmatprep.subr.mxu0 0.0
      %1843 = vmatpush1.xpose.msra.mxu0 0.0
      %1844 = vmatprep.subr.mxu0 0.0
      %1845 = vmatpush1.xpose.msra.mxu0 0.0
      %1846 = vmatprep.subr.mxu0 0.0
      %1847 = vmatpush1.xpose.msra.mxu0 0.0
      %1848 = vmatprep.subr.mxu0 0.0
      %1849 = vmatpush1.xpose.msra.mxu0 0.0
      %1850 = vmatprep.subr.mxu0 0.0
      %1851 = vmatpush1.xpose.msra.mxu0 0.0
      %1852 = vmatprep.subr.mxu0 0.0
      %1853 = vmatpush1.xpose.msra.mxu0 0.0
      %1854 = vmatprep.subr.mxu0 0.0
      %1855 = vmatpush1.xpose.msra.mxu0 0.0
      %1856 = vmatprep.subr.mxu0 0.0
      %1857 = vmatpush1.xpose.msra.mxu0 0.0
      %1858 = vmatprep.subr.mxu0 0.0
      %1859 = vmatpush1.xpose.msra.mxu0 0.0
      %1860 = vmatprep.mubr.f32.mxu0 0.0
      %1861 = vmatmul.mubr.f32.gmra.mrb[0].mxu0 %v1788
      %v1862 = vpop.f32.mrb[0].mxu0
      %v1863 = vadd.f32 0.0, %v1862
      %v1864 = vpop.f32.mrb[0].mxu0
      %1865 = vmatprep.mubr.f32.mxu0 0.0
      %1866 = vmatmul.mubr.f32.gmra.mrb[0].mxu0 %v1790
      %v1867 = vpop.f32.mrb[0].mxu0
      %v1868 = vadd.f32 0.0, %v1867
      %v1869 = vpop.f32.mrb[0].mxu0
      %1870 = vdwg.mxu0
      %v1871 = vmul.f32 %v1863, 0.25
      %v1872 = vmul.f32 %v1868, 0.25
      %v1873 = vsel %vm1584, %v1871, -inf
      %1874 = vmax.xlane.f32.xlu0 %v1873
      %v1875 = vpop.xlane.xlu0 %1874
      %v1876 = vsel %vm1584, %v1872, -inf
      %1877 = vmax.xlane.f32.xlu0 %v1876
      %v1878 = vpop.xlane.xlu0 %1877
      %v1879 = vsub.f32 %v1871, %v1875
      %v1880 = vsub.f32 %v1872, %v1878
      %v1881 = vmul.f32 %v1879, 1.442695
      %v1882 = vpow.pop %v1881
      %v1883 = vmul.f32 %v1880, 1.442695
      %v1884 = vpow.pop %v1883
      %v1885 = vsel %vm1584, %v1882, 0.0
      %1886 = vadd.xlane.f32.xlu0 %v1885
      %v1887 = vpop.xlane.xlu0 %1886
      %v1888 = vsel %vm1584, %v1884, 0.0
      %1889 = vadd.xlane.f32.xlu0 %v1888
      %v1890 = vpop.xlane.xlu0 %1889
      %v1891 = vrcp.pop %v1887
      %v1892 = vrcp.pop %v1890
      %v1893 = vmul.f32 %v1882, %v1891
      %v1894 = vmul.f32 %v1884, %v1892
      %1895 = vrot.lane.b32.xlu0 %v1568, 48
      %v1896 = vpop.permute.xlu0 %1895
      %1897 = vrot.lane.b32.xlu0 %v1571, 48
      %v1898 = vpop.permute.xlu0 %1897
      %v1902 = vsel %vm1584, %v1893, 0
      %v1905 = vsel %vm1584, %v1894, 0
      %1907 = vmatprep.subr.mxu0 0.0
      %1908 = vmatpush1.msra.mxu0 %v1896
      %1909 = vmatprep.subr.mxu0 0.0
      %1910 = vmatpush1.msra.mxu0 %v1898
      %1911 = vmatprep.subr.mxu0 0.0
      %1912 = vmatpush1.msra.mxu0 0.0
      %1913 = vmatprep.subr.mxu0 0.0
      %1914 = vmatpush1.msra.mxu0 0.0
      %1915 = vmatprep.subr.mxu0 0.0
      %1916 = vmatpush1.msra.mxu0 0.0
      %1917 = vmatprep.subr.mxu0 0.0
      %1918 = vmatpush1.msra.mxu0 0.0
      %1919 = vmatprep.subr.mxu0 0.0
      %1920 = vmatpush1.msra.mxu0 0.0
      %1921 = vmatprep.subr.mxu0 0.0
      %1922 = vmatpush1.msra.mxu0 0.0
      %1923 = vmatprep.subr.mxu0 0.0
      %1924 = vmatpush1.msra.mxu0 0.0
      %1925 = vmatprep.subr.mxu0 0.0
      %1926 = vmatpush1.msra.mxu0 0.0
      %1927 = vmatprep.subr.mxu0 0.0
      %1928 = vmatpush1.msra.mxu0 0.0
      %1929 = vmatprep.subr.mxu0 0.0
      %1930 = vmatpush1.msra.mxu0 0.0
      %1931 = vmatprep.subr.mxu0 0.0
      %1932 = vmatpush1.msra.mxu0 0.0
      %1933 = vmatprep.subr.mxu0 0.0
      %1934 = vmatpush1.msra.mxu0 0.0
      %1935 = vmatprep.subr.mxu0 0.0
      %1936 = vmatpush1.msra.mxu0 0.0
      %1937 = vmatprep.subr.mxu0 0.0
      %1938 = vmatpush1.msra.mxu0 0.0
      %1939 = vmatprep.subr.mxu0 0.0
      %1940 = vmatpush1.msra.mxu0 0.0
      %1941 = vmatprep.subr.mxu0 0.0
      %1942 = vmatpush1.msra.mxu0 0.0
      %1943 = vmatprep.subr.mxu0 0.0
      %1944 = vmatpush1.msra.mxu0 0.0
      %1945 = vmatprep.subr.mxu0 0.0
      %1946 = vmatpush1.msra.mxu0 0.0
      %1947 = vmatprep.subr.mxu0 0.0
      %1948 = vmatpush1.msra.mxu0 0.0
      %1949 = vmatprep.subr.mxu0 0.0
      %1950 = vmatpush1.msra.mxu0 0.0
      %1951 = vmatprep.subr.mxu0 0.0
      %1952 = vmatpush1.msra.mxu0 0.0
      %1953 = vmatprep.subr.mxu0 0.0
      %1954 = vmatpush1.msra.mxu0 0.0
      %1955 = vmatprep.subr.mxu0 0.0
      %1956 = vmatpush1.msra.mxu0 0.0
      %1957 = vmatprep.subr.mxu0 0.0
      %1958 = vmatpush1.msra.mxu0 0.0
      %1959 = vmatprep.subr.mxu0 0.0
      %1960 = vmatpush1.msra.mxu0 0.0
      %1961 = vmatprep.subr.mxu0 0.0
      %1962 = vmatpush1.msra.mxu0 0.0
      %1963 = vmatprep.subr.mxu0 0.0
      %1964 = vmatpush1.msra.mxu0 0.0
      %1965 = vmatprep.subr.mxu0 0.0
      %1966 = vmatpush1.msra.mxu0 0.0
      %1967 = vmatprep.subr.mxu0 0.0
      %1968 = vmatpush1.msra.mxu0 0.0
      %1969 = vmatprep.subr.mxu0 0.0
      %1970 = vmatpush1.msra.mxu0 0.0
      %1971 = vmatprep.mubr.f32.mxu0 0.0
      %1972 = vmatmul.mubr.f32.gmra.mrb[0].mxu0 %v1902
      %v1973 = vpop.f32.mrb[0].mxu0
      %v1974 = vadd.f32 0.0, %v1973
      %v1975 = vpop.f32.mrb[0].mxu0
      %1976 = vmatprep.mubr.f32.mxu0 0.0
      %1977 = vmatmul.mubr.f32.gmra.mrb[0].mxu0 %v1905
      %v1978 = vpop.f32.mrb[0].mxu0
      %v1979 = vadd.f32 0.0, %v1978
      %v1980 = vpop.f32.mrb[0].mxu0
      %1981 = vdwg.mxu0
      %v1982 = vpack.c.bf16 %v1979, %v1974
      %v1985 = vunpack.c.l.b16 %v1576
      %v1986 = vunpack.c.l.b16 %v1577
      %v1987 = vpack.c.b16 %v1986, %v1985
      %v1990 = vsel %vm1584, %v1982, 0
      %1992 = vmatprep.subr.bf16.mxu0 0
      %1993 = vmatpush1.bf16.msra.mxu0 %v1987
      %1994 = vmatprep.subr.bf16.mxu0 0
      %1995 = vmatpush1.bf16.msra.mxu0 0
      %1996 = vmatprep.subr.bf16.mxu0 0
      %1997 = vmatpush1.bf16.msra.mxu0 0
      %1998 = vmatprep.subr.bf16.mxu0 0
      %1999 = vmatpush1.bf16.msra.mxu0 0
      %2000 = vmatprep.subr.bf16.mxu0 0
      %2001 = vmatpush1.bf16.msra.mxu0 0
      %2002 = vmatprep.subr.bf16.mxu0 0
      %2003 = vmatpush1.bf16.msra.mxu0 0
      %2004 = vmatprep.subr.bf16.mxu0 0
      %2005 = vmatpush1.bf16.msra.mxu0 0
      %2006 = vmatprep.subr.bf16.mxu0 0
      %2007 = vmatpush1.bf16.msra.mxu0 0
      %2008 = vmatprep.subr.bf16.mxu0 0
      %2009 = vmatpush1.bf16.msra.mxu0 0
      %2010 = vmatprep.subr.bf16.mxu0 0
      %2011 = vmatpush1.bf16.msra.mxu0 0
      %2012 = vmatprep.subr.bf16.mxu0 0
      %2013 = vmatpush1.bf16.msra.mxu0 0
      %2014 = vmatprep.subr.bf16.mxu0 0
      %2015 = vmatpush1.bf16.msra.mxu0 0
      %2016 = vmatprep.subr.bf16.mxu0 0
      %2017 = vmatpush1.bf16.msra.mxu0 0
      %2018 = vmatprep.subr.bf16.mxu0 0
      %2019 = vmatpush1.bf16.msra.mxu0 0
      %2020 = vmatprep.subr.bf16.mxu0 0
      %2021 = vmatpush1.bf16.msra.mxu0 0
      %2022 = vmatprep.subr.bf16.mxu0 0
      %2023 = vmatpush1.bf16.msra.mxu0 0
      %2024 = vmatprep.mubr.bf16.mxu0 0
      %2025 = vmatmul.mubr.bf16.gmra.mrb[0].mxu0 %v1990
      %v2026 = vpop.f32.mrb[0].mxu0
      %v2027 = vadd.f32 0.0, %v2026
      %v2028 = vpop.f32.mrb[0].mxu0
      %v2029 = vpop.f32.mrb[0].mxu0
      %v2030 = vadd.f32 0.0, %v2029
      %v2031 = vpop.f32.mrb[0].mxu0
      %2032 = vdwg.mxu0
      %v2035 = vunpack.c.l.b16 %v1574
      %v2036 = vunpack.c.l.b16 %v1575
      %v2037 = vpack.c.b16 %v2036, %v2035
      %v2040 = vsel %vm1584, %v1779, 0
      %2042 = vmatprep.subr.bf16.mxu0 0
      %2043 = vmatpush1.bf16.msra.mxu0 %v2037
      %2044 = vmatprep.subr.bf16.mxu0 0
      %2045 = vmatpush1.bf16.msra.mxu0 0
      %2046 = vmatprep.subr.bf16.mxu0 0
      %2047 = vmatpush1.bf16.msra.mxu0 0
      %2048 = vmatprep.subr.bf16.mxu0 0
      %2049 = vmatpush1.bf16.msra.mxu0 0
      %2050 = vmatprep.subr.bf16.mxu0 0
      %2051 = vmatpush1.bf16.msra.mxu0 0
      %2052 = vmatprep.subr.bf16.mxu0 0
      %2053 = vmatpush1.bf16.msra.mxu0 0
      %2054 = vmatprep.subr.bf16.mxu0 0
      %2055 = vmatpush1.bf16.msra.mxu0 0
      %2056 = vmatprep.subr.bf16.mxu0 0
      %2057 = vmatpush1.bf16.msra.mxu0 0
      %2058 = vmatprep.subr.bf16.mxu0 0
      %2059 = vmatpush1.bf16.msra.mxu0 0
      %2060 = vmatprep.subr.bf16.mxu0 0
      %2061 = vmatpush1.bf16.msra.mxu0 0
      %2062 = vmatprep.subr.bf16.mxu0 0
      %2063 = vmatpush1.bf16.msra.mxu0 0
      %2064 = vmatprep.subr.bf16.mxu0 0
      %2065 = vmatpush1.bf16.msra.mxu0 0
      %2066 = vmatprep.subr.bf16.mxu0 0
      %2067 = vmatpush1.bf16.msra.mxu0 0
      %2068 = vmatprep.subr.bf16.mxu0 0
      %2069 = vmatpush1.bf16.msra.mxu0 0
      %2070 = vmatprep.subr.bf16.mxu0 0
      %2071 = vmatpush1.bf16.msra.mxu0 0
      %2072 = vmatprep.subr.bf16.mxu0 0
      %2073 = vmatpush1.bf16.msra.mxu0 0
      %2074 = vmatprep.mubr.bf16.mxu0 0
      %2075 = vmatmul.mubr.bf16.gmra.mrb[0].mxu0 %v2040
      %v2076 = vpop.f32.mrb[0].mxu0
      %v2077 = vadd.f32 %v2027, %v2076
      %v2078 = vpop.f32.mrb[0].mxu0
      %v2079 = vpop.f32.mrb[0].mxu0
      %v2080 = vadd.f32 %v2030, %v2079
      %v2081 = vpop.f32.mrb[0].mxu0
      %2082 = vdwg.mxu0
      %v2083 = vadd.f32 %v1458, %v2077
      %v2084 = vadd.f32 %v1459, %v2080
      %v2085 = vld [vmem:[%s886] sm:$0x1]
      %v2087 = vlaneseq
      %v2088 = vshrl.u32 %v2087, 7
      %v2089 = vsub.s32 0, %v2088
      %v2090 = vrot.slane %v2085, %v2089
      %v2092 = vadd.f32 %v2083, %v2090
      %v2093 = vadd.f32 %v2084, %v2090
      %v2094 = vld [vmem:[%s889] sm:$0x1]
      %v2095 = vld [vmem:[%s892] sm:$0x1]
      %v2096 = vsel %vm1462, %v2092, 0.0
      %2097 = vadd.xlane.f32.xlu0 %v2096
      %v2098 = vpop.xlane.xlu0 %2097
      %v2099 = vsel %vm1462, %v2093, 0.0
      %2100 = vadd.xlane.f32.xlu0 %v2099
      %v2101 = vpop.xlane.xlu0 %2100
      %v2102 = vmul.f32 %v2098, %v1469
      %v2103 = vmul.f32 %v2101, %v1469
      %v2104 = vsub.f32 %v2092, %v2102
      %v2105 = vsub.f32 %v2093, %v2103
      %v2106 = vmul.f32 %v2104, %v2104
      %v2107 = vmul.f32 %v2105, %v2105
      %v2108 = vsel %vm1462, %v2106, 0.0
      %2109 = vadd.xlane.f32.xlu0 %v2108
      %v2110 = vpop.xlane.xlu0 %2109
      %v2111 = vsel %vm1462, %v2107, 0.0
      %2112 = vadd.xlane.f32.xlu0 %v2111
      %v2113 = vpop.xlane.xlu0 %2112
      %v2114 = vmul.f32 %v2110, %v1469
      %v2115 = vmul.f32 %v2113, %v1469
      %v2116 = vadd.f32 %v2114, 1e-06
      %v2117 = vadd.f32 %v2115, 1e-06
      %v2118 = vrsqrt.pop %v2116
      %v2119 = vrsqrt.pop %v2117
      %v2120 = vmul.f32 %v2104, %v2118
      %v2121 = vmul.f32 %v2105, %v2119
      %v2123 = vlaneseq
      %v2124 = vshrl.u32 %v2123, 7
      %v2125 = vsub.s32 0, %v2124
      %v2126 = vrot.slane %v2094, %v2125
      %v2128 = vmul.f32 %v2120, %v2126
      %v2129 = vmul.f32 %v2121, %v2126
      %v2131 = vlaneseq
      %v2132 = vshrl.u32 %v2131, 7
      %v2133 = vsub.s32 0, %v2132
      %v2134 = vrot.slane %v2095, %v2133
      %v2136 = vadd.f32 %v2128, %v2134
      %v2137 = vadd.f32 %v2129, %v2134
      %v2138 = vpack.c.bf16 %v2137, %v2136
      %v2139 = vld [vmem:[%s897] sm:$0xf]
      %v2140 = vld [vmem:[%s897 + $0x4] sm:$0xf]
      %v2141 = vld [vmem:[%s897 + $0x8] sm:$0xf]
      %v2142 = vld [vmem:[%s897 + $0xc] sm:$0xf]
      %v2143 = vld [vmem:[%s900] sm:$0x1]
      %v2145 = vlaneseq
      %v2146 = vshrl.u32 %v2145, 7
      %v2147 = vsub.s32 0, %v2146
      %v2148 = vrot.slane %v2143, %v2147
      %v2154 = vunpack.c.l.b16 %v2139
      %v2155 = vunpack.c.l.b16 %v2140
      %v2156 = vunpack.c.l.b16 %v2141
      %v2157 = vunpack.c.l.b16 %v2142
      %v2158 = vpack.c.b16 %v2155, %v2154
      %v2159 = vpack.c.b16 %v2157, %v2156
      %v2163 = vsel %vm1462, %v2138, 0
      %2165 = vmatprep.subr.bf16.mxu0 0
      %2166 = vmatpush1.bf16.msra.mxu0 %v2158
      %2167 = vmatprep.subr.bf16.mxu0 0
      %2168 = vmatpush1.bf16.msra.mxu0 %v2159
      %2169 = vmatprep.subr.bf16.mxu0 0
      %2170 = vmatpush1.bf16.msra.mxu0 0
      %2171 = vmatprep.subr.bf16.mxu0 0
      %2172 = vmatpush1.bf16.msra.mxu0 0
      %2173 = vmatprep.subr.bf16.mxu0 0
      %2174 = vmatpush1.bf16.msra.mxu0 0
      %2175 = vmatprep.subr.bf16.mxu0 0
      %2176 = vmatpush1.bf16.msra.mxu0 0
      %2177 = vmatprep.subr.bf16.mxu0 0
      %2178 = vmatpush1.bf16.msra.mxu0 0
      %2179 = vmatprep.subr.bf16.mxu0 0
      %2180 = vmatpush1.bf16.msra.mxu0 0
      %2181 = vmatprep.subr.bf16.mxu0 0
      %2182 = vmatpush1.bf16.msra.mxu0 0
      %2183 = vmatprep.subr.bf16.mxu0 0
      %2184 = vmatpush1.bf16.msra.mxu0 0
      %2185 = vmatprep.subr.bf16.mxu0 0
      %2186 = vmatpush1.bf16.msra.mxu0 0
      %2187 = vmatprep.subr.bf16.mxu0 0
      %2188 = vmatpush1.bf16.msra.mxu0 0
      %2189 = vmatprep.subr.bf16.mxu0 0
      %2190 = vmatpush1.bf16.msra.mxu0 0
      %2191 = vmatprep.subr.bf16.mxu0 0
      %2192 = vmatpush1.bf16.msra.mxu0 0
      %2193 = vmatprep.subr.bf16.mxu0 0
      %2194 = vmatpush1.bf16.msra.mxu0 0
      %2195 = vmatprep.subr.bf16.mxu0 0
      %2196 = vmatpush1.bf16.msra.mxu0 0
      %2197 = vmatprep.mubr.bf16.mxu0 0
      %2198 = vmatmul.mubr.bf16.gmra.mrb[0].mxu0 %v2163
      %v2199 = vpop.f32.mrb[0].mxu0
      %v2200 = vadd.f32 %v2148, %v2199
      %v2201 = vpop.f32.mrb[0].mxu0
      %v2202 = vpop.f32.mrb[0].mxu0
      %v2203 = vadd.f32 %v2148, %v2202
      %v2204 = vpop.f32.mrb[0].mxu0
      %2205 = vdwg.mxu0
      %v2206 = vmul.f32 %v2200, %v2200
      %v2207 = vmul.f32 %v2203, %v2203
      %v2208 = vmul.f32 %v2200, %v2206
      %v2209 = vmul.f32 %v2203, %v2207
      %v2210 = vmul.f32 %v2208, 0.044715
      %v2211 = vmul.f32 %v2209, 0.044715
      %v2212 = vadd.f32 %v2200, %v2210
      %v2213 = vadd.f32 %v2203, %v2211
      %v2214 = vmul.f32 %v2212, 0.7978846
      %v2215 = vmul.f32 %v2213, 0.7978846
      %v2216 = vtanh.pop %v2214
      %v2217 = vtanh.pop %v2215
      %v2218 = vadd.f32 %v2216, 1.0
      %v2219 = vadd.f32 %v2217, 1.0
      %v2220 = vmul.f32 %v2218, 0.5
      %v2221 = vmul.f32 %v2219, 0.5
      %v2222 = vmul.f32 %v2200, %v2220
      %v2223 = vmul.f32 %v2203, %v2221
      %v2224 = vpack.c.bf16 %v2223, %v2222
      %v2225 = vld [vmem:[%s905] sm:$0xf]
      %v2226 = vld [vmem:[%s905 + $0x4] sm:$0xf]
      %v2227 = vld [vmem:[%s905 + $0x8] sm:$0xf]
      %v2228 = vld [vmem:[%s905 + $0xc] sm:$0xf]
      %v2229 = vld [vmem:[%s905 + $0x10] sm:$0xf]
      %v2230 = vld [vmem:[%s905 + $0x14] sm:$0xf]
      %v2231 = vld [vmem:[%s905 + $0x18] sm:$0xf]
      %v2232 = vld [vmem:[%s905 + $0x1c] sm:$0xf]
      %v2233 = vld [vmem:[%s905 + $0x20] sm:$0xf]
      %v2234 = vld [vmem:[%s905 + $0x24] sm:$0xf]
      %v2235 = vld [vmem:[%s905 + $0x28] sm:$0xf]
      %v2236 = vld [vmem:[%s905 + $0x2c] sm:$0xf]
      %v2237 = vld [vmem:[%s905 + $0x30] sm:$0xf]
      %v2238 = vld [vmem:[%s905 + $0x34] sm:$0xf]
      %v2239 = vld [vmem:[%s905 + $0x38] sm:$0xf]
      %v2240 = vld [vmem:[%s905 + $0x3c] sm:$0xf]
      %v2257 = vunpack.c.l.b16 %v2225
      %v2258 = vunpack.c.l.b16 %v2226
      %v2259 = vunpack.c.l.b16 %v2227
      %v2260 = vunpack.c.l.b16 %v2228
      %v2261 = vunpack.c.l.b16 %v2229
      %v2262 = vunpack.c.l.b16 %v2230
      %v2263 = vunpack.c.l.b16 %v2231
      %v2264 = vunpack.c.l.b16 %v2232
      %v2265 = vunpack.c.l.b16 %v2233
      %v2266 = vunpack.c.l.b16 %v2234
      %v2267 = vunpack.c.l.b16 %v2235
      %v2268 = vunpack.c.l.b16 %v2236
      %v2269 = vunpack.c.l.b16 %v2237
      %v2270 = vunpack.c.l.b16 %v2238
      %v2271 = vunpack.c.l.b16 %v2239
      %v2272 = vunpack.c.l.b16 %v2240
      %v2273 = vpack.c.b16 %v2258, %v2257
      %v2274 = vpack.c.b16 %v2260, %v2259
      %v2275 = vpack.c.b16 %v2262, %v2261
      %v2276 = vpack.c.b16 %v2264, %v2263
      %v2277 = vpack.c.b16 %v2266, %v2265
      %v2278 = vpack.c.b16 %v2268, %v2267
      %v2279 = vpack.c.b16 %v2270, %v2269
      %v2280 = vpack.c.b16 %v2272, %v2271
      %2289 = vmatprep.subr.bf16.mxu0 0
      %2290 = vmatpush1.bf16.msra.mxu0 %v2273
      %2291 = vmatprep.subr.bf16.mxu0 0
      %2292 = vmatpush1.bf16.msra.mxu0 %v2274
      %2293 = vmatprep.subr.bf16.mxu0 0
      %2294 = vmatpush1.bf16.msra.mxu0 %v2275
      %2295 = vmatprep.subr.bf16.mxu0 0
      %2296 = vmatpush1.bf16.msra.mxu0 %v2276
      %2297 = vmatprep.subr.bf16.mxu0 0
      %2298 = vmatpush1.bf16.msra.mxu0 %v2277
      %2299 = vmatprep.subr.bf16.mxu0 0
      %2300 = vmatpush1.bf16.msra.mxu0 %v2278
      %2301 = vmatprep.subr.bf16.mxu0 0
      %2302 = vmatpush1.bf16.msra.mxu0 %v2279
      %2303 = vmatprep.subr.bf16.mxu0 0
      %2304 = vmatpush1.bf16.msra.mxu0 %v2280
      %2305 = vmatprep.subr.bf16.mxu0 0
      %2306 = vmatpush1.bf16.msra.mxu0 0
      %2307 = vmatprep.subr.bf16.mxu0 0
      %2308 = vmatpush1.bf16.msra.mxu0 0
      %2309 = vmatprep.subr.bf16.mxu0 0
      %2310 = vmatpush1.bf16.msra.mxu0 0
      %2311 = vmatprep.subr.bf16.mxu0 0
      %2312 = vmatpush1.bf16.msra.mxu0 0
      %2313 = vmatprep.subr.bf16.mxu0 0
      %2314 = vmatpush1.bf16.msra.mxu0 0
      %2315 = vmatprep.subr.bf16.mxu0 0
      %2316 = vmatpush1.bf16.msra.mxu0 0
      %2317 = vmatprep.subr.bf16.mxu0 0
      %2318 = vmatpush1.bf16.msra.mxu0 0
      %2319 = vmatprep.subr.bf16.mxu0 0
      %2320 = vmatpush1.bf16.msra.mxu0 0
      %2321 = vmatprep.mubr.bf16.mxu0 0
      %2322 = vmatmul.mubr.bf16.gmra.mrb[0].mxu0 %v2224
      %v2323 = vpop.f32.mrb[0].mxu0
      %v2324 = vadd.f32 0.0, %v2323
      %v2325 = vpop.f32.mrb[0].mxu0
      %v2326 = vpop.f32.mrb[0].mxu0
      %v2327 = vadd.f32 0.0, %v2326
      %v2328 = vpop.f32.mrb[0].mxu0
      %2329 = vdwg.mxu0
      %v2330 = vadd.f32 %v2092, %v2324
      %v2331 = vadd.f32 %v2093, %v2327
      %v2332 = vld [vmem:[%s908] sm:$0x1]
      %v2334 = vlaneseq
      %v2335 = vshrl.u32 %v2334, 7
      %v2336 = vsub.s32 0, %v2335
      %v2337 = vrot.slane %v2332, %v2336
      %v2339 = vadd.f32 %v2330, %v2337
      %v2340 = vadd.f32 %v2331, %v2337
      %v2341 = vld [vmem:[%s912] sm:$0x1]
      %v2342 = vld [vmem:[%s912 + $0x1] sm:$0x1]
      %v2343 = vld [vmem:[%s912 + $0x2] sm:$0x1]
      %v2344 = vld [vmem:[%s912 + $0x3] sm:$0x1]
      %v2345 = vld [vmem:[%s912 + $0x4] sm:$0x1]
      %v2346 = vld [vmem:[%s912 + $0x5] sm:$0x1]
      %v2347 = vld [vmem:[%s912 + $0x6] sm:$0x1]
      %v2348 = vld [vmem:[%s912 + $0x7] sm:$0x1]
      %v2349 = vld [vmem:[%s912 + $0x8] sm:$0x1]
      %v2350 = vld [vmem:[%s3] sm:$0xff]
      %v2351 = vld [vmem:[%s3 + $0x8] sm:$0xff]
      %v2353 = vsel %vm1584, %v2350, 0
      %v2356 = vsel %vm1584, %v2351, 0
      %2358 = vmatprep.subr.mxu0 0.0
      %2359 = vmatpush1.msra.mxu0 %v2339
      %2360 = vmatprep.subr.mxu0 0.0
      %2361 = vmatpush1.msra.mxu0 %v2340
      %2362 = vmatprep.subr.mxu0 0.0
      %2363 = vmatpush1.msra.mxu0 0.0
      %2364 = vmatprep.subr.mxu0 0.0
      %2365 = vmatpush1.msra.mxu0 0.0
      %2366 = vmatprep.subr.mxu0 0.0
      %2367 = vmatpush1.msra.mxu0 0.0
      %2368 = vmatprep.subr.mxu0 0.0
      %2369 = vmatpush1.msra.mxu0 0.0
      %2370 = vmatprep.subr.mxu0 0.0
      %2371 = vmatpush1.msra.mxu0 0.0
      %2372 = vmatprep.subr.mxu0 0.0
      %2373 = vmatpush1.msra.mxu0 0.0
      %2374 = vmatprep.subr.mxu0 0.0
      %2375 = vmatpush1.msra.mxu0 0.0
      %2376 = vmatprep.subr.mxu0 0.0
      %2377 = vmatpush1.msra.mxu0 0.0
      %2378 = vmatprep.subr.mxu0 0.0
      %2379 = vmatpush1.msra.mxu0 0.0
      %2380 = vmatprep.subr.mxu0 0.0
      %2381 = vmatpush1.msra.mxu0 0.0
      %2382 = vmatprep.subr.mxu0 0.0
      %2383 = vmatpush1.msra.mxu0 0.0
      %2384 = vmatprep.subr.mxu0 0.0
      %2385 = vmatpush1.msra.mxu0 0.0
      %2386 = vmatprep.subr.mxu0 0.0
      %2387 = vmatpush1.msra.mxu0 0.0
      %2388 = vmatprep.subr.mxu0 0.0
      %2389 = vmatpush1.msra.mxu0 0.0
      %2390 = vmatprep.subr.mxu0 0.0
      %2391 = vmatpush1.msra.mxu0 0.0
      %2392 = vmatprep.subr.mxu0 0.0
      %2393 = vmatpush1.msra.mxu0 0.0
      %2394 = vmatprep.subr.mxu0 0.0
      %2395 = vmatpush1.msra.mxu0 0.0
      %2396 = vmatprep.subr.mxu0 0.0
      %2397 = vmatpush1.msra.mxu0 0.0
      %2398 = vmatprep.subr.mxu0 0.0
      %2399 = vmatpush1.msra.mxu0 0.0
      %2400 = vmatprep.subr.mxu0 0.0
      %2401 = vmatpush1.msra.mxu0 0.0
      %2402 = vmatprep.subr.mxu0 0.0
      %2403 = vmatpush1.msra.mxu0 0.0
      %2404 = vmatprep.subr.mxu0 0.0
      %2405 = vmatpush1.msra.mxu0 0.0
      %2406 = vmatprep.subr.mxu0 0.0
      %2407 = vmatpush1.msra.mxu0 0.0
      %2408 = vmatprep.subr.mxu0 0.0
      %2409 = vmatpush1.msra.mxu0 0.0
      %2410 = vmatprep.subr.mxu0 0.0
      %2411 = vmatpush1.msra.mxu0 0.0
      %2412 = vmatprep.subr.mxu0 0.0
      %2413 = vmatpush1.msra.mxu0 0.0
      %2414 = vmatprep.subr.mxu0 0.0
      %2415 = vmatpush1.msra.mxu0 0.0
      %2416 = vmatprep.subr.mxu0 0.0
      %2417 = vmatpush1.msra.mxu0 0.0
      %2418 = vmatprep.subr.mxu0 0.0
      %2419 = vmatpush1.msra.mxu0 0.0
      %2420 = vmatprep.subr.mxu0 0.0
      %2421 = vmatpush1.msra.mxu0 0.0
      %2422 = vmatprep.mubr.f32.mxu0 0.0
      %2423 = vmatmul.mubr.f32.gmra.mrb[0].mxu0 %v2353
      %v2424 = vpop.f32.mrb[0].mxu0
      %v2425 = vadd.f32 0.0, %v2424
      %v2426 = vpop.f32.mrb[0].mxu0
      %2427 = vmatprep.mubr.f32.mxu0 0.0
      %2428 = vmatmul.mubr.f32.gmra.mrb[0].mxu0 %v2356
      %v2429 = vpop.f32.mrb[0].mxu0
      %v2430 = vadd.f32 0.0, %v2429
      %v2431 = vpop.f32.mrb[0].mxu0
      %2432 = vdwg.mxu0
      %v2434 = vlaneseq
      %v2435 = vshrl.u32 %v2434, 7
      %v2436 = vsub.s32 0, %v2435
      %v2437 = vrot.slane %v2341, %v2436
      %v2439 = vmul.f32 %v2425, %v2437
      %v2440 = vmul.f32 %v2430, %v2437
      %v2441 = vadd.f32 %v2439, 0.0
      %v2442 = vadd.f32 %v2440, 0.0
      %s2443 = scalar_lea.vmem %s3, 16
      %v2444 = vld [vmem:[%s2443] sm:$0xff]
      %v2445 = vld [vmem:[%s2443 + $0x8] sm:$0xff]
      %v2447 = vsel %vm1584, %v2444, 0
      %v2450 = vsel %vm1584, %v2445, 0
      %2452 = vmatprep.subr.mxu0 0.0
      %2453 = vmatpush1.msra.mxu0 %v2339
      %2454 = vmatprep.subr.mxu0 0.0
      %2455 = vmatpush1.msra.mxu0 %v2340
      %2456 = vmatprep.subr.mxu0 0.0
      %2457 = vmatpush1.msra.mxu0 0.0
      %2458 = vmatprep.subr.mxu0 0.0
      %2459 = vmatpush1.msra.mxu0 0.0
      %2460 = vmatprep.subr.mxu0 0.0
      %2461 = vmatpush1.msra.mxu0 0.0
      %2462 = vmatprep.subr.mxu0 0.0
      %2463 = vmatpush1.msra.mxu0 0.0
      %2464 = vmatprep.subr.mxu0 0.0
      %2465 = vmatpush1.msra.mxu0 0.0
      %2466 = vmatprep.subr.mxu0 0.0
      %2467 = vmatpush1.msra.mxu0 0.0
      %2468 = vmatprep.subr.mxu0 0.0
      %2469 = vmatpush1.msra.mxu0 0.0
      %2470 = vmatprep.subr.mxu0 0.0
      %2471 = vmatpush1.msra.mxu0 0.0
      %2472 = vmatprep.subr.mxu0 0.0
      %2473 = vmatpush1.msra.mxu0 0.0
      %2474 = vmatprep.subr.mxu0 0.0
      %2475 = vmatpush1.msra.mxu0 0.0
      %2476 = vmatprep.subr.mxu0 0.0
      %2477 = vmatpush1.msra.mxu0 0.0
      %2478 = vmatprep.subr.mxu0 0.0
      %2479 = vmatpush1.msra.mxu0 0.0
      %2480 = vmatprep.subr.mxu0 0.0
      %2481 = vmatpush1.msra.mxu0 0.0
      %2482 = vmatprep.subr.mxu0 0.0
      %2483 = vmatpush1.msra.mxu0 0.0
      %2484 = vmatprep.subr.mxu0 0.0
      %2485 = vmatpush1.msra.mxu0 0.0
      %2486 = vmatprep.subr.mxu0 0.0
      %2487 = vmatpush1.msra.mxu0 0.0
      %2488 = vmatprep.subr.mxu0 0.0
      %2489 = vmatpush1.msra.mxu0 0.0
      %2490 = vmatprep.subr.mxu0 0.0
      %2491 = vmatpush1.msra.mxu0 0.0
      %2492 = vmatprep.subr.mxu0 0.0
      %2493 = vmatpush1.msra.mxu0 0.0
      %2494 = vmatprep.subr.mxu0 0.0
      %2495 = vmatpush1.msra.mxu0 0.0
      %2496 = vmatprep.subr.mxu0 0.0
      %2497 = vmatpush1.msra.mxu0 0.0
      %2498 = vmatprep.subr.mxu0 0.0
      %2499 = vmatpush1.msra.mxu0 0.0
      %2500 = vmatprep.subr.mxu0 0.0
      %2501 = vmatpush1.msra.mxu0 0.0
      %2502 = vmatprep.subr.mxu0 0.0
      %2503 = vmatpush1.msra.mxu0 0.0
      %2504 = vmatprep.subr.mxu0 0.0
      %2505 = vmatpush1.msra.mxu0 0.0
      %2506 = vmatprep.subr.mxu0 0.0
      %2507 = vmatpush1.msra.mxu0 0.0
      %2508 = vmatprep.subr.mxu0 0.0
      %2509 = vmatpush1.msra.mxu0 0.0
      %2510 = vmatprep.subr.mxu0 0.0
      %2511 = vmatpush1.msra.mxu0 0.0
      %2512 = vmatprep.subr.mxu0 0.0
      %2513 = vmatpush1.msra.mxu0 0.0
      %2514 = vmatprep.subr.mxu0 0.0
      %2515 = vmatpush1.msra.mxu0 0.0
      %2516 = vmatprep.mubr.f32.mxu0 0.0
      %2517 = vmatmul.mubr.f32.gmra.mrb[0].mxu0 %v2447
      %v2518 = vpop.f32.mrb[0].mxu0
      %v2519 = vadd.f32 0.0, %v2518
      %v2520 = vpop.f32.mrb[0].mxu0
      %2521 = vmatprep.mubr.f32.mxu0 0.0
      %2522 = vmatmul.mubr.f32.gmra.mrb[0].mxu0 %v2450
      %v2523 = vpop.f32.mrb[0].mxu0
      %v2524 = vadd.f32 0.0, %v2523
      %v2525 = vpop.f32.mrb[0].mxu0
      %2526 = vdwg.mxu0
      %v2528 = vlaneseq
      %v2529 = vshrl.u32 %v2528, 7
      %v2530 = vsub.s32 0, %v2529
      %v2531 = vrot.slane %v2342, %v2530
      %v2533 = vmul.f32 %v2519, %v2531
      %v2534 = vmul.f32 %v2524, %v2531
      %v2535 = vadd.f32 %v2441, %v2533
      %v2536 = vadd.f32 %v2442, %v2534
      %s2537 = scalar_lea.vmem %s3, 32
      %v2538 = vld [vmem:[%s2537] sm:$0xff]
      %v2539 = vld [vmem:[%s2537 + $0x8] sm:$0xff]
      %v2541 = vsel %vm1584, %v2538, 0
      %v2544 = vsel %vm1584, %v2539, 0
      %2546 = vmatprep.subr.mxu0 0.0
      %2547 = vmatpush1.msra.mxu0 %v2339
      %2548 = vmatprep.subr.mxu0 0.0
      %2549 = vmatpush1.msra.mxu0 %v2340
      %2550 = vmatprep.subr.mxu0 0.0
      %2551 = vmatpush1.msra.mxu0 0.0
      %2552 = vmatprep.subr.mxu0 0.0
      %2553 = vmatpush1.msra.mxu0 0.0
      %2554 = vmatprep.subr.mxu0 0.0
      %2555 = vmatpush1.msra.mxu0 0.0
      %2556 = vmatprep.subr.mxu0 0.0
      %2557 = vmatpush1.msra.mxu0 0.0
      %2558 = vmatprep.subr.mxu0 0.0
      %2559 = vmatpush1.msra.mxu0 0.0
      %2560 = vmatprep.subr.mxu0 0.0
      %2561 = vmatpush1.msra.mxu0 0.0
      %2562 = vmatprep.subr.mxu0 0.0
      %2563 = vmatpush1.msra.mxu0 0.0
      %2564 = vmatprep.subr.mxu0 0.0
      %2565 = vmatpush1.msra.mxu0 0.0
      %2566 = vmatprep.subr.mxu0 0.0
      %2567 = vmatpush1.msra.mxu0 0.0
      %2568 = vmatprep.subr.mxu0 0.0
      %2569 = vmatpush1.msra.mxu0 0.0
      %2570 = vmatprep.subr.mxu0 0.0
      %2571 = vmatpush1.msra.mxu0 0.0
      %2572 = vmatprep.subr.mxu0 0.0
      %2573 = vmatpush1.msra.mxu0 0.0
      %2574 = vmatprep.subr.mxu0 0.0
      %2575 = vmatpush1.msra.mxu0 0.0
      %2576 = vmatprep.subr.mxu0 0.0
      %2577 = vmatpush1.msra.mxu0 0.0
      %2578 = vmatprep.subr.mxu0 0.0
      %2579 = vmatpush1.msra.mxu0 0.0
      %2580 = vmatprep.subr.mxu0 0.0
      %2581 = vmatpush1.msra.mxu0 0.0
      %2582 = vmatprep.subr.mxu0 0.0
      %2583 = vmatpush1.msra.mxu0 0.0
      %2584 = vmatprep.subr.mxu0 0.0
      %2585 = vmatpush1.msra.mxu0 0.0
      %2586 = vmatprep.subr.mxu0 0.0
      %2587 = vmatpush1.msra.mxu0 0.0
      %2588 = vmatprep.subr.mxu0 0.0
      %2589 = vmatpush1.msra.mxu0 0.0
      %2590 = vmatprep.subr.mxu0 0.0
      %2591 = vmatpush1.msra.mxu0 0.0
      %2592 = vmatprep.subr.mxu0 0.0
      %2593 = vmatpush1.msra.mxu0 0.0
      %2594 = vmatprep.subr.mxu0 0.0
      %2595 = vmatpush1.msra.mxu0 0.0
      %2596 = vmatprep.subr.mxu0 0.0
      %2597 = vmatpush1.msra.mxu0 0.0
      %2598 = vmatprep.subr.mxu0 0.0
      %2599 = vmatpush1.msra.mxu0 0.0
      %2600 = vmatprep.subr.mxu0 0.0
      %2601 = vmatpush1.msra.mxu0 0.0
      %2602 = vmatprep.subr.mxu0 0.0
      %2603 = vmatpush1.msra.mxu0 0.0
      %2604 = vmatprep.subr.mxu0 0.0
      %2605 = vmatpush1.msra.mxu0 0.0
      %2606 = vmatprep.subr.mxu0 0.0
      %2607 = vmatpush1.msra.mxu0 0.0
      %2608 = vmatprep.subr.mxu0 0.0
      %2609 = vmatpush1.msra.mxu0 0.0
      %2610 = vmatprep.mubr.f32.mxu0 0.0
      %2611 = vmatmul.mubr.f32.gmra.mrb[0].mxu0 %v2541
      %v2612 = vpop.f32.mrb[0].mxu0
      %v2613 = vadd.f32 0.0, %v2612
      %v2614 = vpop.f32.mrb[0].mxu0
      %2615 = vmatprep.mubr.f32.mxu0 0.0
      %2616 = vmatmul.mubr.f32.gmra.mrb[0].mxu0 %v2544
      %v2617 = vpop.f32.mrb[0].mxu0
      %v2618 = vadd.f32 0.0, %v2617
      %v2619 = vpop.f32.mrb[0].mxu0
      %2620 = vdwg.mxu0
      %v2622 = vlaneseq
      %v2623 = vshrl.u32 %v2622, 7
      %v2624 = vsub.s32 0, %v2623
      %v2625 = vrot.slane %v2343, %v2624
      %v2627 = vmul.f32 %v2613, %v2625
      %v2628 = vmul.f32 %v2618, %v2625
      %v2629 = vadd.f32 %v2535, %v2627
      %v2630 = vadd.f32 %v2536, %v2628
      %s2631 = scalar_lea.vmem %s3, 48
      %v2632 = vld [vmem:[%s2631] sm:$0xff]
      %v2633 = vld [vmem:[%s2631 + $0x8] sm:$0xff]
      %v2635 = vsel %vm1584, %v2632, 0
      %v2638 = vsel %vm1584, %v2633, 0
      %2640 = vmatprep.subr.mxu0 0.0
      %2641 = vmatpush1.msra.mxu0 %v2339
      %2642 = vmatprep.subr.mxu0 0.0
      %2643 = vmatpush1.msra.mxu0 %v2340
      %2644 = vmatprep.subr.mxu0 0.0
      %2645 = vmatpush1.msra.mxu0 0.0
      %2646 = vmatprep.subr.mxu0 0.0
      %2647 = vmatpush1.msra.mxu0 0.0
      %2648 = vmatprep.subr.mxu0 0.0
      %2649 = vmatpush1.msra.mxu0 0.0
      %2650 = vmatprep.subr.mxu0 0.0
      %2651 = vmatpush1.msra.mxu0 0.0
      %2652 = vmatprep.subr.mxu0 0.0
      %2653 = vmatpush1.msra.mxu0 0.0
      %2654 = vmatprep.subr.mxu0 0.0
      %2655 = vmatpush1.msra.mxu0 0.0
      %2656 = vmatprep.subr.mxu0 0.0
      %2657 = vmatpush1.msra.mxu0 0.0
      %2658 = vmatprep.subr.mxu0 0.0
      %2659 = vmatpush1.msra.mxu0 0.0
      %2660 = vmatprep.subr.mxu0 0.0
      %2661 = vmatpush1.msra.mxu0 0.0
      %2662 = vmatprep.subr.mxu0 0.0
      %2663 = vmatpush1.msra.mxu0 0.0
      %2664 = vmatprep.subr.mxu0 0.0
      %2665 = vmatpush1.msra.mxu0 0.0
      %2666 = vmatprep.subr.mxu0 0.0
      %2667 = vmatpush1.msra.mxu0 0.0
      %2668 = vmatprep.subr.mxu0 0.0
      %2669 = vmatpush1.msra.mxu0 0.0
      %2670 = vmatprep.subr.mxu0 0.0
      %2671 = vmatpush1.msra.mxu0 0.0
      %2672 = vmatprep.subr.mxu0 0.0
      %2673 = vmatpush1.msra.mxu0 0.0
      %2674 = vmatprep.subr.mxu0 0.0
      %2675 = vmatpush1.msra.mxu0 0.0
      %2676 = vmatprep.subr.mxu0 0.0
      %2677 = vmatpush1.msra.mxu0 0.0
      %2678 = vmatprep.subr.mxu0 0.0
      %2679 = vmatpush1.msra.mxu0 0.0
      %2680 = vmatprep.subr.mxu0 0.0
      %2681 = vmatpush1.msra.mxu0 0.0
      %2682 = vmatprep.subr.mxu0 0.0
      %2683 = vmatpush1.msra.mxu0 0.0
      %2684 = vmatprep.subr.mxu0 0.0
      %2685 = vmatpush1.msra.mxu0 0.0
      %2686 = vmatprep.subr.mxu0 0.0
      %2687 = vmatpush1.msra.mxu0 0.0
      %2688 = vmatprep.subr.mxu0 0.0
      %2689 = vmatpush1.msra.mxu0 0.0
      %2690 = vmatprep.subr.mxu0 0.0
      %2691 = vmatpush1.msra.mxu0 0.0
      %2692 = vmatprep.subr.mxu0 0.0
      %2693 = vmatpush1.msra.mxu0 0.0
      %2694 = vmatprep.subr.mxu0 0.0
      %2695 = vmatpush1.msra.mxu0 0.0
      %2696 = vmatprep.subr.mxu0 0.0
      %2697 = vmatpush1.msra.mxu0 0.0
      %2698 = vmatprep.subr.mxu0 0.0
      %2699 = vmatpush1.msra.mxu0 0.0
      %2700 = vmatprep.subr.mxu0 0.0
      %2701 = vmatpush1.msra.mxu0 0.0
      %2702 = vmatprep.subr.mxu0 0.0
      %2703 = vmatpush1.msra.mxu0 0.0
      %2704 = vmatprep.mubr.f32.mxu0 0.0
      %2705 = vmatmul.mubr.f32.gmra.mrb[0].mxu0 %v2635
      %v2706 = vpop.f32.mrb[0].mxu0
      %v2707 = vadd.f32 0.0, %v2706
      %v2708 = vpop.f32.mrb[0].mxu0
      %2709 = vmatprep.mubr.f32.mxu0 0.0
      %2710 = vmatmul.mubr.f32.gmra.mrb[0].mxu0 %v2638
      %v2711 = vpop.f32.mrb[0].mxu0
      %v2712 = vadd.f32 0.0, %v2711
      %v2713 = vpop.f32.mrb[0].mxu0
      %2714 = vdwg.mxu0
      %v2716 = vlaneseq
      %v2717 = vshrl.u32 %v2716, 7
      %v2718 = vsub.s32 0, %v2717
      %v2719 = vrot.slane %v2344, %v2718
      %v2721 = vmul.f32 %v2707, %v2719
      %v2722 = vmul.f32 %v2712, %v2719
      %v2723 = vadd.f32 %v2629, %v2721
      %v2724 = vadd.f32 %v2630, %v2722
      %s2725 = scalar_lea.vmem %s3, 64
      %v2726 = vld [vmem:[%s2725] sm:$0xff]
      %v2727 = vld [vmem:[%s2725 + $0x8] sm:$0xff]
      %v2729 = vsel %vm1584, %v2726, 0
      %v2732 = vsel %vm1584, %v2727, 0
      %2734 = vmatprep.subr.mxu0 0.0
      %2735 = vmatpush1.msra.mxu0 %v2339
      %2736 = vmatprep.subr.mxu0 0.0
      %2737 = vmatpush1.msra.mxu0 %v2340
      %2738 = vmatprep.subr.mxu0 0.0
      %2739 = vmatpush1.msra.mxu0 0.0
      %2740 = vmatprep.subr.mxu0 0.0
      %2741 = vmatpush1.msra.mxu0 0.0
      %2742 = vmatprep.subr.mxu0 0.0
      %2743 = vmatpush1.msra.mxu0 0.0
      %2744 = vmatprep.subr.mxu0 0.0
      %2745 = vmatpush1.msra.mxu0 0.0
      %2746 = vmatprep.subr.mxu0 0.0
      %2747 = vmatpush1.msra.mxu0 0.0
      %2748 = vmatprep.subr.mxu0 0.0
      %2749 = vmatpush1.msra.mxu0 0.0
      %2750 = vmatprep.subr.mxu0 0.0
      %2751 = vmatpush1.msra.mxu0 0.0
      %2752 = vmatprep.subr.mxu0 0.0
      %2753 = vmatpush1.msra.mxu0 0.0
      %2754 = vmatprep.subr.mxu0 0.0
      %2755 = vmatpush1.msra.mxu0 0.0
      %2756 = vmatprep.subr.mxu0 0.0
      %2757 = vmatpush1.msra.mxu0 0.0
      %2758 = vmatprep.subr.mxu0 0.0
      %2759 = vmatpush1.msra.mxu0 0.0
      %2760 = vmatprep.subr.mxu0 0.0
      %2761 = vmatpush1.msra.mxu0 0.0
      %2762 = vmatprep.subr.mxu0 0.0
      %2763 = vmatpush1.msra.mxu0 0.0
      %2764 = vmatprep.subr.mxu0 0.0
      %2765 = vmatpush1.msra.mxu0 0.0
      %2766 = vmatprep.subr.mxu0 0.0
      %2767 = vmatpush1.msra.mxu0 0.0
      %2768 = vmatprep.subr.mxu0 0.0
      %2769 = vmatpush1.msra.mxu0 0.0
      %2770 = vmatprep.subr.mxu0 0.0
      %2771 = vmatpush1.msra.mxu0 0.0
      %2772 = vmatprep.subr.mxu0 0.0
      %2773 = vmatpush1.msra.mxu0 0.0
      %2774 = vmatprep.subr.mxu0 0.0
      %2775 = vmatpush1.msra.mxu0 0.0
      %2776 = vmatprep.subr.mxu0 0.0
      %2777 = vmatpush1.msra.mxu0 0.0
      %2778 = vmatprep.subr.mxu0 0.0
      %2779 = vmatpush1.msra.mxu0 0.0
      %2780 = vmatprep.subr.mxu0 0.0
      %2781 = vmatpush1.msra.mxu0 0.0
      %2782 = vmatprep.subr.mxu0 0.0
      %2783 = vmatpush1.msra.mxu0 0.0
      %2784 = vmatprep.subr.mxu0 0.0
      %2785 = vmatpush1.msra.mxu0 0.0
      %2786 = vmatprep.subr.mxu0 0.0
      %2787 = vmatpush1.msra.mxu0 0.0
      %2788 = vmatprep.subr.mxu0 0.0
      %2789 = vmatpush1.msra.mxu0 0.0
      %2790 = vmatprep.subr.mxu0 0.0
      %2791 = vmatpush1.msra.mxu0 0.0
      %2792 = vmatprep.subr.mxu0 0.0
      %2793 = vmatpush1.msra.mxu0 0.0
      %2794 = vmatprep.subr.mxu0 0.0
      %2795 = vmatpush1.msra.mxu0 0.0
      %2796 = vmatprep.subr.mxu0 0.0
      %2797 = vmatpush1.msra.mxu0 0.0
      %2798 = vmatprep.mubr.f32.mxu0 0.0
      %2799 = vmatmul.mubr.f32.gmra.mrb[0].mxu0 %v2729
      %v2800 = vpop.f32.mrb[0].mxu0
      %v2801 = vadd.f32 0.0, %v2800
      %v2802 = vpop.f32.mrb[0].mxu0
      %2803 = vmatprep.mubr.f32.mxu0 0.0
      %2804 = vmatmul.mubr.f32.gmra.mrb[0].mxu0 %v2732
      %v2805 = vpop.f32.mrb[0].mxu0
      %v2806 = vadd.f32 0.0, %v2805
      %v2807 = vpop.f32.mrb[0].mxu0
      %2808 = vdwg.mxu0
      %v2810 = vlaneseq
      %v2811 = vshrl.u32 %v2810, 7
      %v2812 = vsub.s32 0, %v2811
      %v2813 = vrot.slane %v2345, %v2812
      %v2815 = vmul.f32 %v2801, %v2813
      %v2816 = vmul.f32 %v2806, %v2813
      %v2817 = vadd.f32 %v2723, %v2815
      %v2818 = vadd.f32 %v2724, %v2816
      %s2819 = scalar_lea.vmem %s3, 80
      %v2820 = vld [vmem:[%s2819] sm:$0xff]
      %v2821 = vld [vmem:[%s2819 + $0x8] sm:$0xff]
      %v2823 = vsel %vm1584, %v2820, 0
      %v2826 = vsel %vm1584, %v2821, 0
      %2828 = vmatprep.subr.mxu0 0.0
      %2829 = vmatpush1.msra.mxu0 %v2339
      %2830 = vmatprep.subr.mxu0 0.0
      %2831 = vmatpush1.msra.mxu0 %v2340
      %2832 = vmatprep.subr.mxu0 0.0
      %2833 = vmatpush1.msra.mxu0 0.0
      %2834 = vmatprep.subr.mxu0 0.0
      %2835 = vmatpush1.msra.mxu0 0.0
      %2836 = vmatprep.subr.mxu0 0.0
      %2837 = vmatpush1.msra.mxu0 0.0
      %2838 = vmatprep.subr.mxu0 0.0
      %2839 = vmatpush1.msra.mxu0 0.0
      %2840 = vmatprep.subr.mxu0 0.0
      %2841 = vmatpush1.msra.mxu0 0.0
      %2842 = vmatprep.subr.mxu0 0.0
      %2843 = vmatpush1.msra.mxu0 0.0
      %2844 = vmatprep.subr.mxu0 0.0
      %2845 = vmatpush1.msra.mxu0 0.0
      %2846 = vmatprep.subr.mxu0 0.0
      %2847 = vmatpush1.msra.mxu0 0.0
      %2848 = vmatprep.subr.mxu0 0.0
      %2849 = vmatpush1.msra.mxu0 0.0
      %2850 = vmatprep.subr.mxu0 0.0
      %2851 = vmatpush1.msra.mxu0 0.0
      %2852 = vmatprep.subr.mxu0 0.0
      %2853 = vmatpush1.msra.mxu0 0.0
      %2854 = vmatprep.subr.mxu0 0.0
      %2855 = vmatpush1.msra.mxu0 0.0
      %2856 = vmatprep.subr.mxu0 0.0
      %2857 = vmatpush1.msra.mxu0 0.0
      %2858 = vmatprep.subr.mxu0 0.0
      %2859 = vmatpush1.msra.mxu0 0.0
      %2860 = vmatprep.subr.mxu0 0.0
      %2861 = vmatpush1.msra.mxu0 0.0
      %2862 = vmatprep.subr.mxu0 0.0
      %2863 = vmatpush1.msra.mxu0 0.0
      %2864 = vmatprep.subr.mxu0 0.0
      %2865 = vmatpush1.msra.mxu0 0.0
      %2866 = vmatprep.subr.mxu0 0.0
      %2867 = vmatpush1.msra.mxu0 0.0
      %2868 = vmatprep.subr.mxu0 0.0
      %2869 = vmatpush1.msra.mxu0 0.0
      %2870 = vmatprep.subr.mxu0 0.0
      %2871 = vmatpush1.msra.mxu0 0.0
      %2872 = vmatprep.subr.mxu0 0.0
      %2873 = vmatpush1.msra.mxu0 0.0
      %2874 = vmatprep.subr.mxu0 0.0
      %2875 = vmatpush1.msra.mxu0 0.0
      %2876 = vmatprep.subr.mxu0 0.0
      %2877 = vmatpush1.msra.mxu0 0.0
      %2878 = vmatprep.subr.mxu0 0.0
      %2879 = vmatpush1.msra.mxu0 0.0
      %2880 = vmatprep.subr.mxu0 0.0
      %2881 = vmatpush1.msra.mxu0 0.0
      %2882 = vmatprep.subr.mxu0 0.0
      %2883 = vmatpush1.msra.mxu0 0.0
      %2884 = vmatprep.subr.mxu0 0.0
      %2885 = vmatpush1.msra.mxu0 0.0
      %2886 = vmatprep.subr.mxu0 0.0
      %2887 = vmatpush1.msra.mxu0 0.0
      %2888 = vmatprep.subr.mxu0 0.0
      %2889 = vmatpush1.msra.mxu0 0.0
      %2890 = vmatprep.subr.mxu0 0.0
      %2891 = vmatpush1.msra.mxu0 0.0
      %2892 = vmatprep.mubr.f32.mxu0 0.0
      %2893 = vmatmul.mubr.f32.gmra.mrb[0].mxu0 %v2823
      %v2894 = vpop.f32.mrb[0].mxu0
      %v2895 = vadd.f32 0.0, %v2894
      %v2896 = vpop.f32.mrb[0].mxu0
      %2897 = vmatprep.mubr.f32.mxu0 0.0
      %2898 = vmatmul.mubr.f32.gmra.mrb[0].mxu0 %v2826
      %v2899 = vpop.f32.mrb[0].mxu0
      %v2900 = vadd.f32 0.0, %v2899
      %v2901 = vpop.f32.mrb[0].mxu0
      %2902 = vdwg.mxu0
      %v2904 = vlaneseq
      %v2905 = vshrl.u32 %v2904, 7
      %v2906 = vsub.s32 0, %v2905
      %v2907 = vrot.slane %v2346, %v2906
      %v2909 = vmul.f32 %v2895, %v2907
      %v2910 = vmul.f32 %v2900, %v2907
      %v2911 = vadd.f32 %v2817, %v2909
      %v2912 = vadd.f32 %v2818, %v2910
      %s2913 = scalar_lea.vmem %s3, 96
      %v2914 = vld [vmem:[%s2913] sm:$0xff]
      %v2915 = vld [vmem:[%s2913 + $0x8] sm:$0xff]
      %v2917 = vsel %vm1584, %v2914, 0
      %v2920 = vsel %vm1584, %v2915, 0
      %2922 = vmatprep.subr.mxu0 0.0
      %2923 = vmatpush1.msra.mxu0 %v2339
      %2924 = vmatprep.subr.mxu0 0.0
      %2925 = vmatpush1.msra.mxu0 %v2340
      %2926 = vmatprep.subr.mxu0 0.0
      %2927 = vmatpush1.msra.mxu0 0.0
      %2928 = vmatprep.subr.mxu0 0.0
      %2929 = vmatpush1.msra.mxu0 0.0
      %2930 = vmatprep.subr.mxu0 0.0
      %2931 = vmatpush1.msra.mxu0 0.0
      %2932 = vmatprep.subr.mxu0 0.0
      %2933 = vmatpush1.msra.mxu0 0.0
      %2934 = vmatprep.subr.mxu0 0.0
      %2935 = vmatpush1.msra.mxu0 0.0
      %2936 = vmatprep.subr.mxu0 0.0
      %2937 = vmatpush1.msra.mxu0 0.0
      %2938 = vmatprep.subr.mxu0 0.0
      %2939 = vmatpush1.msra.mxu0 0.0
      %2940 = vmatprep.subr.mxu0 0.0
      %2941 = vmatpush1.msra.mxu0 0.0
      %2942 = vmatprep.subr.mxu0 0.0
      %2943 = vmatpush1.msra.mxu0 0.0
      %2944 = vmatprep.subr.mxu0 0.0
      %2945 = vmatpush1.msra.mxu0 0.0
      %2946 = vmatprep.subr.mxu0 0.0
      %2947 = vmatpush1.msra.mxu0 0.0
      %2948 = vmatprep.subr.mxu0 0.0
      %2949 = vmatpush1.msra.mxu0 0.0
      %2950 = vmatprep.subr.mxu0 0.0
      %2951 = vmatpush1.msra.mxu0 0.0
      %2952 = vmatprep.subr.mxu0 0.0
      %2953 = vmatpush1.msra.mxu0 0.0
      %2954 = vmatprep.subr.mxu0 0.0
      %2955 = vmatpush1.msra.mxu0 0.0
      %2956 = vmatprep.subr.mxu0 0.0
      %2957 = vmatpush1.msra.mxu0 0.0
      %2958 = vmatprep.subr.mxu0 0.0
      %2959 = vmatpush1.msra.mxu0 0.0
      %2960 = vmatprep.subr.mxu0 0.0
      %2961 = vmatpush1.msra.mxu0 0.0
      %2962 = vmatprep.subr.mxu0 0.0
      %2963 = vmatpush1.msra.mxu0 0.0
      %2964 = vmatprep.subr.mxu0 0.0
      %2965 = vmatpush1.msra.mxu0 0.0
      %2966 = vmatprep.subr.mxu0 0.0
      %2967 = vmatpush1.msra.mxu0 0.0
      %2968 = vmatprep.subr.mxu0 0.0
      %2969 = vmatpush1.msra.mxu0 0.0
      %2970 = vmatprep.subr.mxu0 0.0
      %2971 = vmatpush1.msra.mxu0 0.0
      %2972 = vmatprep.subr.mxu0 0.0
      %2973 = vmatpush1.msra.mxu0 0.0
      %2974 = vmatprep.subr.mxu0 0.0
      %2975 = vmatpush1.msra.mxu0 0.0
      %2976 = vmatprep.subr.mxu0 0.0
      %2977 = vmatpush1.msra.mxu0 0.0
      %2978 = vmatprep.subr.mxu0 0.0
      %2979 = vmatpush1.msra.mxu0 0.0
      %2980 = vmatprep.subr.mxu0 0.0
      %2981 = vmatpush1.msra.mxu0 0.0
      %2982 = vmatprep.subr.mxu0 0.0
      %2983 = vmatpush1.msra.mxu0 0.0
      %2984 = vmatprep.subr.mxu0 0.0
      %2985 = vmatpush1.msra.mxu0 0.0
      %2986 = vmatprep.mubr.f32.mxu0 0.0
      %2987 = vmatmul.mubr.f32.gmra.mrb[0].mxu0 %v2917
      %v2988 = vpop.f32.mrb[0].mxu0
      %v2989 = vadd.f32 0.0, %v2988
      %v2990 = vpop.f32.mrb[0].mxu0
      %2991 = vmatprep.mubr.f32.mxu0 0.0
      %2992 = vmatmul.mubr.f32.gmra.mrb[0].mxu0 %v2920
      %v2993 = vpop.f32.mrb[0].mxu0
      %v2994 = vadd.f32 0.0, %v2993
      %v2995 = vpop.f32.mrb[0].mxu0
      %2996 = vdwg.mxu0
      %v2998 = vlaneseq
      %v2999 = vshrl.u32 %v2998, 7
      %v3000 = vsub.s32 0, %v2999
      %v3001 = vrot.slane %v2347, %v3000
      %v3003 = vmul.f32 %v2989, %v3001
      %v3004 = vmul.f32 %v2994, %v3001
      %v3005 = vadd.f32 %v2911, %v3003
      %v3006 = vadd.f32 %v2912, %v3004
      %s3007 = scalar_lea.vmem %s3, 112
      %v3008 = vld [vmem:[%s3007] sm:$0xff]
      %v3009 = vld [vmem:[%s3007 + $0x8] sm:$0xff]
      %v3011 = vsel %vm1584, %v3008, 0
      %v3014 = vsel %vm1584, %v3009, 0
      %3016 = vmatprep.subr.mxu0 0.0
      %3017 = vmatpush1.msra.mxu0 %v2339
      %3018 = vmatprep.subr.mxu0 0.0
      %3019 = vmatpush1.msra.mxu0 %v2340
      %3020 = vmatprep.subr.mxu0 0.0
      %3021 = vmatpush1.msra.mxu0 0.0
      %3022 = vmatprep.subr.mxu0 0.0
      %3023 = vmatpush1.msra.mxu0 0.0
      %3024 = vmatprep.subr.mxu0 0.0
      %3025 = vmatpush1.msra.mxu0 0.0
      %3026 = vmatprep.subr.mxu0 0.0
      %3027 = vmatpush1.msra.mxu0 0.0
      %3028 = vmatprep.subr.mxu0 0.0
      %3029 = vmatpush1.msra.mxu0 0.0
      %3030 = vmatprep.subr.mxu0 0.0
      %3031 = vmatpush1.msra.mxu0 0.0
      %3032 = vmatprep.subr.mxu0 0.0
      %3033 = vmatpush1.msra.mxu0 0.0
      %3034 = vmatprep.subr.mxu0 0.0
      %3035 = vmatpush1.msra.mxu0 0.0
      %3036 = vmatprep.subr.mxu0 0.0
      %3037 = vmatpush1.msra.mxu0 0.0
      %3038 = vmatprep.subr.mxu0 0.0
      %3039 = vmatpush1.msra.mxu0 0.0
      %3040 = vmatprep.subr.mxu0 0.0
      %3041 = vmatpush1.msra.mxu0 0.0
      %3042 = vmatprep.subr.mxu0 0.0
      %3043 = vmatpush1.msra.mxu0 0.0
      %3044 = vmatprep.subr.mxu0 0.0
      %3045 = vmatpush1.msra.mxu0 0.0
      %3046 = vmatprep.subr.mxu0 0.0
      %3047 = vmatpush1.msra.mxu0 0.0
      %3048 = vmatprep.subr.mxu0 0.0
      %3049 = vmatpush1.msra.mxu0 0.0
      %3050 = vmatprep.subr.mxu0 0.0
      %3051 = vmatpush1.msra.mxu0 0.0
      %3052 = vmatprep.subr.mxu0 0.0
      %3053 = vmatpush1.msra.mxu0 0.0
      %3054 = vmatprep.subr.mxu0 0.0
      %3055 = vmatpush1.msra.mxu0 0.0
      %3056 = vmatprep.subr.mxu0 0.0
      %3057 = vmatpush1.msra.mxu0 0.0
      %3058 = vmatprep.subr.mxu0 0.0
      %3059 = vmatpush1.msra.mxu0 0.0
      %3060 = vmatprep.subr.mxu0 0.0
      %3061 = vmatpush1.msra.mxu0 0.0
      %3062 = vmatprep.subr.mxu0 0.0
      %3063 = vmatpush1.msra.mxu0 0.0
      %3064 = vmatprep.subr.mxu0 0.0
      %3065 = vmatpush1.msra.mxu0 0.0
      %3066 = vmatprep.subr.mxu0 0.0
      %3067 = vmatpush1.msra.mxu0 0.0
      %3068 = vmatprep.subr.mxu0 0.0
      %3069 = vmatpush1.msra.mxu0 0.0
      %3070 = vmatprep.subr.mxu0 0.0
      %3071 = vmatpush1.msra.mxu0 0.0
      %3072 = vmatprep.subr.mxu0 0.0
      %3073 = vmatpush1.msra.mxu0 0.0
      %3074 = vmatprep.subr.mxu0 0.0
      %3075 = vmatpush1.msra.mxu0 0.0
      %3076 = vmatprep.subr.mxu0 0.0
      %3077 = vmatpush1.msra.mxu0 0.0
      %3078 = vmatprep.subr.mxu0 0.0
      %3079 = vmatpush1.msra.mxu0 0.0
      %3080 = vmatprep.mubr.f32.mxu0 0.0
      %3081 = vmatmul.mubr.f32.gmra.mrb[0].mxu0 %v3011
      %v3082 = vpop.f32.mrb[0].mxu0
      %v3083 = vadd.f32 0.0, %v3082
      %v3084 = vpop.f32.mrb[0].mxu0
      %3085 = vmatprep.mubr.f32.mxu0 0.0
      %3086 = vmatmul.mubr.f32.gmra.mrb[0].mxu0 %v3014
      %v3087 = vpop.f32.mrb[0].mxu0
      %v3088 = vadd.f32 0.0, %v3087
      %v3089 = vpop.f32.mrb[0].mxu0
      %3090 = vdwg.mxu0
      %v3092 = vlaneseq
      %v3093 = vshrl.u32 %v3092, 7
      %v3094 = vsub.s32 0, %v3093
      %v3095 = vrot.slane %v2348, %v3094
      %v3097 = vmul.f32 %v3083, %v3095
      %v3098 = vmul.f32 %v3088, %v3095
      %v3099 = vadd.f32 %v3005, %v3097
      %v3100 = vadd.f32 %v3006, %v3098
      %s3101 = scalar_lea.vmem %s3, 128
      %v3102 = vld [vmem:[%s3101] sm:$0xff]
      %v3103 = vld [vmem:[%s3101 + $0x8] sm:$0xff]
      %v3105 = vsel %vm1584, %v3102, 0
      %v3108 = vsel %vm1584, %v3103, 0
      %3110 = vmatprep.subr.mxu0 0.0
      %3111 = vmatpush1.msra.mxu0 %v2339
      %3112 = vmatprep.subr.mxu0 0.0
      %3113 = vmatpush1.msra.mxu0 %v2340
      %3114 = vmatprep.subr.mxu0 0.0
      %3115 = vmatpush1.msra.mxu0 0.0
      %3116 = vmatprep.subr.mxu0 0.0
      %3117 = vmatpush1.msra.mxu0 0.0
      %3118 = vmatprep.subr.mxu0 0.0
      %3119 = vmatpush1.msra.mxu0 0.0
      %3120 = vmatprep.subr.mxu0 0.0
      %3121 = vmatpush1.msra.mxu0 0.0
      %3122 = vmatprep.subr.mxu0 0.0
      %3123 = vmatpush1.msra.mxu0 0.0
      %3124 = vmatprep.subr.mxu0 0.0
      %3125 = vmatpush1.msra.mxu0 0.0
      %3126 = vmatprep.subr.mxu0 0.0
      %3127 = vmatpush1.msra.mxu0 0.0
      %3128 = vmatprep.subr.mxu0 0.0
      %3129 = vmatpush1.msra.mxu0 0.0
      %3130 = vmatprep.subr.mxu0 0.0
      %3131 = vmatpush1.msra.mxu0 0.0
      %3132 = vmatprep.subr.mxu0 0.0
      %3133 = vmatpush1.msra.mxu0 0.0
      %3134 = vmatprep.subr.mxu0 0.0
      %3135 = vmatpush1.msra.mxu0 0.0
      %3136 = vmatprep.subr.mxu0 0.0
      %3137 = vmatpush1.msra.mxu0 0.0
      %3138 = vmatprep.subr.mxu0 0.0
      %3139 = vmatpush1.msra.mxu0 0.0
      %3140 = vmatprep.subr.mxu0 0.0
      %3141 = vmatpush1.msra.mxu0 0.0
      %3142 = vmatprep.subr.mxu0 0.0
      %3143 = vmatpush1.msra.mxu0 0.0
      %3144 = vmatprep.subr.mxu0 0.0
      %3145 = vmatpush1.msra.mxu0 0.0
      %3146 = vmatprep.subr.mxu0 0.0
      %3147 = vmatpush1.msra.mxu0 0.0
      %3148 = vmatprep.subr.mxu0 0.0
      %3149 = vmatpush1.msra.mxu0 0.0
      %3150 = vmatprep.subr.mxu0 0.0
      %3151 = vmatpush1.msra.mxu0 0.0
      %3152 = vmatprep.subr.mxu0 0.0
      %3153 = vmatpush1.msra.mxu0 0.0
      %3154 = vmatprep.subr.mxu0 0.0
      %3155 = vmatpush1.msra.mxu0 0.0
      %3156 = vmatprep.subr.mxu0 0.0
      %3157 = vmatpush1.msra.mxu0 0.0
      %3158 = vmatprep.subr.mxu0 0.0
      %3159 = vmatpush1.msra.mxu0 0.0
      %3160 = vmatprep.subr.mxu0 0.0
      %3161 = vmatpush1.msra.mxu0 0.0
      %3162 = vmatprep.subr.mxu0 0.0
      %3163 = vmatpush1.msra.mxu0 0.0
      %3164 = vmatprep.subr.mxu0 0.0
      %3165 = vmatpush1.msra.mxu0 0.0
      %3166 = vmatprep.subr.mxu0 0.0
      %3167 = vmatpush1.msra.mxu0 0.0
      %3168 = vmatprep.subr.mxu0 0.0
      %3169 = vmatpush1.msra.mxu0 0.0
      %3170 = vmatprep.subr.mxu0 0.0
      %3171 = vmatpush1.msra.mxu0 0.0
      %3172 = vmatprep.subr.mxu0 0.0
      %3173 = vmatpush1.msra.mxu0 0.0
      %3174 = vmatprep.mubr.f32.mxu0 0.0
      %3175 = vmatmul.mubr.f32.gmra.mrb[0].mxu0 %v3105
      %v3176 = vpop.f32.mrb[0].mxu0
      %v3177 = vadd.f32 0.0, %v3176
      %v3178 = vpop.f32.mrb[0].mxu0
      %3179 = vmatprep.mubr.f32.mxu0 0.0
      %3180 = vmatmul.mubr.f32.gmra.mrb[0].mxu0 %v3108
      %v3181 = vpop.f32.mrb[0].mxu0
      %v3182 = vadd.f32 0.0, %v3181
      %v3183 = vpop.f32.mrb[0].mxu0
      %3184 = vdwg.mxu0
      %v3186 = vlaneseq
      %v3187 = vshrl.u32 %v3186, 7
      %v3188 = vsub.s32 0, %v3187
      %v3189 = vrot.slane %v2349, %v3188
      %v3191 = vmul.f32 %v3177, %v3189
      %v3192 = vmul.f32 %v3182, %v3189
      %v3193 = vadd.f32 %v3099, %v3191
      %v3194 = vadd.f32 %v3100, %v3192
      %v3195 = vadd.f32 %v2339, %v3193
      %v3196 = vadd.f32 %v2340, %v3194
      %v3197 = vld [vmem:[%s915] sm:$0x1]
      %v3199 = vlaneseq
      %v3200 = vshrl.u32 %v3199, 7
      %v3201 = vsub.s32 0, %v3200
      %v3202 = vrot.slane %v3197, %v3201
      %v3204 = vadd.f32 %v3195, %v3202
      %v3205 = vadd.f32 %v3196, %v3202
      %3206 = vst.msk [vmem:[#allocation2] sm:$0xff] %vm1462, %v3204
      %3207 = vst.msk [vmem:[#allocation2 + $0x8] sm:$0xff] %vm1462, %v3205
      %p3208 = scmp.ge.s32.totalorder %s40, 8
      // Predicated region
      $region113: #{forward.1} parent=107 // pred_check
        %p3209 = pneg %p3208
      $region114: #{forward.1} parent=107 // pred_check_branch
        %3211 = sbr.rel (%p3209) target = $region116
      $region115: #{forward.1} parent=107 // pred_region
        %v3212 = vld [vmem:[#allocation3] sm:$0xff]
        %v3213 = vld [vmem:[#allocation3 + $0x8] sm:$0xff]
        %v3214 = vadd.f32 %v3212, %v3204
        %v3215 = vadd.f32 %v3213, %v3205
        %3216 = vst.msk [vmem:[#allocation3] sm:$0xff] %vm1462, %v3214
        %3217 = vst.msk [vmem:[#allocation3 + $0x8] sm:$0xff] %vm1462, %v3215
      $region116: #{forward.1} parent=107 // pred_fallthru
        _
      %p3218 = scmp.eq.s32.totalorder %s40, 11
      // Predicated region
      $region117: #{forward.1} parent=107 // pred_check
        %p3219 = pneg %p3218
      $region118: #{forward.1} parent=107 // pred_check_branch
        %3221 = sbr.rel (%p3219) target = $region120
      $region119: #{forward.1} parent=107 // pred_region
        %v3222 = vld [vmem:[#allocation3] sm:$0xff]
        %v3223 = vld [vmem:[#allocation3 + $0x8] sm:$0xff]
        %v3224 = vmul.f32 %v3222, 0.25
        %v3225 = vmul.f32 %v3223, 0.25
        %v3226 = vld [vmem:[%s18] sm:$0xff]
        %v3227 = vld [vmem:[%s18 + $0x8] sm:$0xff]
        %v3228 = vld [vmem:[%s18 + $0x10] sm:$0xff]
        %v3229 = vld [vmem:[%s18 + $0x18] sm:$0xff]
        %v3230 = vld [vmem:[%s19] sm:$0x1]
        %v3232 = vlaneseq
        %v3233 = vshrl.u32 %v3232, 7
        %v3234 = vsub.s32 0, %v3233
        %v3235 = vrot.slane %v3230, %v3234
        %v3238 = vsel %vm1462, %v3224, 0
        %v3241 = vsel %vm1462, %v3225, 0
        %3243 = vmatprep.subr.mxu0 0.0
        %3244 = vmatpush1.msra.mxu0 %v3226
        %3245 = vmatprep.subr.mxu0 0.0
        %3246 = vmatpush1.msra.mxu0 %v3227
        %3247 = vmatprep.subr.mxu0 0.0
        %3248 = vmatpush1.msra.mxu0 %v3228
        %3249 = vmatprep.subr.mxu0 0.0
        %3250 = vmatpush1.msra.mxu0 %v3229
        %3251 = vmatprep.subr.mxu0 0.0
        %3252 = vmatpush1.msra.mxu0 0.0
        %3253 = vmatprep.subr.mxu0 0.0
        %3254 = vmatpush1.msra.mxu0 0.0
        %3255 = vmatprep.subr.mxu0 0.0
        %3256 = vmatpush1.msra.mxu0 0.0
        %3257 = vmatprep.subr.mxu0 0.0
        %3258 = vmatpush1.msra.mxu0 0.0
        %3259 = vmatprep.subr.mxu0 0.0
        %3260 = vmatpush1.msra.mxu0 0.0
        %3261 = vmatprep.subr.mxu0 0.0
        %3262 = vmatpush1.msra.mxu0 0.0
        %3263 = vmatprep.subr.mxu0 0.0
        %3264 = vmatpush1.msra.mxu0 0.0
        %3265 = vmatprep.subr.mxu0 0.0
        %3266 = vmatpush1.msra.mxu0 0.0
        %3267 = vmatprep.subr.mxu0 0.0
        %3268 = vmatpush1.msra.mxu0 0.0
        %3269 = vmatprep.subr.mxu0 0.0
        %3270 = vmatpush1.msra.mxu0 0.0
        %3271 = vmatprep.subr.mxu0 0.0
        %3272 = vmatpush1.msra.mxu0 0.0
        %3273 = vmatprep.subr.mxu0 0.0
        %3274 = vmatpush1.msra.mxu0 0.0
        %3275 = vmatprep.subr.mxu0 0.0
        %3276 = vmatpush1.msra.mxu0 0.0
        %3277 = vmatprep.subr.mxu0 0.0
        %3278 = vmatpush1.msra.mxu0 0.0
        %3279 = vmatprep.subr.mxu0 0.0
        %3280 = vmatpush1.msra.mxu0 0.0
        %3281 = vmatprep.subr.mxu0 0.0
        %3282 = vmatpush1.msra.mxu0 0.0
        %3283 = vmatprep.subr.mxu0 0.0
        %3284 = vmatpush1.msra.mxu0 0.0
        %3285 = vmatprep.subr.mxu0 0.0
        %3286 = vmatpush1.msra.mxu0 0.0
        %3287 = vmatprep.subr.mxu0 0.0
        %3288 = vmatpush1.msra.mxu0 0.0
        %3289 = vmatprep.subr.mxu0 0.0
        %3290 = vmatpush1.msra.mxu0 0.0
        %3291 = vmatprep.subr.mxu0 0.0
        %3292 = vmatpush1.msra.mxu0 0.0
        %3293 = vmatprep.subr.mxu0 0.0
        %3294 = vmatpush1.msra.mxu0 0.0
        %3295 = vmatprep.subr.mxu0 0.0
        %3296 = vmatpush1.msra.mxu0 0.0
        %3297 = vmatprep.subr.mxu0 0.0
        %3298 = vmatpush1.msra.mxu0 0.0
        %3299 = vmatprep.subr.mxu0 0.0
        %3300 = vmatpush1.msra.mxu0 0.0
        %3301 = vmatprep.subr.mxu0 0.0
        %3302 = vmatpush1.msra.mxu0 0.0
        %3303 = vmatprep.subr.mxu0 0.0
        %3304 = vmatpush1.msra.mxu0 0.0
        %3305 = vmatprep.subr.mxu0 0.0
        %3306 = vmatpush1.msra.mxu0 0.0
        %3307 = vmatprep.mubr.f32.mxu0 0.0
        %3308 = vmatmul.mubr.f32.gmra.mrb[0].mxu0 %v3238
        %v3309 = vpop.f32.mrb[0].mxu0
        %v3310 = vadd.f32 %v3235, %v3309
        %v3311 = vpop.f32.mrb[0].mxu0
        %3312 = vmatprep.mubr.f32.mxu0 0.0
        %3313 = vmatmul.mubr.f32.gmra.mrb[0].mxu0 %v3241
        %v3314 = vpop.f32.mrb[0].mxu0
        %v3315 = vadd.f32 %v3235, %v3314
        %v3316 = vpop.f32.mrb[0].mxu0
        %3317 = vdwg.mxu0
        %v3318 = vmax.f32 %v3310, 0.0
        %v3319 = vmax.f32 %v3315, 0.0
        %v3320 = vld [vmem:[%s20] sm:$0xff]
        %v3321 = vld [vmem:[%s20 + $0x8] sm:$0xff]
        %v3322 = vld [vmem:[#allocation4] sm:$0x1]
        %v3324 = vlaneseq
        %v3325 = vshrl.u32 %v3324, 7
        %v3326 = vsub.s32 0, %v3325
        %v3327 = vrot.slane %v3322, %v3326
        %v3330 = vsel %vm1584, %v3318, 0
        %v3333 = vsel %vm1584, %v3319, 0
        %3335 = vmatprep.subr.mxu0 0.0
        %3336 = vmatpush1.msra.mxu0 %v3320
        %3337 = vmatprep.subr.mxu0 0.0
        %3338 = vmatpush1.msra.mxu0 %v3321
        %3339 = vmatprep.subr.mxu0 0.0
        %3340 = vmatpush1.msra.mxu0 0.0
        %3341 = vmatprep.subr.mxu0 0.0
        %3342 = vmatpush1.msra.mxu0 0.0
        %3343 = vmatprep.subr.mxu0 0.0
        %3344 = vmatpush1.msra.mxu0 0.0
        %3345 = vmatprep.subr.mxu0 0.0
        %3346 = vmatpush1.msra.mxu0 0.0
        %3347 = vmatprep.subr.mxu0 0.0
        %3348 = vmatpush1.msra.mxu0 0.0
        %3349 = vmatprep.subr.mxu0 0.0
        %3350 = vmatpush1.msra.mxu0 0.0
        %3351 = vmatprep.subr.mxu0 0.0
        %3352 = vmatpush1.msra.mxu0 0.0
        %3353 = vmatprep.subr.mxu0 0.0
        %3354 = vmatpush1.msra.mxu0 0.0
        %3355 = vmatprep.subr.mxu0 0.0
        %3356 = vmatpush1.msra.mxu0 0.0
        %3357 = vmatprep.subr.mxu0 0.0
        %3358 = vmatpush1.msra.mxu0 0.0
        %3359 = vmatprep.subr.mxu0 0.0
        %3360 = vmatpush1.msra.mxu0 0.0
        %3361 = vmatprep.subr.mxu0 0.0
        %3362 = vmatpush1.msra.mxu0 0.0
        %3363 = vmatprep.subr.mxu0 0.0
        %3364 = vmatpush1.msra.mxu0 0.0
        %3365 = vmatprep.subr.mxu0 0.0
        %3366 = vmatpush1.msra.mxu0 0.0
        %3367 = vmatprep.subr.mxu0 0.0
        %3368 = vmatpush1.msra.mxu0 0.0
        %3369 = vmatprep.subr.mxu0 0.0
        %3370 = vmatpush1.msra.mxu0 0.0
        %3371 = vmatprep.subr.mxu0 0.0
        %3372 = vmatpush1.msra.mxu0 0.0
        %3373 = vmatprep.subr.mxu0 0.0
        %3374 = vmatpush1.msra.mxu0 0.0
        %3375 = vmatprep.subr.mxu0 0.0
        %3376 = vmatpush1.msra.mxu0 0.0
        %3377 = vmatprep.subr.mxu0 0.0
        %3378 = vmatpush1.msra.mxu0 0.0
        %3379 = vmatprep.subr.mxu0 0.0
        %3380 = vmatpush1.msra.mxu0 0.0
        %3381 = vmatprep.subr.mxu0 0.0
        %3382 = vmatpush1.msra.mxu0 0.0
        %3383 = vmatprep.subr.mxu0 0.0
        %3384 = vmatpush1.msra.mxu0 0.0
        %3385 = vmatprep.subr.mxu0 0.0
        %3386 = vmatpush1.msra.mxu0 0.0
        %3387 = vmatprep.subr.mxu0 0.0
        %3388 = vmatpush1.msra.mxu0 0.0
        %3389 = vmatprep.subr.mxu0 0.0
        %3390 = vmatpush1.msra.mxu0 0.0
        %3391 = vmatprep.subr.mxu0 0.0
        %3392 = vmatpush1.msra.mxu0 0.0
        %3393 = vmatprep.subr.mxu0 0.0
        %3394 = vmatpush1.msra.mxu0 0.0
        %3395 = vmatprep.subr.mxu0 0.0
        %3396 = vmatpush1.msra.mxu0 0.0
        %3397 = vmatprep.subr.mxu0 0.0
        %3398 = vmatpush1.msra.mxu0 0.0
        %3399 = vmatprep.mubr.f32.mxu0 0.0
        %3400 = vmatmul.mubr.f32.gmra.mrb[0].mxu0 %v3330
        %v3401 = vpop.f32.mrb[0].mxu0
        %v3402 = vadd.f32 %v3327, %v3401
        %v3403 = vpop.f32.mrb[0].mxu0
        %3404 = vmatprep.mubr.f32.mxu0 0.0
        %3405 = vmatmul.mubr.f32.gmra.mrb[0].mxu0 %v3333
        %v3406 = vpop.f32.mrb[0].mxu0
        %v3407 = vadd.f32 %v3327, %v3406
        %v3408 = vpop.f32.mrb[0].mxu0
        %3409 = vdwg.mxu0
        %vm3410 = vcmask 7168
        %3411 = vst.msk [vmem:[%s920] sm:$0xff] %vm3410, %v3402
        %3412 = vst.msk [vmem:[%s920 + $0x8] sm:$0xff] %vm3410, %v3407
      $region120: #{forward.1} parent=107 // pred_fallthru
        _
      %p3413 = scmp.lt.s32.totalorder %s39, 1
      %s3414 = scalar_select %p3413, %s39, 1
      %s3415 = smul.addr %s3414, 2
      %s3416 = smul.addr %s3415, 8
      %s3417 = scalar_lea.vmem %s22, %s3416
      // Predicated region
      $region121: #{forward.1} parent=107 // pred_check
        %p3418 = pneg %p602
      $region122: #{forward.1} parent=107 // pred_check_branch
        %3420 = sbr.rel (%p3418) target = $region124
      $region123: #{forward.1} parent=107 // pred_region
        _
      $region124: #{forward.1} parent=107 // pred_fallthru
        _
    $region108: #{forward.1} parent=5 // pred_fallthru
      _
    %p3421 = scmp.le.s32.totalorder 2, %s30
    // Predicated region
    $region125: #{forward.1} parent=5 // pred_check
      %p3422 = pneg %p3421
    $region126: #{forward.1} parent=5 // pred_check_branch
      %3424 = sbr.rel (%p3422) target = $region128
    $region127: #{forward.1} parent=5 // pred_region
      %s3425 = ssub.s32 %s30, 2
      // Predicated region
      $region129: #{forward.1} parent=127 // pred_check
        %p3426 = pneg %p608
      $region130: #{forward.1} parent=127 // pred_check_branch
        %3428 = sbr.rel (%p3426) target = $region132
      $region131: #{forward.1} parent=127 // pred_region
        %p3429 = scmp.lt.s32.totalorder %s41, 1
        %s3430 = scalar_select %p3429, %s41, 1
        %s3431 = smul.addr %s3430, 2
        %s3432 = smul.addr %s3431, 8
        %s3433 = scalar_lea.vmem %s22, %s3432
      $region132: #{forward.1} parent=127 // pred_fallthru
        _
    $region128: #{forward.1} parent=5 // pred_fallthru
      _
  $region6: #{forward.1} parent=0 // loop_footer
    %s34 = sadd.s32 1, %s30
  $region7: #{forward.1} parent=0 // loop_footer_branch
    %29 = sbr.rel target = $region3
  $region8: #{forward.1} parent=0 // loop_exit
    _

</llo_original>
